<compile_context>
chip_gen: v5e
topology: v5e:2x2
jax: 0.10.0
libtpu: 0.0.40
codegen_flags: <defaults>
</compile_context>

<pallas_src>
import functools

import jax
import jax.numpy as jnp
from jax.experimental import pallas as pl
from jax.experimental.pallas import tpu as pltpu

EPS = 1e-5
Q_TILE = 128   # query-column tile width (lane dim)


def attn_block_kernel(x_ref, wqkv_ref, bqkv_ref, wproj_ref, bproj_ref,
                      o_ref, qkv_scratch, attn_scratch, *, num_heads, q_tile):
    x = x_ref[0]                                   # (C, HW) f32
    c, hw = x.shape
    hd = c // num_heads
    n_q_tiles = hw // q_tile

    # ---- GroupNorm(1, C): two-pass stats over the whole sample (affine folded into W/b qkv) ----
    mean = jnp.mean(x)
    xc = x - mean
    var = jnp.mean(xc * xc)
    xn = xc * jax.lax.rsqrt(var + EPS)

    # ---- qkv 1x1 conv == channel matmul (bf16 operands, f32 accumulate) ----
    qkv = jnp.dot(wqkv_ref[...], xn.astype(jnp.bfloat16),
                  preferred_element_type=jnp.float32) + bqkv_ref[...]    # (3C, HW) f32
    qkv_scratch[...] = qkv        # f32 scratch -> 8-row head slices stay sublane aligned

    # ---- multi-head self-attention over the HW axis, query-tiled softmax ----
    # Static Python loops (num_heads * n_q_tiles iterations, compile-time trip counts) are the
    # fully-unrolled form requested by the perf review: one basic block, so the scheduler can
    # overlap one tile's MXU pushes with the previous tile's softmax VPU/EUP work, and every
    # pl.ds start is a compile-time constant.
    for n in range(num_heads):
        q_off = n * hd
        k_off = c + n * hd
        v_off = 2 * c + n * hd
        kh = qkv_scratch[pl.ds(k_off, hd), :].astype(jnp.bfloat16)       # (HD, HW)
        vh = qkv_scratch[pl.ds(v_off, hd), :].astype(jnp.bfloat16)       # (HD, HW)
        for t in range(n_q_tiles):
            q_start = t * q_tile
            qh = qkv_scratch[pl.ds(q_off, hd),
                             pl.ds(q_start, q_tile)].astype(jnp.bfloat16)  # (HD, Tq)

            # logits^T[j, i] = sum_d k[d, j] * q[d, i]   (attention scale pre-folded into q)
            logits_t = jax.lax.dot_general(
                kh, qh, (((0,), (0,)), ((), ())),
                preferred_element_type=jnp.float32)                      # (HWk, Tq) f32

            # softmax over keys (sublane axis); exp output goes straight to bf16 (PV operand),
            # max-subtract stays f32, l accumulates in f32 from the bf16 values.
            m = jnp.max(logits_t, axis=0, keepdims=True)                 # (1, Tq) f32
            p_bf = jnp.exp(logits_t - m).astype(jnp.bfloat16)            # (HWk, Tq) bf16
            l = jnp.sum(p_bf, axis=0, keepdims=True, dtype=jnp.float32)  # (1, Tq) f32

            # out[d, i] = (sum_j v[d, j] * p^T[j, i]) * (1 / l[i])  (deferred normalization)
            oh = jax.lax.dot_general(
                vh, p_bf, (((1,), (0,)), ((), ())),
                preferred_element_type=jnp.float32)                      # (HD, Tq) f32
            attn_scratch[pl.ds(q_off, hd), pl.ds(q_start, q_tile)] = (
                oh * pl.reciprocal(l, approx=True))

    # ---- proj 1x1 conv + residual ----
    # channel order in attn_scratch is (head, dim); wproj columns were permuted in the wrapper to
    # reproduce torch's (dim, head) interleave from `out.permute(0,3,1,2).reshape(b,c,h,w)`.
    y = jnp.dot(wproj_ref[...], attn_scratch[...].astype(jnp.bfloat16),
                preferred_element_type=jnp.float32) + bproj_ref[...]
    o_ref[0] = (y + x).astype(o_ref.dtype)


def unet_attention_block(x, gamma, beta, wqkv, bqkv, wproj, bproj, *, num_heads=4):
    b, c, h, w = x.shape
    hw = h * w
    hd = c // num_heads
    assert c % num_heads == 0 and hd % 8 == 0, "head_dim must be sublane-aligned (multiple of 8)"
    assert hw % Q_TILE == 0, "H*W must be a multiple of 128 (lane tiling / query tile)"
    xf = x.reshape(b, c, hw)

    hi = jax.lax.Precision.HIGHEST
    scale = float(hd) ** -0.5

    # Fold GroupNorm affine into the qkv conv:
    #   W (gamma*xn + beta) + b  ==  (W * gamma) xn + (W @ beta + b)
    wqkv_f = wqkv * gamma[None, :]
    bqkv_f = jnp.dot(wqkv, beta, precision=hi) + bqkv
    # Fold the attention scale into the Q rows (first C output channels).
    wqkv_f = wqkv_f.at[:c].multiply(scale)
    bqkv_f = bqkv_f.at[:c].multiply(scale)

    # Permute proj columns so the kernel can keep its (head, dim) channel order:
    # torch output channel d*nh + n  ==  kernel channel n*hd + d.
    n_idx = jnp.arange(c) // hd
    d_idx = jnp.arange(c) % hd
    wproj_perm = wproj[:, d_idx * num_heads + n_idx]

    kernel = functools.partial(attn_block_kernel, num_heads=num_heads, q_tile=Q_TILE)

    # Explicit scoped-VMEM budget: scratch + double-buffered x/out blocks + double-buffered weights.
    block_bytes = c * hw * 4
    scratch_bytes = (3 * c * hw + c * hw) * 4
    weight_bytes = (3 * c * c + c * c) * 2 + (3 * c + c) * 4
    vmem_bytes = scratch_bytes + 2 * 2 * block_bytes + 2 * weight_bytes
    vmem_limit = int(min(64 * 1024 * 1024, max(2 * vmem_bytes, 16 * 1024 * 1024)))

    # Advisory cost estimate so XLA can overlap surrounding UNet ops with this call.
    flops = 2 * b * (3 * c * c * hw + num_heads * 2 * hd * hw * hw + c * c * hw)
    transcendentals = b * num_heads * hw * hw
    bytes_accessed = b * 2 * c * hw * 4 + weight_bytes
    cost = pl.CostEstimate(flops=flops, transcendentals=transcendentals,
                           bytes_accessed=bytes_accessed)

    out = pl.pallas_call(
        kernel,
        out_shape=jax.ShapeDtypeStruct((b, c, hw), x.dtype),
        grid_spec=pltpu.PrefetchScalarGridSpec(
            num_scalar_prefetch=0,
            grid=(b,),
            in_specs=[
                pl.BlockSpec((1, c, hw), lambda i: (i, 0, 0)),   # x
                pl.BlockSpec((3 * c, c), lambda i: (0, 0)),      # W_qkv (folded, bf16)
                pl.BlockSpec((3 * c, 1), lambda i: (0, 0)),      # b_qkv (folded)
                pl.BlockSpec((c, c), lambda i: (0, 0)),          # W_proj (permuted, bf16)
                pl.BlockSpec((c, 1), lambda i: (0, 0)),          # b_proj
            ],
            out_specs=pl.BlockSpec((1, c, hw), lambda i: (i, 0, 0)),
            scratch_shapes=[
                pltpu.VMEM((3 * c, hw), jnp.float32),            # qkv
                pltpu.VMEM((c, hw), jnp.float32),                # attention output accumulator
            ],
        ),
        compiler_params=pltpu.CompilerParams(
            dimension_semantics=("parallel",),
            vmem_limit_bytes=vmem_limit),
        cost_estimate=cost,
    )(xf,
      wqkv_f.astype(jnp.bfloat16),
      bqkv_f.reshape(3 * c, 1),
      wproj_perm.astype(jnp.bfloat16),
      bproj.reshape(c, 1))

    return out.reshape(b, c, h, w)


def reference(x, gamma, beta, wqkv, bqkv, wproj, bproj, *, num_heads=4):
    """Plain-JAX transcription of the PyTorch forward (for verification)."""
    hi = jax.lax.Precision.HIGHEST
    b, c, h, w = x.shape
    hw = h * w
    xf = x.reshape(b, c, hw)
    mean = xf.reshape(b, -1).mean(axis=1)[:, None, None]
    var = jnp.square(xf - mean).reshape(b, -1).mean(axis=1)[:, None, None]
    xn = (xf - mean) / jnp.sqrt(var + EPS)
    xn = xn * gamma[None, :, None] + beta[None, :, None]
    qkv = jnp.einsum('oc,bcs->bos', wqkv, xn, precision=hi) + bqkv[None, :, None]
    qkv = qkv.reshape(b, 3, num_heads, c // num_heads, hw)
    q, k, v = qkv[:, 0], qkv[:, 1], qkv[:, 2]
    q = jnp.transpose(q, (0, 1, 3, 2))          # (b, nh, hw, hd)
    v = jnp.transpose(v, (0, 1, 3, 2))          # (b, nh, hw, hd)
    scale = (c // num_heads) ** -0.5
    attn = jnp.einsum('bnij,bnjk->bnik', q, k, precision=hi) * scale
    attn = jax.nn.softmax(attn, axis=-1)
    out = jnp.einsum('bnij,bnjd->bnid', attn, v, precision=hi)   # (b, nh, hw, hd)
    out = jnp.transpose(out, (0, 3, 1, 2)).reshape(b, c, hw)     # torch reshape order
    y = jnp.einsum('oc,bcs->bos', wproj, out, precision=hi) + bproj[None, :, None]
    return (y + xf).reshape(b, c, h, w)


if __name__ == "__main__":
    B, C, H, W = 2, 32, 16, 16
    NUM_HEADS = 4

    key = jax.random.PRNGKey(0)
    kx, kg, kb, kwq, kbq, kwp, kbp = jax.random.split(key, 7)

    x = jax.random.normal(kx, (B, C, H, W), jnp.float32)
    gamma = 1.0 + 0.1 * jax.random.normal(kg, (C,), jnp.float32)   # GroupNorm weight
    beta = 0.1 * jax.random.normal(kb, (C,), jnp.float32)          # GroupNorm bias
    wqkv = 0.1 * jax.random.normal(kwq, (3 * C, C), jnp.float32)   # 1x1 conv weight (squeezed)
    bqkv = 0.05 * jax.random.normal(kbq, (3 * C,), jnp.float32)
    wproj = 0.1 * jax.random.normal(kwp, (C, C), jnp.float32)
    bproj = 0.05 * jax.random.normal(kbp, (C,), jnp.float32)

    out = unet_attention_block(x, gamma, beta, wqkv, bqkv, wproj, bproj,
                               num_heads=NUM_HEADS)
    out = jax.block_until_ready(out)

    ref = reference(x, gamma, beta, wqkv, bqkv, wproj, bproj, num_heads=NUM_HEADS)
    assert out.shape == (B, C, H, W)
    assert bool(jnp.allclose(out, ref, rtol=2e-2, atol=2e-2)), "mismatch vs reference"

    print("KERNEL_OK")
</pallas_src>

<mosaic_0001>
module attributes {stable_mosaic.version = 11 : i64} {
  func.func @attn_block_kernel(%arg0: i32, %arg1: memref<1x32x256xf32, #tpu.memory_space<vmem>>, %arg2: memref<96x32xbf16, #tpu.memory_space<vmem>>, %arg3: memref<96x1xf32, #tpu.memory_space<vmem>>, %arg4: memref<32x32xbf16, #tpu.memory_space<vmem>>, %arg5: memref<32x1xf32, #tpu.memory_space<vmem>>, %arg6: memref<1x32x256xf32, #tpu.memory_space<vmem>>, %arg7: memref<96x256xf32, #tpu.memory_space<vmem>>, %arg8: memref<32x256xf32, #tpu.memory_space<vmem>>) attributes {dimension_semantics = [#tpu.dimension_semantics<parallel>], iteration_bounds = array<i64: 2>, scalar_prefetch = 0 : i64, scratch_operands = 2 : i64, tpu.core_type = #tpu.core_type<tc>, window_params = [{transform_indices = @transform_0, window_bounds = array<i64: 1, 32, 256>}, {pipeline_mode = #tpu.pipeline_mode<synchronous>, transform_indices = @transform_1, window_bounds = array<i64: 96, 32>}, {pipeline_mode = #tpu.pipeline_mode<synchronous>, transform_indices = @transform_2, window_bounds = array<i64: 96, 1>}, {pipeline_mode = #tpu.pipeline_mode<synchronous>, transform_indices = @transform_3, window_bounds = array<i64: 32, 32>}, {pipeline_mode = #tpu.pipeline_mode<synchronous>, transform_indices = @transform_4, window_bounds = array<i64: 32, 1>}, {transform_indices = @transform_5, window_bounds = array<i64: 1, 32, 256>}]} {
    %c0 = arith.constant 0 : index
    %c0_0 = arith.constant 0 : index
    %c0_1 = arith.constant 0 : index
    %0 = vector.load %arg1[%c0, %c0_0, %c0_1] : memref<1x32x256xf32, #tpu.memory_space<vmem>>, vector<1x32x256xf32>
    %1 = vector.shape_cast %0 : vector<1x32x256xf32> to vector<32x256xf32>
    %2 = vector.shape_cast %1 : vector<32x256xf32> to vector<1x32x256xf32>
    %cst = arith.constant dense<0.000000e+00> : vector<1xf32>
    %3 = vector.multi_reduction <add>, %2, %cst [1, 2] : vector<1x32x256xf32> to vector<1xf32>
    %4 = vector.shape_cast %3 : vector<1xf32> to vector<1x1x1xf32>
    %5 = vector.extract %4[0, 0, 0] : f32 from vector<1x1x1xf32>
    %cst_2 = arith.constant 8.192000e+03 : f32
    %6 = arith.divf %5, %cst_2 : f32
    %7 = vector.broadcast %6 : f32 to vector<32x256xf32>
    %8 = arith.subf %1, %7 : vector<32x256xf32>
    %9 = arith.mulf %8, %8 : vector<32x256xf32>
    %10 = vector.shape_cast %9 : vector<32x256xf32> to vector<1x32x256xf32>
    %cst_3 = arith.constant dense<0.000000e+00> : vector<1xf32>
    %11 = vector.multi_reduction <add>, %10, %cst_3 [1, 2] : vector<1x32x256xf32> to vector<1xf32>
    %12 = vector.shape_cast %11 : vector<1xf32> to vector<1x1x1xf32>
    %13 = vector.extract %12[0, 0, 0] : f32 from vector<1x1x1xf32>
    %cst_4 = arith.constant 8.192000e+03 : f32
    %14 = arith.divf %13, %cst_4 : f32
    %cst_5 = arith.constant 9.99999974E-6 : f32
    %15 = arith.addf %14, %cst_5 : f32
    %16 = math.rsqrt %15 : f32
    %17 = vector.broadcast %16 : f32 to vector<32x256xf32>
    %18 = arith.mulf %8, %17 : vector<32x256xf32>
    %c0_6 = arith.constant 0 : index
    %c0_7 = arith.constant 0 : index
    %19 = vector.load %arg2[%c0_6, %c0_7] : memref<96x32xbf16, #tpu.memory_space<vmem>>, vector<96x32xbf16>
    %20 = arith.truncf %18 : vector<32x256xf32> to vector<32x256xbf16>
    %cst_8 = arith.constant dense<0.000000e+00> : vector<96x256xf32>
    %21 = tpu.matmul %19, %20, %cst_8 {dimension_numbers = #tpu.dot_dimension_numbers<[1], [0], [0], [1], [0, 0, 1, 1], [], []>} : vector<96x32xbf16>, vector<32x256xbf16>, vector<96x256xf32> -> vector<96x256xf32>
    %c0_9 = arith.constant 0 : index
    %c0_10 = arith.constant 0 : index
    %22 = vector.load %arg3[%c0_9, %c0_10] : memref<96x1xf32, #tpu.memory_space<vmem>>, vector<96x1xf32>
    %23 = vector.broadcast %22 : vector<96x1xf32> to vector<96x256xf32>
    %24 = arith.addf %21, %23 : vector<96x256xf32>
    %c0_11 = arith.constant 0 : index
    %c0_12 = arith.constant 0 : index
    %25 = vector.load %arg7[%c0_11, %c0_12] : memref<96x256xf32, #tpu.memory_space<vmem>>, vector<96x256xf32>
    tpu.vector_store %arg7[%c0_11, %c0_12], %24 {strides = array<i32>} : memref<96x256xf32, #tpu.memory_space<vmem>>, vector<96x256xf32>,
    %c32 = arith.constant 32 : index
    %c0_13 = arith.constant 0 : index
    %26 = vector.load %arg7[%c32, %c0_13] : memref<96x256xf32, #tpu.memory_space<vmem>>, vector<8x256xf32>
    %27 = arith.truncf %26 : vector<8x256xf32> to vector<8x256xbf16>
    %c64 = arith.constant 64 : index
    %c0_14 = arith.constant 0 : index
    %28 = vector.load %arg7[%c64, %c0_14] : memref<96x256xf32, #tpu.memory_space<vmem>>, vector<8x256xf32>
    %29 = arith.truncf %28 : vector<8x256xf32> to vector<8x256xbf16>
    %c0_15 = arith.constant 0 : index
    %c0_16 = arith.constant 0 : index
    %30 = vector.load %arg7[%c0_15, %c0_16] : memref<96x256xf32, #tpu.memory_space<vmem>>, vector<8x128xf32>
    %31 = arith.truncf %30 : vector<8x128xf32> to vector<8x128xbf16>
    %cst_17 = arith.constant dense<0.000000e+00> : vector<256x128xf32>
    %32 = tpu.matmul %27, %31, %cst_17 {dimension_numbers = #tpu.dot_dimension_numbers<[0], [0], [1], [1], [0, 1, 1, 1], [], []>} : vector<8x256xbf16>, vector<8x128xbf16>, vector<256x128xf32> -> vector<256x128xf32>
    %cst_18 = arith.constant dense<0xFF800000> : vector<128xf32>
    %33 = vector.multi_reduction <maximumf>, %32, %cst_18 [0] : vector<256x128xf32> to vector<128xf32>
    %34 = vector.shape_cast %33 : vector<128xf32> to vector<1x128xf32>
    %35 = vector.broadcast %34 : vector<1x128xf32> to vector<256x128xf32>
    %36 = arith.subf %32, %35 : vector<256x128xf32>
    %37 = math.exp %36 : vector<256x128xf32>
    %38 = arith.truncf %37 : vector<256x128xf32> to vector<256x128xbf16>
    %39 = arith.extf %38 : vector<256x128xbf16> to vector<256x128xf32>
    %cst_19 = arith.constant dense<0.000000e+00> : vector<128xf32>
    %40 = vector.multi_reduction <add>, %39, %cst_19 [0] : vector<256x128xf32> to vector<128xf32>
    %41 = vector.shape_cast %40 : vector<128xf32> to vector<1x128xf32>
    %cst_20 = arith.constant dense<0.000000e+00> : vector<8x128xf32>
    %42 = tpu.matmul %29, %38, %cst_20 {dimension_numbers = #tpu.dot_dimension_numbers<[1], [0], [0], [1], [0, 0, 1, 1], [], []>} : vector<8x256xbf16>, vector<256x128xbf16>, vector<8x128xf32> -> vector<8x128xf32>
    %43 = tpu.reciprocal %41 {approx = true} : vector<1x128xf32> -> vector<1x128xf32>
    %44 = vector.broadcast %43 : vector<1x128xf32> to vector<8x128xf32>
    %45 = arith.mulf %42, %44 : vector<8x128xf32>
    %c0_21 = arith.constant 0 : index
    %c0_22 = arith.constant 0 : index
    %46 = vector.load %arg8[%c0_21, %c0_22] : memref<32x256xf32, #tpu.memory_space<vmem>>, vector<8x128xf32>
    tpu.vector_store %arg8[%c0_21, %c0_22], %45 {strides = array<i32>} : memref<32x256xf32, #tpu.memory_space<vmem>>, vector<8x128xf32>,
    %c0_23 = arith.constant 0 : index
    %c128 = arith.constant 128 : index
    %47 = vector.load %arg7[%c0_23, %c128] : memref<96x256xf32, #tpu.memory_space<vmem>>, vector<8x128xf32>
    %48 = arith.truncf %47 : vector<8x128xf32> to vector<8x128xbf16>
    %cst_24 = arith.constant dense<0.000000e+00> : vector<256x128xf32>
    %49 = tpu.matmul %27, %48, %cst_24 {dimension_numbers = #tpu.dot_dimension_numbers<[0], [0], [1], [1], [0, 1, 1, 1], [], []>} : vector<8x256xbf16>, vector<8x128xbf16>, vector<256x128xf32> -> vector<256x128xf32>
    %cst_25 = arith.constant dense<0xFF800000> : vector<128xf32>
    %50 = vector.multi_reduction <maximumf>, %49, %cst_25 [0] : vector<256x128xf32> to vector<128xf32>
    %51 = vector.shape_cast %50 : vector<128xf32> to vector<1x128xf32>
    %52 = vector.broadcast %51 : vector<1x128xf32> to vector<256x128xf32>
    %53 = arith.subf %49, %52 : vector<256x128xf32>
    %54 = math.exp %53 : vector<256x128xf32>
    %55 = arith.truncf %54 : vector<256x128xf32> to vector<256x128xbf16>
    %56 = arith.extf %55 : vector<256x128xbf16> to vector<256x128xf32>
    %cst_26 = arith.constant dense<0.000000e+00> : vector<128xf32>
    %57 = vector.multi_reduction <add>, %56, %cst_26 [0] : vector<256x128xf32> to vector<128xf32>
    %58 = vector.shape_cast %57 : vector<128xf32> to vector<1x128xf32>
    %cst_27 = arith.constant dense<0.000000e+00> : vector<8x128xf32>
    %59 = tpu.matmul %29, %55, %cst_27 {dimension_numbers = #tpu.dot_dimension_numbers<[1], [0], [0], [1], [0, 0, 1, 1], [], []>} : vector<8x256xbf16>, vector<256x128xbf16>, vector<8x128xf32> -> vector<8x128xf32>
    %60 = tpu.reciprocal %58 {approx = true} : vector<1x128xf32> -> vector<1x128xf32>
    %61 = vector.broadcast %60 : vector<1x128xf32> to vector<8x128xf32>
    %62 = arith.mulf %59, %61 : vector<8x128xf32>
    %c0_28 = arith.constant 0 : index
    %c128_29 = arith.constant 128 : index
    %63 = vector.load %arg8[%c0_28, %c128_29] : memref<32x256xf32, #tpu.memory_space<vmem>>, vector<8x128xf32>
    tpu.vector_store %arg8[%c0_28, %c128_29], %62 {strides = array<i32>} : memref<32x256xf32, #tpu.memory_space<vmem>>, vector<8x128xf32>,
    %c40 = arith.constant 40 : index
    %c0_30 = arith.constant 0 : index
    %64 = vector.load %arg7[%c40, %c0_30] : memref<96x256xf32, #tpu.memory_space<vmem>>, vector<8x256xf32>
    %65 = arith.truncf %64 : vector<8x256xf32> to vector<8x256xbf16>
    %c72 = arith.constant 72 : index
    %c0_31 = arith.constant 0 : index
    %66 = vector.load %arg7[%c72, %c0_31] : memref<96x256xf32, #tpu.memory_space<vmem>>, vector<8x256xf32>
    %67 = arith.truncf %66 : vector<8x256xf32> to vector<8x256xbf16>
    %c8 = arith.constant 8 : index
    %c0_32 = arith.constant 0 : index
    %68 = vector.load %arg7[%c8, %c0_32] : memref<96x256xf32, #tpu.memory_space<vmem>>, vector<8x128xf32>
    %69 = arith.truncf %68 : vector<8x128xf32> to vector<8x128xbf16>
    %cst_33 = arith.constant dense<0.000000e+00> : vector<256x128xf32>
    %70 = tpu.matmul %65, %69, %cst_33 {dimension_numbers = #tpu.dot_dimension_numbers<[0], [0], [1], [1], [0, 1, 1, 1], [], []>} : vector<8x256xbf16>, vector<8x128xbf16>, vector<256x128xf32> -> vector<256x128xf32>
    %cst_34 = arith.constant dense<0xFF800000> : vector<128xf32>
    %71 = vector.multi_reduction <maximumf>, %70, %cst_34 [0] : vector<256x128xf32> to vector<128xf32>
    %72 = vector.shape_cast %71 : vector<128xf32> to vector<1x128xf32>
    %73 = vector.broadcast %72 : vector<1x128xf32> to vector<256x128xf32>
    %74 = arith.subf %70, %73 : vector<256x128xf32>
    %75 = math.exp %74 : vector<256x128xf32>
    %76 = arith.truncf %75 : vector<256x128xf32> to vector<256x128xbf16>
    %77 = arith.extf %76 : vector<256x128xbf16> to vector<256x128xf32>
    %cst_35 = arith.constant dense<0.000000e+00> : vector<128xf32>
    %78 = vector.multi_reduction <add>, %77, %cst_35 [0] : vector<256x128xf32> to vector<128xf32>
    %79 = vector.shape_cast %78 : vector<128xf32> to vector<1x128xf32>
    %cst_36 = arith.constant dense<0.000000e+00> : vector<8x128xf32>
    %80 = tpu.matmul %67, %76, %cst_36 {dimension_numbers = #tpu.dot_dimension_numbers<[1], [0], [0], [1], [0, 0, 1, 1], [], []>} : vector<8x256xbf16>, vector<256x128xbf16>, vector<8x128xf32> -> vector<8x128xf32>
    %81 = tpu.reciprocal %79 {approx = true} : vector<1x128xf32> -> vector<1x128xf32>
    %82 = vector.broadcast %81 : vector<1x128xf32> to vector<8x128xf32>
    %83 = arith.mulf %80, %82 : vector<8x128xf32>
    %c8_37 = arith.constant 8 : index
    %c0_38 = arith.constant 0 : index
    %84 = vector.load %arg8[%c8_37, %c0_38] : memref<32x256xf32, #tpu.memory_space<vmem>>, vector<8x128xf32>
    tpu.vector_store %arg8[%c8_37, %c0_38], %83 {strides = array<i32>} : memref<32x256xf32, #tpu.memory_space<vmem>>, vector<8x128xf32>,
    %c8_39 = arith.constant 8 : index
    %c128_40 = arith.constant 128 : index
    %85 = vector.load %arg7[%c8_39, %c128_40] : memref<96x256xf32, #tpu.memory_space<vmem>>, vector<8x128xf32>
    %86 = arith.truncf %85 : vector<8x128xf32> to vector<8x128xbf16>
    %cst_41 = arith.constant dense<0.000000e+00> : vector<256x128xf32>
    %87 = tpu.matmul %65, %86, %cst_41 {dimension_numbers = #tpu.dot_dimension_numbers<[0], [0], [1], [1], [0, 1, 1, 1], [], []>} : vector<8x256xbf16>, vector<8x128xbf16>, vector<256x128xf32> -> vector<256x128xf32>
    %cst_42 = arith.constant dense<0xFF800000> : vector<128xf32>
    %88 = vector.multi_reduction <maximumf>, %87, %cst_42 [0] : vector<256x128xf32> to vector<128xf32>
    %89 = vector.shape_cast %88 : vector<128xf32> to vector<1x128xf32>
    %90 = vector.broadcast %89 : vector<1x128xf32> to vector<256x128xf32>
    %91 = arith.subf %87, %90 : vector<256x128xf32>
    %92 = math.exp %91 : vector<256x128xf32>
    %93 = arith.truncf %92 : vector<256x128xf32> to vector<256x128xbf16>
    %94 = arith.extf %93 : vector<256x128xbf16> to vector<256x128xf32>
    %cst_43 = arith.constant dense<0.000000e+00> : vector<128xf32>
    %95 = vector.multi_reduction <add>, %94, %cst_43 [0] : vector<256x128xf32> to vector<128xf32>
    %96 = vector.shape_cast %95 : vector<128xf32> to vector<1x128xf32>
    %cst_44 = arith.constant dense<0.000000e+00> : vector<8x128xf32>
    %97 = tpu.matmul %67, %93, %cst_44 {dimension_numbers = #tpu.dot_dimension_numbers<[1], [0], [0], [1], [0, 0, 1, 1], [], []>} : vector<8x256xbf16>, vector<256x128xbf16>, vector<8x128xf32> -> vector<8x128xf32>
    %98 = tpu.reciprocal %96 {approx = true} : vector<1x128xf32> -> vector<1x128xf32>
    %99 = vector.broadcast %98 : vector<1x128xf32> to vector<8x128xf32>
    %100 = arith.mulf %97, %99 : vector<8x128xf32>
    %c8_45 = arith.constant 8 : index
    %c128_46 = arith.constant 128 : index
    %101 = vector.load %arg8[%c8_45, %c128_46] : memref<32x256xf32, #tpu.memory_space<vmem>>, vector<8x128xf32>
    tpu.vector_store %arg8[%c8_45, %c128_46], %100 {strides = array<i32>} : memref<32x256xf32, #tpu.memory_space<vmem>>, vector<8x128xf32>,
    %c48 = arith.constant 48 : index
    %c0_47 = arith.constant 0 : index
    %102 = vector.load %arg7[%c48, %c0_47] : memref<96x256xf32, #tpu.memory_space<vmem>>, vector<8x256xf32>
    %103 = arith.truncf %102 : vector<8x256xf32> to vector<8x256xbf16>
    %c80 = arith.constant 80 : index
    %c0_48 = arith.constant 0 : index
    %104 = vector.load %arg7[%c80, %c0_48] : memref<96x256xf32, #tpu.memory_space<vmem>>, vector<8x256xf32>
    %105 = arith.truncf %104 : vector<8x256xf32> to vector<8x256xbf16>
    %c16 = arith.constant 16 : index
    %c0_49 = arith.constant 0 : index
    %106 = vector.load %arg7[%c16, %c0_49] : memref<96x256xf32, #tpu.memory_space<vmem>>, vector<8x128xf32>
    %107 = arith.truncf %106 : vector<8x128xf32> to vector<8x128xbf16>
    %cst_50 = arith.constant dense<0.000000e+00> : vector<256x128xf32>
    %108 = tpu.matmul %103, %107, %cst_50 {dimension_numbers = #tpu.dot_dimension_numbers<[0], [0], [1], [1], [0, 1, 1, 1], [], []>} : vector<8x256xbf16>, vector<8x128xbf16>, vector<256x128xf32> -> vector<256x128xf32>
    %cst_51 = arith.constant dense<0xFF800000> : vector<128xf32>
    %109 = vector.multi_reduction <maximumf>, %108, %cst_51 [0] : vector<256x128xf32> to vector<128xf32>
    %110 = vector.shape_cast %109 : vector<128xf32> to vector<1x128xf32>
    %111 = vector.broadcast %110 : vector<1x128xf32> to vector<256x128xf32>
    %112 = arith.subf %108, %111 : vector<256x128xf32>
    %113 = math.exp %112 : vector<256x128xf32>
    %114 = arith.truncf %113 : vector<256x128xf32> to vector<256x128xbf16>
    %115 = arith.extf %114 : vector<256x128xbf16> to vector<256x128xf32>
    %cst_52 = arith.constant dense<0.000000e+00> : vector<128xf32>
    %116 = vector.multi_reduction <add>, %115, %cst_52 [0] : vector<256x128xf32> to vector<128xf32>
    %117 = vector.shape_cast %116 : vector<128xf32> to vector<1x128xf32>
    %cst_53 = arith.constant dense<0.000000e+00> : vector<8x128xf32>
    %118 = tpu.matmul %105, %114, %cst_53 {dimension_numbers = #tpu.dot_dimension_numbers<[1], [0], [0], [1], [0, 0, 1, 1], [], []>} : vector<8x256xbf16>, vector<256x128xbf16>, vector<8x128xf32> -> vector<8x128xf32>
    %119 = tpu.reciprocal %117 {approx = true} : vector<1x128xf32> -> vector<1x128xf32>
    %120 = vector.broadcast %119 : vector<1x128xf32> to vector<8x128xf32>
    %121 = arith.mulf %118, %120 : vector<8x128xf32>
    %c16_54 = arith.constant 16 : index
    %c0_55 = arith.constant 0 : index
    %122 = vector.load %arg8[%c16_54, %c0_55] : memref<32x256xf32, #tpu.memory_space<vmem>>, vector<8x128xf32>
    tpu.vector_store %arg8[%c16_54, %c0_55], %121 {strides = array<i32>} : memref<32x256xf32, #tpu.memory_space<vmem>>, vector<8x128xf32>,
    %c16_56 = arith.constant 16 : index
    %c128_57 = arith.constant 128 : index
    %123 = vector.load %arg7[%c16_56, %c128_57] : memref<96x256xf32, #tpu.memory_space<vmem>>, vector<8x128xf32>
    %124 = arith.truncf %123 : vector<8x128xf32> to vector<8x128xbf16>
    %cst_58 = arith.constant dense<0.000000e+00> : vector<256x128xf32>
    %125 = tpu.matmul %103, %124, %cst_58 {dimension_numbers = #tpu.dot_dimension_numbers<[0], [0], [1], [1], [0, 1, 1, 1], [], []>} : vector<8x256xbf16>, vector<8x128xbf16>, vector<256x128xf32> -> vector<256x128xf32>
    %cst_59 = arith.constant dense<0xFF800000> : vector<128xf32>
    %126 = vector.multi_reduction <maximumf>, %125, %cst_59 [0] : vector<256x128xf32> to vector<128xf32>
    %127 = vector.shape_cast %126 : vector<128xf32> to vector<1x128xf32>
    %128 = vector.broadcast %127 : vector<1x128xf32> to vector<256x128xf32>
    %129 = arith.subf %125, %128 : vector<256x128xf32>
    %130 = math.exp %129 : vector<256x128xf32>
    %131 = arith.truncf %130 : vector<256x128xf32> to vector<256x128xbf16>
    %132 = arith.extf %131 : vector<256x128xbf16> to vector<256x128xf32>
    %cst_60 = arith.constant dense<0.000000e+00> : vector<128xf32>
    %133 = vector.multi_reduction <add>, %132, %cst_60 [0] : vector<256x128xf32> to vector<128xf32>
    %134 = vector.shape_cast %133 : vector<128xf32> to vector<1x128xf32>
    %cst_61 = arith.constant dense<0.000000e+00> : vector<8x128xf32>
    %135 = tpu.matmul %105, %131, %cst_61 {dimension_numbers = #tpu.dot_dimension_numbers<[1], [0], [0], [1], [0, 0, 1, 1], [], []>} : vector<8x256xbf16>, vector<256x128xbf16>, vector<8x128xf32> -> vector<8x128xf32>
    %136 = tpu.reciprocal %134 {approx = true} : vector<1x128xf32> -> vector<1x128xf32>
    %137 = vector.broadcast %136 : vector<1x128xf32> to vector<8x128xf32>
    %138 = arith.mulf %135, %137 : vector<8x128xf32>
    %c16_62 = arith.constant 16 : index
    %c128_63 = arith.constant 128 : index
    %139 = vector.load %arg8[%c16_62, %c128_63] : memref<32x256xf32, #tpu.memory_space<vmem>>, vector<8x128xf32>
    tpu.vector_store %arg8[%c16_62, %c128_63], %138 {strides = array<i32>} : memref<32x256xf32, #tpu.memory_space<vmem>>, vector<8x128xf32>,
    %c56 = arith.constant 56 : index
    %c0_64 = arith.constant 0 : index
    %140 = vector.load %arg7[%c56, %c0_64] : memref<96x256xf32, #tpu.memory_space<vmem>>, vector<8x256xf32>
    %141 = arith.truncf %140 : vector<8x256xf32> to vector<8x256xbf16>
    %c88 = arith.constant 88 : index
    %c0_65 = arith.constant 0 : index
    %142 = vector.load %arg7[%c88, %c0_65] : memref<96x256xf32, #tpu.memory_space<vmem>>, vector<8x256xf32>
    %143 = arith.truncf %142 : vector<8x256xf32> to vector<8x256xbf16>
    %c24 = arith.constant 24 : index
    %c0_66 = arith.constant 0 : index
    %144 = vector.load %arg7[%c24, %c0_66] : memref<96x256xf32, #tpu.memory_space<vmem>>, vector<8x128xf32>
    %145 = arith.truncf %144 : vector<8x128xf32> to vector<8x128xbf16>
    %cst_67 = arith.constant dense<0.000000e+00> : vector<256x128xf32>
    %146 = tpu.matmul %141, %145, %cst_67 {dimension_numbers = #tpu.dot_dimension_numbers<[0], [0], [1], [1], [0, 1, 1, 1], [], []>} : vector<8x256xbf16>, vector<8x128xbf16>, vector<256x128xf32> -> vector<256x128xf32>
    %cst_68 = arith.constant dense<0xFF800000> : vector<128xf32>
    %147 = vector.multi_reduction <maximumf>, %146, %cst_68 [0] : vector<256x128xf32> to vector<128xf32>
    %148 = vector.shape_cast %147 : vector<128xf32> to vector<1x128xf32>
    %149 = vector.broadcast %148 : vector<1x128xf32> to vector<256x128xf32>
    %150 = arith.subf %146, %149 : vector<256x128xf32>
    %151 = math.exp %150 : vector<256x128xf32>
    %152 = arith.truncf %151 : vector<256x128xf32> to vector<256x128xbf16>
    %153 = arith.extf %152 : vector<256x128xbf16> to vector<256x128xf32>
    %cst_69 = arith.constant dense<0.000000e+00> : vector<128xf32>
    %154 = vector.multi_reduction <add>, %153, %cst_69 [0] : vector<256x128xf32> to vector<128xf32>
    %155 = vector.shape_cast %154 : vector<128xf32> to vector<1x128xf32>
    %cst_70 = arith.constant dense<0.000000e+00> : vector<8x128xf32>
    %156 = tpu.matmul %143, %152, %cst_70 {dimension_numbers = #tpu.dot_dimension_numbers<[1], [0], [0], [1], [0, 0, 1, 1], [], []>} : vector<8x256xbf16>, vector<256x128xbf16>, vector<8x128xf32> -> vector<8x128xf32>
    %157 = tpu.reciprocal %155 {approx = true} : vector<1x128xf32> -> vector<1x128xf32>
    %158 = vector.broadcast %157 : vector<1x128xf32> to vector<8x128xf32>
    %159 = arith.mulf %156, %158 : vector<8x128xf32>
    %c24_71 = arith.constant 24 : index
    %c0_72 = arith.constant 0 : index
    %160 = vector.load %arg8[%c24_71, %c0_72] : memref<32x256xf32, #tpu.memory_space<vmem>>, vector<8x128xf32>
    tpu.vector_store %arg8[%c24_71, %c0_72], %159 {strides = array<i32>} : memref<32x256xf32, #tpu.memory_space<vmem>>, vector<8x128xf32>,
    %c24_73 = arith.constant 24 : index
    %c128_74 = arith.constant 128 : index
    %161 = vector.load %arg7[%c24_73, %c128_74] : memref<96x256xf32, #tpu.memory_space<vmem>>, vector<8x128xf32>
    %162 = arith.truncf %161 : vector<8x128xf32> to vector<8x128xbf16>
    %cst_75 = arith.constant dense<0.000000e+00> : vector<256x128xf32>
    %163 = tpu.matmul %141, %162, %cst_75 {dimension_numbers = #tpu.dot_dimension_numbers<[0], [0], [1], [1], [0, 1, 1, 1], [], []>} : vector<8x256xbf16>, vector<8x128xbf16>, vector<256x128xf32> -> vector<256x128xf32>
    %cst_76 = arith.constant dense<0xFF800000> : vector<128xf32>
    %164 = vector.multi_reduction <maximumf>, %163, %cst_76 [0] : vector<256x128xf32> to vector<128xf32>
    %165 = vector.shape_cast %164 : vector<128xf32> to vector<1x128xf32>
    %166 = vector.broadcast %165 : vector<1x128xf32> to vector<256x128xf32>
    %167 = arith.subf %163, %166 : vector<256x128xf32>
    %168 = math.exp %167 : vector<256x128xf32>
    %169 = arith.truncf %168 : vector<256x128xf32> to vector<256x128xbf16>
    %170 = arith.extf %169 : vector<256x128xbf16> to vector<256x128xf32>
    %cst_77 = arith.constant dense<0.000000e+00> : vector<128xf32>
    %171 = vector.multi_reduction <add>, %170, %cst_77 [0] : vector<256x128xf32> to vector<128xf32>
    %172 = vector.shape_cast %171 : vector<128xf32> to vector<1x128xf32>
    %cst_78 = arith.constant dense<0.000000e+00> : vector<8x128xf32>
    %173 = tpu.matmul %143, %169, %cst_78 {dimension_numbers = #tpu.dot_dimension_numbers<[1], [0], [0], [1], [0, 0, 1, 1], [], []>} : vector<8x256xbf16>, vector<256x128xbf16>, vector<8x128xf32> -> vector<8x128xf32>
    %174 = tpu.reciprocal %172 {approx = true} : vector<1x128xf32> -> vector<1x128xf32>
    %175 = vector.broadcast %174 : vector<1x128xf32> to vector<8x128xf32>
    %176 = arith.mulf %173, %175 : vector<8x128xf32>
    %c24_79 = arith.constant 24 : index
    %c128_80 = arith.constant 128 : index
    %177 = vector.load %arg8[%c24_79, %c128_80] : memref<32x256xf32, #tpu.memory_space<vmem>>, vector<8x128xf32>
    tpu.vector_store %arg8[%c24_79, %c128_80], %176 {strides = array<i32>} : memref<32x256xf32, #tpu.memory_space<vmem>>, vector<8x128xf32>,
    %c0_81 = arith.constant 0 : index
    %c0_82 = arith.constant 0 : index
    %178 = vector.load %arg4[%c0_81, %c0_82] : memref<32x32xbf16, #tpu.memory_space<vmem>>, vector<32x32xbf16>
    %c0_83 = arith.constant 0 : index
    %c0_84 = arith.constant 0 : index
    %179 = vector.load %arg8[%c0_83, %c0_84] : memref<32x256xf32, #tpu.memory_space<vmem>>, vector<32x256xf32>
    %180 = arith.truncf %179 : vector<32x256xf32> to vector<32x256xbf16>
    %cst_85 = arith.constant dense<0.000000e+00> : vector<32x256xf32>
    %181 = tpu.matmul %178, %180, %cst_85 {dimension_numbers = #tpu.dot_dimension_numbers<[1], [0], [0], [1], [0, 0, 1, 1], [], []>} : vector<32x32xbf16>, vector<32x256xbf16>, vector<32x256xf32> -> vector<32x256xf32>
    %c0_86 = arith.constant 0 : index
    %c0_87 = arith.constant 0 : index
    %182 = vector.load %arg5[%c0_86, %c0_87] : memref<32x1xf32, #tpu.memory_space<vmem>>, vector<32x1xf32>
    %183 = vector.broadcast %182 : vector<32x1xf32> to vector<32x256xf32>
    %184 = arith.addf %181, %183 : vector<32x256xf32>
    %185 = arith.addf %184, %1 : vector<32x256xf32>
    %c0_88 = arith.constant 0 : index
    %c0_89 = arith.constant 0 : index
    %c0_90 = arith.constant 0 : index
    %186 = vector.load %arg6[%c0_88, %c0_89, %c0_90] : memref<1x32x256xf32, #tpu.memory_space<vmem>>, vector<1x32x256xf32>
    %187 = vector.shape_cast %186 : vector<1x32x256xf32> to vector<32x256xf32>
    %188 = vector.shape_cast %185 : vector<32x256xf32> to vector<1x32x256xf32>
    tpu.vector_store %arg6[%c0_88, %c0_89, %c0_90], %188 {strides = array<i32>} : memref<1x32x256xf32, #tpu.memory_space<vmem>>, vector<1x32x256xf32>,
    return
  }
  func.func @transform_0(%arg0: i32) -> (i32, i32, i32) {
    %c0_i32 = arith.constant 0 : i32
    %c0_i32_0 = arith.constant 0 : i32
    %c0_i32_1 = arith.constant 0 : i32
    return %arg0, %c0_i32, %c0_i32_0 : i32, i32, i32
  }
  func.func @transform_1(%arg0: i32) -> (i32, i32) {
    %c0_i32 = arith.constant 0 : i32
    %c0_i32_0 = arith.constant 0 : i32
    %c0_i32_1 = arith.constant 0 : i32
    return %c0_i32, %c0_i32_0 : i32, i32
  }
  func.func @transform_2(%arg0: i32) -> (i32, i32) {
    %c0_i32 = arith.constant 0 : i32
    %c0_i32_0 = arith.constant 0 : i32
    %c0_i32_1 = arith.constant 0 : i32
    return %c0_i32, %c0_i32_0 : i32, i32
  }
  func.func @transform_3(%arg0: i32) -> (i32, i32) {
    %c0_i32 = arith.constant 0 : i32
    %c0_i32_0 = arith.constant 0 : i32
    %c0_i32_1 = arith.constant 0 : i32
    return %c0_i32, %c0_i32_0 : i32, i32
  }
  func.func @transform_4(%arg0: i32) -> (i32, i32) {
    %c0_i32 = arith.constant 0 : i32
    %c0_i32_0 = arith.constant 0 : i32
    %c0_i32_1 = arith.constant 0 : i32
    return %c0_i32, %c0_i32_0 : i32, i32
  }
  func.func @transform_5(%arg0: i32) -> (i32, i32, i32) {
    %c0_i32 = arith.constant 0 : i32
    %c0_i32_0 = arith.constant 0 : i32
    %c0_i32_1 = arith.constant 0 : i32
    return %arg0, %c0_i32, %c0_i32_0 : i32, i32, i32
  }
}

</mosaic_0001>

<llo_original>
// kernel: tpu_custom_call.1
$region0: #{tpu_custom_call.1}
  #allocation0 [shape = 'u32[]', space=smem, size = 0x4, offset = 0x4, fixed_abs, tag = 'smem constant byte address 0x4 - core index']
  #allocation1 [shape = 'u32[72,128]{1,0:T(1,128)}', space=vmem, size = 0x9000, scoped, tag = 'internal scratch']
  #allocation2 [shape = 'f32[96,256]{1,0:T(8,128)}', space=vmem, size = 0x18000, scoped, tag = 'scratch operand']
  #allocation3 [shape = 'f32[32,256]{1,0:T(8,128)}', space=vmem, size = 0x8000, scoped, tag = 'scratch operand']
  %s0 = inlined_call_operand.vmem [shape: f32[2,32,256], index: 0, kind: input, shape index: {}]
  %s1 = inlined_call_operand.vmem [shape: bf16[96,32], index: 1, kind: input, shape index: {}]
  %s2 = inlined_call_operand.vmem [shape: f32[96,1], index: 2, kind: input, shape index: {}]
  %s3 = inlined_call_operand.vmem [shape: bf16[32,32], index: 3, kind: input, shape index: {}]
  %s4 = inlined_call_operand.vmem [shape: f32[32,1], index: 4, kind: input, shape index: {}]
  %s5 = inlined_call_operand.hbm [shape: f32[2,32,256], index: 5, kind: output, shape index: {}]
  %s6 = sld [smem:[#allocation0]]
  $region53: #{tpu_custom_call.1} parent=0
    _
  %s8 = ssub.s32 1, %s6
  %s9 = scalar_select 0, %s8, %s6
  $region1: #{tpu_custom_call.1} parent=0
    #allocation4 [shape = 'u8[65536]{0}', space=vmem, size = 0x10000, scoped, tag = 'output window, operand 0']
    #allocation5 [shape = 's32[2]{0}', space=sflag, size = 0x8, scoped, tag = 'scoped memory for tpu_custom_call.1']
    %10 = vsyncpa [#allocation5], 0
    %s11 = scalar_lea.sflag [#allocation5], 1
    %12 = vsyncpa %s11, 0
    loop: start=0, step=1, limit=4
    $region2: #{tpu_custom_call.1} parent=1 // loop_pre_header
      _
    $region3: #{tpu_custom_call.1} parent=1 // loop_header
      %s14 = sphi 0, %s18
      %p15 = scmp.ge.s32.totalorder %s14, 4
      %s24 = sphi 0, %s26
      %s27 = sphi 0, %s24
      %s28 = sphi 0, %s27
      %s44 = sphi 0, %s28
      %s48 = sphi 0, %s48
      %s50 = sphi 0, %s48
      %s51 = sphi 0, %s50
      %s65 = sphi 0, %s51
      %s69 = sphi 0, %s69
      %s71 = sphi 0, %s69
      %s72 = sphi 0, %s71
      %s86 = sphi 0, %s72
      %s90 = sphi 0, %s90
      %s92 = sphi 0, %s90
      %s93 = sphi 0, %s92
      %s107 = sphi 0, %s93
      %s111 = sphi 0, %s111
      %s113 = sphi 0, %s111
      %s114 = sphi 0, %s113
      %s128 = sphi 0, %s114
      %s134 = sphi 0, %s136
      %s137 = sphi 0, %s134
      %s138 = sphi 0, %s137
      %s154 = sphi 0, %s138
    $region4: #{tpu_custom_call.1} parent=1 // loop_header_branch
      %17 = sbr.rel (%p15) target = $region8
    $region5: #{tpu_custom_call.1} parent=1 // loop_body
      %s19 = ssub.s32 %s14, 1
      %s20 = ssub.s32 %s14, 2
      %s21 = sadd.s32 %s14, 1
      %s22 = ssub.s32 %s14, %s21
      %p23 = scmp.eq.s32.totalorder %s22, 0
      %s25 = sadd.s32 %s24, 1
      %s26 = scalar_select %p23, %s24, %s25
      %p29 = pneg %p23
      %p30 = scmp.eq.s32.totalorder %s14, 1
      %p31 = por %p29, %p30
      %p32 = scmp.ne.s32.totalorder %s24, %s27
      %p33 = scmp.eq.s32.totalorder %s14, 0
      %p34 = por %p32, %p33
      %p35 = scmp.ne.s32.totalorder %s24, %s27
      %p36 = scmp.eq.s32.totalorder %s19, 1
      %p37 = por %p35, %p36
      %p38 = scmp.ne.s32.totalorder %s27, %s28
      %p39 = scmp.eq.s32.totalorder %s19, 0
      %p40 = por %p38, %p39
      %p41 = scmp.ne.s32.totalorder %s27, %s28
      %p42 = scmp.eq.s32.totalorder %s20, 1
      %p43 = por %p41, %p42
      %p45 = scmp.ne.s32.totalorder %s28, %s44
      %p46 = scmp.eq.s32.totalorder %s20, 0
      %p47 = por %p45, %p46
      %s49 = sadd.s32 %s48, 1
      %p52 = scmp.eq.s32.totalorder %s14, 1
      %p53 = scmp.ne.s32.totalorder %s48, %s50
      %p54 = scmp.eq.s32.totalorder %s14, 0
      %p55 = por %p53, %p54
      %p56 = scmp.ne.s32.totalorder %s48, %s50
      %p57 = scmp.eq.s32.totalorder %s19, 1
      %p58 = por %p56, %p57
      %p59 = scmp.ne.s32.totalorder %s50, %s51
      %p60 = scmp.eq.s32.totalorder %s19, 0
      %p61 = por %p59, %p60
      %p62 = scmp.ne.s32.totalorder %s50, %s51
      %p63 = scmp.eq.s32.totalorder %s20, 1
      %p64 = por %p62, %p63
      %p66 = scmp.ne.s32.totalorder %s51, %s65
      %p67 = scmp.eq.s32.totalorder %s20, 0
      %p68 = por %p66, %p67
      %s70 = sadd.s32 %s69, 1
      %p73 = scmp.eq.s32.totalorder %s14, 1
      %p74 = scmp.ne.s32.totalorder %s69, %s71
      %p75 = scmp.eq.s32.totalorder %s14, 0
      %p76 = por %p74, %p75
      %p77 = scmp.ne.s32.totalorder %s69, %s71
      %p78 = scmp.eq.s32.totalorder %s19, 1
      %p79 = por %p77, %p78
      %p80 = scmp.ne.s32.totalorder %s71, %s72
      %p81 = scmp.eq.s32.totalorder %s19, 0
      %p82 = por %p80, %p81
      %p83 = scmp.ne.s32.totalorder %s71, %s72
      %p84 = scmp.eq.s32.totalorder %s20, 1
      %p85 = por %p83, %p84
      %p87 = scmp.ne.s32.totalorder %s72, %s86
      %p88 = scmp.eq.s32.totalorder %s20, 0
      %p89 = por %p87, %p88
      %s91 = sadd.s32 %s90, 1
      %p94 = scmp.eq.s32.totalorder %s14, 1
      %p95 = scmp.ne.s32.totalorder %s90, %s92
      %p96 = scmp.eq.s32.totalorder %s14, 0
      %p97 = por %p95, %p96
      %p98 = scmp.ne.s32.totalorder %s90, %s92
      %p99 = scmp.eq.s32.totalorder %s19, 1
      %p100 = por %p98, %p99
      %p101 = scmp.ne.s32.totalorder %s92, %s93
      %p102 = scmp.eq.s32.totalorder %s19, 0
      %p103 = por %p101, %p102
      %p104 = scmp.ne.s32.totalorder %s92, %s93
      %p105 = scmp.eq.s32.totalorder %s20, 1
      %p106 = por %p104, %p105
      %p108 = scmp.ne.s32.totalorder %s93, %s107
      %p109 = scmp.eq.s32.totalorder %s20, 0
      %p110 = por %p108, %p109
      %s112 = sadd.s32 %s111, 1
      %p115 = scmp.eq.s32.totalorder %s14, 1
      %p116 = scmp.ne.s32.totalorder %s111, %s113
      %p117 = scmp.eq.s32.totalorder %s14, 0
      %p118 = por %p116, %p117
      %p119 = scmp.ne.s32.totalorder %s111, %s113
      %p120 = scmp.eq.s32.totalorder %s19, 1
      %p121 = por %p119, %p120
      %p122 = scmp.ne.s32.totalorder %s113, %s114
      %p123 = scmp.eq.s32.totalorder %s19, 0
      %p124 = por %p122, %p123
      %p125 = scmp.ne.s32.totalorder %s113, %s114
      %p126 = scmp.eq.s32.totalorder %s20, 1
      %p127 = por %p125, %p126
      %p129 = scmp.ne.s32.totalorder %s114, %s128
      %p130 = scmp.eq.s32.totalorder %s20, 0
      %p131 = por %p129, %p130
      %s132 = ssub.s32 %s14, %s21
      %p133 = scmp.eq.s32.totalorder %s132, 0
      %s135 = sadd.s32 %s134, 1
      %s136 = scalar_select %p133, %s134, %s135
      %p139 = pneg %p133
      %p140 = scmp.eq.s32.totalorder %s14, 1
      %p141 = por %p139, %p140
      %p142 = scmp.ne.s32.totalorder %s134, %s137
      %p143 = scmp.eq.s32.totalorder %s14, 0
      %p144 = por %p142, %p143
      %p145 = scmp.ne.s32.totalorder %s134, %s137
      %p146 = scmp.eq.s32.totalorder %s19, 1
      %p147 = por %p145, %p146
      %p148 = scmp.ne.s32.totalorder %s137, %s138
      %p149 = scmp.eq.s32.totalorder %s19, 0
      %p150 = por %p148, %p149
      %p151 = scmp.ne.s32.totalorder %s137, %s138
      %p152 = scmp.eq.s32.totalorder %s20, 1
      %p153 = por %p151, %p152
      %p155 = scmp.ne.s32.totalorder %s138, %s154
      %p156 = scmp.eq.s32.totalorder %s20, 0
      %p157 = por %p155, %p156
      %p158 = scmp.le.s32.totalorder 1, %s14
      %p159 = scmp.lt.s32.totalorder %s14, 3
      %p160 = pnand %p158, %p159
      %p161 = pneg %p160
      // Predicated region
      $region9: #{tpu_custom_call.1} parent=5 // pred_check
        _
      $region10: #{tpu_custom_call.1} parent=5 // pred_check_branch
        %163 = sbr.rel (%p160) target = $region12
      $region11: #{tpu_custom_call.1} parent=5 // pred_region
        %s164 = ssub.s32 %s14, 1
        // Predicated region
        $region13: #{tpu_custom_call.1} parent=11 // pred_check
          %p165 = pneg %p61
        $region14: #{tpu_custom_call.1} parent=11 // pred_check_branch
          %167 = sbr.rel (%p165) target = $region16
        $region15: #{tpu_custom_call.1} parent=11 // pred_region
          _
        $region16: #{tpu_custom_call.1} parent=11 // pred_fallthru
          _
        // Predicated region
        $region17: #{tpu_custom_call.1} parent=11 // pred_check
          %p168 = pneg %p82
        $region18: #{tpu_custom_call.1} parent=11 // pred_check_branch
          %170 = sbr.rel (%p168) target = $region20
        $region19: #{tpu_custom_call.1} parent=11 // pred_region
          _
        $region20: #{tpu_custom_call.1} parent=11 // pred_fallthru
          _
        // Predicated region
        $region21: #{tpu_custom_call.1} parent=11 // pred_check
          %p171 = pneg %p103
        $region22: #{tpu_custom_call.1} parent=11 // pred_check_branch
          %173 = sbr.rel (%p171) target = $region24
        $region23: #{tpu_custom_call.1} parent=11 // pred_region
          _
        $region24: #{tpu_custom_call.1} parent=11 // pred_fallthru
          _
        // Predicated region
        $region25: #{tpu_custom_call.1} parent=11 // pred_check
          %p174 = pneg %p124
        $region26: #{tpu_custom_call.1} parent=11 // pred_check_branch
          %176 = sbr.rel (%p174) target = $region28
        $region27: #{tpu_custom_call.1} parent=11 // pred_region
          _
        $region28: #{tpu_custom_call.1} parent=11 // pred_fallthru
          _
      $region12: #{tpu_custom_call.1} parent=5 // pred_fallthru
        _
      %p177 = scmp.lt.s32.totalorder %s14, 2
      // Predicated region
      $region29: #{tpu_custom_call.1} parent=5 // pred_check
        %p178 = pneg %p177
      $region30: #{tpu_custom_call.1} parent=5 // pred_check_branch
        %180 = sbr.rel (%p178) target = $region32
      $region31: #{tpu_custom_call.1} parent=5 // pred_region
        // Predicated region
        $region33: #{tpu_custom_call.1} parent=31 // pred_check
          %p181 = pneg %p34
        $region34: #{tpu_custom_call.1} parent=31 // pred_check_branch
          %183 = sbr.rel (%p181) target = $region36
        $region35: #{tpu_custom_call.1} parent=31 // pred_region
          %p184 = scmp.lt.s32.totalorder %s14, 1
          %s185 = scalar_select %p184, %s14, 1
          %s186 = smul.addr %s185, 8
          %s187 = smul.addr %s186, 8
          %s188 = scalar_lea.vmem %s0, %s187
        $region36: #{tpu_custom_call.1} parent=31 // pred_fallthru
          _
      $region32: #{tpu_custom_call.1} parent=5 // pred_fallthru
        _
      %p189 = scmp.le.s32.totalorder 1, %s14
      %p190 = scmp.lt.s32.totalorder %s14, 3
      %p191 = pnand %p189, %p190
      %p192 = pneg %p191
      // Predicated region
      $region37: #{tpu_custom_call.1} parent=5 // pred_check
        _
      $region38: #{tpu_custom_call.1} parent=5 // pred_check_branch
        %194 = sbr.rel (%p191) target = $region40
      $region39: #{tpu_custom_call.1} parent=5 // pred_region
        %s195 = ssub.s32 %s14, 1
        %p196 = scmp.lt.s32.totalorder %s19, 1
        %s197 = scalar_select %p196, %s19, 1
        %s198 = smul.addr %s197, 8
        %s199 = smul.addr %s198, 8
        %s200 = scalar_lea.vmem %s0, %s199
        %p201 = pneg %p40
        %p202 = pneg %p37
        %p203 = pneg %p61
        %p204 = pneg %p58
        %p205 = pneg %p82
        %p206 = pneg %p79
        %p207 = pneg %p103
        %p208 = pneg %p100
        %p209 = pneg %p124
        %p210 = pneg %p121
        %p211 = pneg %p150
        %p212 = pneg %p147
        %s213 = sand.u32 %s137, 1
        %s214 = scalar_lea.sflag [#allocation5], %s213
        %s215 = sand.u32 %s137, 1
        %s216 = smul.addr %s215, 64
        %s217 = scalar_lea.vmem [#allocation4], %s216
        %p218 = scmp.lt.s32.totalorder %s19, 1
        %s219 = scalar_select %p218, %s19, 1
        %s220 = smul.addr %s219, 8
        %s221 = smul.addr %s220, 8
        %s222 = scalar_lea.vmem %s0, %s221
        %v224 = vld [vmem:[%s222] sm:$0xff]
        %v225 = vld [vmem:[%s222 + $0x8] sm:$0xff]
        %v226 = vld [vmem:[%s222 + $0x10] sm:$0xff]
        %v227 = vld [vmem:[%s222 + $0x18] sm:$0xff]
        %v228 = vld [vmem:[%s222 + $0x20] sm:$0xff]
        %v229 = vld [vmem:[%s222 + $0x28] sm:$0xff]
        %v230 = vld [vmem:[%s222 + $0x30] sm:$0xff]
        %v231 = vld [vmem:[%s222 + $0x38] sm:$0xff]
        %v232 = vadd.f32 %v224, %v225
        %v233 = vadd.f32 %v232, %v226
        %v234 = vadd.f32 %v233, %v227
        %v235 = vadd.f32 %v234, %v228
        %v236 = vadd.f32 %v235, %v229
        %v237 = vadd.f32 %v236, %v230
        %v238 = vadd.f32 %v237, %v231
        %239 = vadd.xlane.f32.xlu0 %v238
        %v240 = vpop.xlane.xlu0 %239
        %v241 = vrot.slane %v240, 4
        %v242 = vadd.f32 %v240, %v241
        %v243 = vrot.slane %v242, 2
        %v244 = vadd.f32 %v242, %v243
        %v245 = vrot.slane %v244, 1
        %v246 = vadd.f32 %v244, %v245
        %s247 = vtos %v246
        %v248 = vrcp.pop 8192.0
        %v249 = vmul.f32 8192.0, %v248
        %v250 = vsub.f32 1.0, %v249
        %v251 = vmul.f32 %v248, %v250
        %v252 = vadd.f32 %v248, %v251
        %vm253 = vweird.f32 %v248
        %v254 = vsel %vm253, %v248, %v252
        %s255 = vtos %v254
        %s256 = smul.f32 %s247, %s255
        %v257 = vstv %s256
        %v258 = vsub.f32 %v224, %v257
        %v259 = vsub.f32 %v225, %v257
        %v260 = vsub.f32 %v226, %v257
        %v261 = vsub.f32 %v227, %v257
        %v262 = vsub.f32 %v228, %v257
        %v263 = vsub.f32 %v229, %v257
        %v264 = vsub.f32 %v230, %v257
        %v265 = vsub.f32 %v231, %v257
        %v266 = vmul.f32 %v258, %v258
        %v267 = vmul.f32 %v259, %v259
        %v268 = vmul.f32 %v260, %v260
        %v269 = vmul.f32 %v261, %v261
        %v270 = vmul.f32 %v262, %v262
        %v271 = vmul.f32 %v263, %v263
        %v272 = vmul.f32 %v264, %v264
        %v273 = vmul.f32 %v265, %v265
        %v274 = vadd.f32 %v266, %v267
        %v275 = vadd.f32 %v274, %v268
        %v276 = vadd.f32 %v275, %v269
        %v277 = vadd.f32 %v276, %v270
        %v278 = vadd.f32 %v277, %v271
        %v279 = vadd.f32 %v278, %v272
        %v280 = vadd.f32 %v279, %v273
        %281 = vadd.xlane.f32.xlu0 %v280
        %v282 = vpop.xlane.xlu0 %281
        %v283 = vrot.slane %v282, 4
        %v284 = vadd.f32 %v282, %v283
        %v285 = vrot.slane %v284, 2
        %v286 = vadd.f32 %v284, %v285
        %v287 = vrot.slane %v286, 1
        %v288 = vadd.f32 %v286, %v287
        %s289 = vtos %v288
        %v290 = vrcp.pop 8192.0
        %v291 = vmul.f32 8192.0, %v290
        %v292 = vsub.f32 1.0, %v291
        %v293 = vmul.f32 %v290, %v292
        %v294 = vadd.f32 %v290, %v293
        %vm295 = vweird.f32 %v290
        %v296 = vsel %vm295, %v290, %v294
        %s297 = vtos %v296
        %s298 = smul.f32 %s289, %s297
        %s299 = sadd.f32 %s298, 1e-05
        %v300 = vstv %s299
        %v301 = vrsqrt.pop %v300
        %v302 = vmul.f32 %v301, %v300
        %v303 = vmul.f32 %v302, %v301
        %v304 = vmul.f32 0.5, %v303
        %v305 = vsub.f32 1.5, %v304
        %v306 = vmul.f32 %v301, %v305
        %vm307 = vweird.f32 %v300
        %vm308 = vweird.f32 %v301
        %vm309 = vmor %vm307, %vm308
        %v310 = vsel %vm309, %v301, %v306
        %s311 = vtos %v310
        %v312 = vstv %s311
        %v313 = vmul.f32 %v258, %v312
        %v314 = vmul.f32 %v259, %v312
        %v315 = vmul.f32 %v260, %v312
        %v316 = vmul.f32 %v261, %v312
        %v317 = vmul.f32 %v262, %v312
        %v318 = vmul.f32 %v263, %v312
        %v319 = vmul.f32 %v264, %v312
        %v320 = vmul.f32 %v265, %v312
        %v321 = vld [vmem:[%s1] sm:$0xf]
        %v322 = vld [vmem:[%s1 + $0x4] sm:$0xf]
        %v323 = vld [vmem:[%s1 + $0x8] sm:$0xf]
        %v324 = vld [vmem:[%s1 + $0xc] sm:$0xf]
        %v325 = vld [vmem:[%s1 + $0x10] sm:$0xf]
        %v326 = vld [vmem:[%s1 + $0x14] sm:$0xf]
        %v327 = vld [vmem:[%s1 + $0x18] sm:$0xf]
        %v328 = vld [vmem:[%s1 + $0x1c] sm:$0xf]
        %v329 = vld [vmem:[%s1 + $0x20] sm:$0xf]
        %v330 = vld [vmem:[%s1 + $0x24] sm:$0xf]
        %v331 = vld [vmem:[%s1 + $0x28] sm:$0xf]
        %v332 = vld [vmem:[%s1 + $0x2c] sm:$0xf]
        %v333 = vpack.c.bf16 %v315, %v313
        %v334 = vpack.c.bf16 %v316, %v314
        %v335 = vpack.c.bf16 %v319, %v317
        %v336 = vpack.c.bf16 %v320, %v318
        %v337 = vld [vmem:[%s2] sm:$0xff]
        %v338 = vld [vmem:[%s2 + $0x8] sm:$0xff]
        %v339 = vld [vmem:[%s2 + $0x10] sm:$0xff]
        %v340 = vld [vmem:[%s2 + $0x18] sm:$0xff]
        %v341 = vld [vmem:[%s2 + $0x20] sm:$0xff]
        %v342 = vld [vmem:[%s2 + $0x28] sm:$0xff]
        %v343 = vld [vmem:[%s2 + $0x30] sm:$0xff]
        %v344 = vld [vmem:[%s2 + $0x38] sm:$0xff]
        %v345 = vld [vmem:[%s2 + $0x40] sm:$0xff]
        %v346 = vld [vmem:[%s2 + $0x48] sm:$0xff]
        %v347 = vld [vmem:[%s2 + $0x50] sm:$0xff]
        %v348 = vld [vmem:[%s2 + $0x58] sm:$0xff]
        %350 = vset.pattern.permute.xlu0 0
        %351 = vperm.xlu0 %350, %v337
        %v352 = vpop.permute.xlu0 %351
        %355 = vset.pattern.permute.xlu0 0
        %356 = vperm.xlu0 %355, %v338
        %v357 = vpop.permute.xlu0 %356
        %360 = vset.pattern.permute.xlu0 0
        %361 = vperm.xlu0 %360, %v339
        %v362 = vpop.permute.xlu0 %361
        %365 = vset.pattern.permute.xlu0 0
        %366 = vperm.xlu0 %365, %v340
        %v367 = vpop.permute.xlu0 %366
        %370 = vset.pattern.permute.xlu0 0
        %371 = vperm.xlu0 %370, %v341
        %v372 = vpop.permute.xlu0 %371
        %375 = vset.pattern.permute.xlu0 0
        %376 = vperm.xlu0 %375, %v342
        %v377 = vpop.permute.xlu0 %376
        %380 = vset.pattern.permute.xlu0 0
        %381 = vperm.xlu0 %380, %v343
        %v382 = vpop.permute.xlu0 %381
        %385 = vset.pattern.permute.xlu0 0
        %386 = vperm.xlu0 %385, %v344
        %v387 = vpop.permute.xlu0 %386
        %390 = vset.pattern.permute.xlu0 0
        %391 = vperm.xlu0 %390, %v345
        %v392 = vpop.permute.xlu0 %391
        %395 = vset.pattern.permute.xlu0 0
        %396 = vperm.xlu0 %395, %v346
        %v397 = vpop.permute.xlu0 %396
        %400 = vset.pattern.permute.xlu0 0
        %401 = vperm.xlu0 %400, %v347
        %v402 = vpop.permute.xlu0 %401
        %405 = vset.pattern.permute.xlu0 0
        %406 = vperm.xlu0 %405, %v348
        %v407 = vpop.permute.xlu0 %406
        %v421 = vunpack.c.l.b16 %v321
        %v422 = vunpack.c.l.b16 %v322
        %v423 = vunpack.c.l.b16 %v323
        %v424 = vunpack.c.l.b16 %v324
        %v425 = vunpack.c.l.b16 %v325
        %v426 = vunpack.c.l.b16 %v326
        %v427 = vunpack.c.l.b16 %v327
        %v428 = vunpack.c.l.b16 %v328
        %v429 = vunpack.c.l.b16 %v329
        %v430 = vunpack.c.l.b16 %v330
        %v431 = vunpack.c.l.b16 %v331
        %v432 = vunpack.c.l.b16 %v332
        %v433 = vpack.c.b16 %v422, %v421
        %v434 = vpack.c.b16 %v424, %v423
        %v435 = vpack.c.b16 %v426, %v425
        %v436 = vpack.c.b16 %v428, %v427
        %v437 = vpack.c.b16 %v430, %v429
        %v438 = vpack.c.b16 %v432, %v431
        %vm439 = vcmask 261120
        %v441 = vsel %vm439, %v433, 0
        %v444 = vsel %vm439, %v434, 0
        %v447 = vsel %vm439, %v435, 0
        %v450 = vsel %vm439, %v436, 0
        %v453 = vsel %vm439, %v437, 0
        %v456 = vsel %vm439, %v438, 0
        %458 = vmatpush.bf16.msra.mxu0 0
        %459 = vmatpush.bf16.msra.mxu0 0
        %460 = vmatpush.bf16.msra.mxu0 0
        %461 = vmatpush.bf16.msra.mxu0 0
        %462 = vmatpush.bf16.msra.mxu0 0
        %463 = vmatpush.bf16.msra.mxu0 0
        %464 = vmatpush.bf16.msra.mxu0 %v335
        %465 = vmatpush.bf16.msra.mxu0 %v333
        %466 = vmatmul.bf16.gmra.mxu0 %v441
        %v467 = vpop.f32.mrf.mxu0
        %v468 = vadd.f32 %v352, %v467
        %v469 = vpop.f32.mrf.mxu0
        %v470 = vadd.f32 %v357, %v469
        %471 = vmatmul.bf16.gmra.mxu0 %v444
        %v472 = vpop.f32.mrf.mxu0
        %v473 = vadd.f32 %v362, %v472
        %v474 = vpop.f32.mrf.mxu0
        %v475 = vadd.f32 %v367, %v474
        %476 = vmatmul.bf16.gmra.mxu0 %v447
        %v477 = vpop.f32.mrf.mxu0
        %v478 = vadd.f32 %v372, %v477
        %v479 = vpop.f32.mrf.mxu0
        %v480 = vadd.f32 %v377, %v479
        %481 = vmatmul.bf16.gmra.mxu0 %v450
        %v482 = vpop.f32.mrf.mxu0
        %v483 = vadd.f32 %v382, %v482
        %v484 = vpop.f32.mrf.mxu0
        %v485 = vadd.f32 %v387, %v484
        %486 = vmatmul.bf16.gmra.mxu0 %v453
        %v487 = vpop.f32.mrf.mxu0
        %v488 = vadd.f32 %v392, %v487
        %v489 = vpop.f32.mrf.mxu0
        %v490 = vadd.f32 %v397, %v489
        %491 = vmatmul.bf16.gmra.mxu0 %v456
        %v492 = vpop.f32.mrf.mxu0
        %v493 = vadd.f32 %v402, %v492
        %v494 = vpop.f32.mrf.mxu0
        %v495 = vadd.f32 %v407, %v494
        %496 = vdwg.mxu0
        %497 = vmatpush.bf16.msra.mxu0 0
        %498 = vmatpush.bf16.msra.mxu0 0
        %499 = vmatpush.bf16.msra.mxu0 0
        %500 = vmatpush.bf16.msra.mxu0 0
        %501 = vmatpush.bf16.msra.mxu0 0
        %502 = vmatpush.bf16.msra.mxu0 0
        %503 = vmatpush.bf16.msra.mxu0 %v336
        %504 = vmatpush.bf16.msra.mxu0 %v334
        %505 = vmatmul.bf16.gmra.mxu0 %v441
        %v506 = vpop.f32.mrf.mxu0
        %v507 = vadd.f32 %v352, %v506
        %v508 = vpop.f32.mrf.mxu0
        %v509 = vadd.f32 %v357, %v508
        %510 = vmatmul.bf16.gmra.mxu0 %v444
        %v511 = vpop.f32.mrf.mxu0
        %v512 = vadd.f32 %v362, %v511
        %v513 = vpop.f32.mrf.mxu0
        %v514 = vadd.f32 %v367, %v513
        %515 = vmatmul.bf16.gmra.mxu0 %v447
        %v516 = vpop.f32.mrf.mxu0
        %v517 = vadd.f32 %v372, %v516
        %v518 = vpop.f32.mrf.mxu0
        %v519 = vadd.f32 %v377, %v518
        %520 = vmatmul.bf16.gmra.mxu0 %v450
        %v521 = vpop.f32.mrf.mxu0
        %v522 = vadd.f32 %v382, %v521
        %v523 = vpop.f32.mrf.mxu0
        %v524 = vadd.f32 %v387, %v523
        %525 = vmatmul.bf16.gmra.mxu0 %v453
        %v526 = vpop.f32.mrf.mxu0
        %v527 = vadd.f32 %v392, %v526
        %v528 = vpop.f32.mrf.mxu0
        %v529 = vadd.f32 %v397, %v528
        %530 = vmatmul.bf16.gmra.mxu0 %v456
        %v531 = vpop.f32.mrf.mxu0
        %v532 = vadd.f32 %v402, %v531
        %v533 = vpop.f32.mrf.mxu0
        %v534 = vadd.f32 %v407, %v533
        %535 = vdwg.mxu0
        %536 = vst [vmem:[#allocation2] sm:$0xff] %v468
        %537 = vst [vmem:[#allocation2 + $0x8] sm:$0xff] %v507
        %538 = vst [vmem:[#allocation2 + $0x10] sm:$0xff] %v470
        %539 = vst [vmem:[#allocation2 + $0x18] sm:$0xff] %v509
        %540 = vst [vmem:[#allocation2 + $0x20] sm:$0xff] %v473
        %541 = vst [vmem:[#allocation2 + $0x28] sm:$0xff] %v512
        %542 = vst [vmem:[#allocation2 + $0x30] sm:$0xff] %v475
        %543 = vst [vmem:[#allocation2 + $0x38] sm:$0xff] %v514
        %544 = vst [vmem:[#allocation2 + $0x40] sm:$0xff] %v478
        %545 = vst [vmem:[#allocation2 + $0x48] sm:$0xff] %v517
        %546 = vst [vmem:[#allocation2 + $0x50] sm:$0xff] %v480
        %547 = vst [vmem:[#allocation2 + $0x58] sm:$0xff] %v519
        %548 = vst [vmem:[#allocation2 + $0x60] sm:$0xff] %v483
        %549 = vst [vmem:[#allocation2 + $0x68] sm:$0xff] %v522
        %550 = vst [vmem:[#allocation2 + $0x70] sm:$0xff] %v485
        %551 = vst [vmem:[#allocation2 + $0x78] sm:$0xff] %v524
        %552 = vst [vmem:[#allocation2 + $0x80] sm:$0xff] %v488
        %553 = vst [vmem:[#allocation2 + $0x88] sm:$0xff] %v527
        %554 = vst [vmem:[#allocation2 + $0x90] sm:$0xff] %v490
        %555 = vst [vmem:[#allocation2 + $0x98] sm:$0xff] %v529
        %556 = vst [vmem:[#allocation2 + $0xa0] sm:$0xff] %v493
        %557 = vst [vmem:[#allocation2 + $0xa8] sm:$0xff] %v532
        %558 = vst [vmem:[#allocation2 + $0xb0] sm:$0xff] %v495
        %559 = vst [vmem:[#allocation2 + $0xb8] sm:$0xff] %v534
        %v560 = vld [vmem:[#allocation2 + $0x40] sm:$0xff]
        %v561 = vld [vmem:[#allocation2 + $0x48] sm:$0xff]
        %v562 = vpack.c.bf16 %v560, %v560
        %v563 = vpack.c.bf16 %v561, %v561
        %v564 = vld [vmem:[#allocation2 + $0x80] sm:$0xff]
        %v565 = vld [vmem:[#allocation2 + $0x88] sm:$0xff]
        %v566 = vpack.c.bf16 %v564, %v564
        %v567 = vpack.c.bf16 %v565, %v565
        %v568 = vld [vmem:[#allocation2] sm:$0xff]
        %v569 = vpack.c.bf16 %v568, %v568
        %570 = vxpose.binary.xlu0.c.b16.start [1/16] %v563, %v562, 128
        %571 = vxpose.binary.xlu0.c.b16.cont [2/16] 0, 0, 128
        %572 = vxpose.binary.xlu0.c.b16.cont [3/16] 0, 0, 128
        %573 = vxpose.binary.xlu0.c.b16.cont [4/16] 0, 0, 128
        %574 = vxpose.binary.xlu0.c.b16.cont [5/16] 0, 0, 128
        %575 = vxpose.binary.xlu0.c.b16.cont [6/16] 0, 0, 128
        %576 = vxpose.binary.xlu0.c.b16.cont [7/16] 0, 0, 128
        %577 = vxpose.binary.xlu0.c.b16.end [8/16] 0, 0, 128
        %v578 = vpop.trf.xlu0
        %v579 = vpop.trf.xlu0
        %v580 = vpop.trf.xlu0
        %v581 = vpop.trf.xlu0
        %v582 = vpop.trf.xlu0
        %v583 = vpop.trf.xlu0
        %v584 = vpop.trf.xlu0
        %v585 = vpop.trf.xlu0
        %v586 = vpop.trf.xlu0
        %v587 = vpop.trf.xlu0
        %v588 = vpop.trf.xlu0
        %v589 = vpop.trf.xlu0
        %v590 = vpop.trf.xlu0
        %v591 = vpop.trf.xlu0
        %v592 = vpop.trf.xlu0
        %v593 = vpop.trf.xlu0
        %vm594 = vcmask 64512
        %v596 = vsel %vm594, %v578, 0
        %v599 = vsel %vm594, %v580, 0
        %v602 = vsel %vm594, %v582, 0
        %v605 = vsel %vm594, %v584, 0
        %v608 = vsel %vm594, %v586, 0
        %v611 = vsel %vm594, %v588, 0
        %v614 = vsel %vm594, %v590, 0
        %v617 = vsel %vm594, %v592, 0
        %v620 = vsel %vm594, %v579, 0
        %v623 = vsel %vm594, %v581, 0
        %v626 = vsel %vm594, %v583, 0
        %v629 = vsel %vm594, %v585, 0
        %v632 = vsel %vm594, %v587, 0
        %v635 = vsel %vm594, %v589, 0
        %v638 = vsel %vm594, %v591, 0
        %v641 = vsel %vm594, %v593, 0
        %vm643 = vcmask 1043456
        %v645 = vsel %vm643, %v569, 0
        %647 = vmatpush.bf16.msra.mxu0 0
        %648 = vmatpush.bf16.msra.mxu0 0
        %649 = vmatpush.bf16.msra.mxu0 0
        %650 = vmatpush.bf16.msra.mxu0 0
        %651 = vmatpush.bf16.msra.mxu0 0
        %652 = vmatpush.bf16.msra.mxu0 0
        %653 = vmatpush.bf16.msra.mxu0 0
        %654 = vmatpush.bf16.msra.mxu0 %v645
        %655 = vmatmul.bf16.gmra.mxu0 %v596
        %v656 = vpop.f32.mrf.mxu0
        %v657 = vadd.f32 0.0, %v656
        %v658 = vpop.f32.mrf.mxu0
        %v659 = vadd.f32 0.0, %v658
        %660 = vmatmul.bf16.gmra.mxu0 %v599
        %v661 = vpop.f32.mrf.mxu0
        %v662 = vadd.f32 0.0, %v661
        %v663 = vpop.f32.mrf.mxu0
        %v664 = vadd.f32 0.0, %v663
        %665 = vmatmul.bf16.gmra.mxu0 %v602
        %v666 = vpop.f32.mrf.mxu0
        %v667 = vadd.f32 0.0, %v666
        %v668 = vpop.f32.mrf.mxu0
        %v669 = vadd.f32 0.0, %v668
        %670 = vmatmul.bf16.gmra.mxu0 %v605
        %v671 = vpop.f32.mrf.mxu0
        %v672 = vadd.f32 0.0, %v671
        %v673 = vpop.f32.mrf.mxu0
        %v674 = vadd.f32 0.0, %v673
        %675 = vmatmul.bf16.gmra.mxu0 %v608
        %v676 = vpop.f32.mrf.mxu0
        %v677 = vadd.f32 0.0, %v676
        %v678 = vpop.f32.mrf.mxu0
        %v679 = vadd.f32 0.0, %v678
        %680 = vmatmul.bf16.gmra.mxu0 %v611
        %v681 = vpop.f32.mrf.mxu0
        %v682 = vadd.f32 0.0, %v681
        %v683 = vpop.f32.mrf.mxu0
        %v684 = vadd.f32 0.0, %v683
        %685 = vmatmul.bf16.gmra.mxu0 %v614
        %v686 = vpop.f32.mrf.mxu0
        %v687 = vadd.f32 0.0, %v686
        %v688 = vpop.f32.mrf.mxu0
        %v689 = vadd.f32 0.0, %v688
        %690 = vmatmul.bf16.gmra.mxu0 %v617
        %v691 = vpop.f32.mrf.mxu0
        %v692 = vadd.f32 0.0, %v691
        %v693 = vpop.f32.mrf.mxu0
        %v694 = vadd.f32 0.0, %v693
        %695 = vmatmul.bf16.gmra.mxu0 %v620
        %v696 = vpop.f32.mrf.mxu0
        %v697 = vadd.f32 0.0, %v696
        %v698 = vpop.f32.mrf.mxu0
        %v699 = vadd.f32 0.0, %v698
        %700 = vmatmul.bf16.gmra.mxu0 %v623
        %v701 = vpop.f32.mrf.mxu0
        %v702 = vadd.f32 0.0, %v701
        %v703 = vpop.f32.mrf.mxu0
        %v704 = vadd.f32 0.0, %v703
        %705 = vmatmul.bf16.gmra.mxu0 %v626
        %v706 = vpop.f32.mrf.mxu0
        %v707 = vadd.f32 0.0, %v706
        %v708 = vpop.f32.mrf.mxu0
        %v709 = vadd.f32 0.0, %v708
        %710 = vmatmul.bf16.gmra.mxu0 %v629
        %v711 = vpop.f32.mrf.mxu0
        %v712 = vadd.f32 0.0, %v711
        %v713 = vpop.f32.mrf.mxu0
        %v714 = vadd.f32 0.0, %v713
        %715 = vmatmul.bf16.gmra.mxu0 %v632
        %v716 = vpop.f32.mrf.mxu0
        %v717 = vadd.f32 0.0, %v716
        %v718 = vpop.f32.mrf.mxu0
        %v719 = vadd.f32 0.0, %v718
        %720 = vmatmul.bf16.gmra.mxu0 %v635
        %v721 = vpop.f32.mrf.mxu0
        %v722 = vadd.f32 0.0, %v721
        %v723 = vpop.f32.mrf.mxu0
        %v724 = vadd.f32 0.0, %v723
        %725 = vmatmul.bf16.gmra.mxu0 %v638
        %v726 = vpop.f32.mrf.mxu0
        %v727 = vadd.f32 0.0, %v726
        %v728 = vpop.f32.mrf.mxu0
        %v729 = vadd.f32 0.0, %v728
        %730 = vmatmul.bf16.gmra.mxu0 %v641
        %v731 = vpop.f32.mrf.mxu0
        %v732 = vadd.f32 0.0, %v731
        %v733 = vpop.f32.mrf.mxu0
        %v734 = vadd.f32 0.0, %v733
        %735 = vdwg.mxu0
        %v736 = vmax.f32 %v657, %v667
        %v737 = vmax.f32 %v659, %v669
        %v738 = vmax.f32 %v662, %v672
        %v739 = vmax.f32 %v664, %v674
        %v740 = vmax.f32 %v736, %v677
        %v741 = vmax.f32 %v737, %v679
        %v742 = vmax.f32 %v738, %v682
        %v743 = vmax.f32 %v739, %v684
        %v744 = vmax.f32 %v740, %v687
        %v745 = vmax.f32 %v741, %v689
        %v746 = vmax.f32 %v742, %v692
        %v747 = vmax.f32 %v743, %v694
        %v748 = vmax.f32 %v744, %v697
        %v749 = vmax.f32 %v745, %v699
        %v750 = vmax.f32 %v746, %v702
        %v751 = vmax.f32 %v747, %v704
        %v752 = vmax.f32 %v748, %v707
        %v753 = vmax.f32 %v749, %v709
        %v754 = vmax.f32 %v750, %v712
        %v755 = vmax.f32 %v751, %v714
        %v756 = vmax.f32 %v752, %v717
        %v757 = vmax.f32 %v753, %v719
        %v758 = vmax.f32 %v754, %v722
        %v759 = vmax.f32 %v755, %v724
        %v760 = vmax.f32 %v756, %v727
        %v761 = vmax.f32 %v757, %v729
        %v762 = vmax.f32 %v758, %v732
        %v763 = vmax.f32 %v759, %v734
        %v764 = vmax.f32 %v760, %v761
        %v765 = vmax.f32 %v762, %v763
        %v766 = vmax.f32 %v764, %v765
        %v767 = vrot.slane %v766, 4
        %v768 = vmax.f32 %v766, %v767
        %v769 = vrot.slane %v768, 2
        %v770 = vmax.f32 %v768, %v769
        %v771 = vrot.slane %v770, 1
        %v772 = vmax.f32 %v770, %v771
        %v773 = vsub.f32 %v657, %v772
        %v774 = vsub.f32 %v659, %v772
        %v775 = vsub.f32 %v662, %v772
        %v776 = vsub.f32 %v664, %v772
        %v777 = vsub.f32 %v667, %v772
        %v778 = vsub.f32 %v669, %v772
        %v779 = vsub.f32 %v672, %v772
        %v780 = vsub.f32 %v674, %v772
        %v781 = vsub.f32 %v677, %v772
        %v782 = vsub.f32 %v679, %v772
        %v783 = vsub.f32 %v682, %v772
        %v784 = vsub.f32 %v684, %v772
        %v785 = vsub.f32 %v687, %v772
        %v786 = vsub.f32 %v689, %v772
        %v787 = vsub.f32 %v692, %v772
        %v788 = vsub.f32 %v694, %v772
        %v789 = vsub.f32 %v697, %v772
        %v790 = vsub.f32 %v699, %v772
        %v791 = vsub.f32 %v702, %v772
        %v792 = vsub.f32 %v704, %v772
        %v793 = vsub.f32 %v707, %v772
        %v794 = vsub.f32 %v709, %v772
        %v795 = vsub.f32 %v712, %v772
        %v796 = vsub.f32 %v714, %v772
        %v797 = vsub.f32 %v717, %v772
        %v798 = vsub.f32 %v719, %v772
        %v799 = vsub.f32 %v722, %v772
        %v800 = vsub.f32 %v724, %v772
        %v801 = vsub.f32 %v727, %v772
        %v802 = vsub.f32 %v729, %v772
        %v803 = vsub.f32 %v732, %v772
        %v804 = vsub.f32 %v734, %v772
        %v805 = vmul.f32 %v773, 1.442695
        %v806 = vpow.pop %v805
        %v807 = vmul.f32 %v774, 1.442695
        %v808 = vpow.pop %v807
        %v809 = vmul.f32 %v775, 1.442695
        %v810 = vpow.pop %v809
        %v811 = vmul.f32 %v776, 1.442695
        %v812 = vpow.pop %v811
        %v813 = vmul.f32 %v777, 1.442695
        %v814 = vpow.pop %v813
        %v815 = vmul.f32 %v778, 1.442695
        %v816 = vpow.pop %v815
        %v817 = vmul.f32 %v779, 1.442695
        %v818 = vpow.pop %v817
        %v819 = vmul.f32 %v780, 1.442695
        %v820 = vpow.pop %v819
        %v821 = vmul.f32 %v781, 1.442695
        %v822 = vpow.pop %v821
        %v823 = vmul.f32 %v782, 1.442695
        %v824 = vpow.pop %v823
        %v825 = vmul.f32 %v783, 1.442695
        %v826 = vpow.pop %v825
        %v827 = vmul.f32 %v784, 1.442695
        %v828 = vpow.pop %v827
        %v829 = vmul.f32 %v785, 1.442695
        %v830 = vpow.pop %v829
        %v831 = vmul.f32 %v786, 1.442695
        %v832 = vpow.pop %v831
        %v833 = vmul.f32 %v787, 1.442695
        %v834 = vpow.pop %v833
        %v835 = vmul.f32 %v788, 1.442695
        %v836 = vpow.pop %v835
        %v837 = vmul.f32 %v789, 1.442695
        %v838 = vpow.pop %v837
        %v839 = vmul.f32 %v790, 1.442695
        %v840 = vpow.pop %v839
        %v841 = vmul.f32 %v791, 1.442695
        %v842 = vpow.pop %v841
        %v843 = vmul.f32 %v792, 1.442695
        %v844 = vpow.pop %v843
        %v845 = vmul.f32 %v793, 1.442695
        %v846 = vpow.pop %v845
        %v847 = vmul.f32 %v794, 1.442695
        %v848 = vpow.pop %v847
        %v849 = vmul.f32 %v795, 1.442695
        %v850 = vpow.pop %v849
        %v851 = vmul.f32 %v796, 1.442695
        %v852 = vpow.pop %v851
        %v853 = vmul.f32 %v797, 1.442695
        %v854 = vpow.pop %v853
        %v855 = vmul.f32 %v798, 1.442695
        %v856 = vpow.pop %v855
        %v857 = vmul.f32 %v799, 1.442695
        %v858 = vpow.pop %v857
        %v859 = vmul.f32 %v800, 1.442695
        %v860 = vpow.pop %v859
        %v861 = vmul.f32 %v801, 1.442695
        %v862 = vpow.pop %v861
        %v863 = vmul.f32 %v802, 1.442695
        %v864 = vpow.pop %v863
        %v865 = vmul.f32 %v803, 1.442695
        %v866 = vpow.pop %v865
        %v867 = vmul.f32 %v804, 1.442695
        %v868 = vpow.pop %v867
        %v869 = vpack.c.bf16 %v808, %v806
        %v870 = vpack.c.bf16 %v812, %v810
        %v871 = vpack.c.bf16 %v816, %v814
        %v872 = vpack.c.bf16 %v820, %v818
        %v873 = vpack.c.bf16 %v824, %v822
        %v874 = vpack.c.bf16 %v828, %v826
        %v875 = vpack.c.bf16 %v832, %v830
        %v876 = vpack.c.bf16 %v836, %v834
        %v877 = vpack.c.bf16 %v840, %v838
        %v878 = vpack.c.bf16 %v844, %v842
        %v879 = vpack.c.bf16 %v848, %v846
        %v880 = vpack.c.bf16 %v852, %v850
        %v881 = vpack.c.bf16 %v856, %v854
        %v882 = vpack.c.bf16 %v860, %v858
        %v883 = vpack.c.bf16 %v864, %v862
        %v884 = vpack.c.bf16 %v868, %v866
        %v885 = vunpack.c.l.bf16 %v869
        %v886 = vunpack.c.h.bf16 %v869
        %v887 = vunpack.c.l.bf16 %v870
        %v888 = vunpack.c.h.bf16 %v870
        %v889 = vunpack.c.l.bf16 %v871
        %v890 = vunpack.c.h.bf16 %v871
        %v891 = vunpack.c.l.bf16 %v872
        %v892 = vunpack.c.h.bf16 %v872
        %v893 = vunpack.c.l.bf16 %v873
        %v894 = vunpack.c.h.bf16 %v873
        %v895 = vunpack.c.l.bf16 %v874
        %v896 = vunpack.c.h.bf16 %v874
        %v897 = vunpack.c.l.bf16 %v875
        %v898 = vunpack.c.h.bf16 %v875
        %v899 = vunpack.c.l.bf16 %v876
        %v900 = vunpack.c.h.bf16 %v876
        %v901 = vunpack.c.l.bf16 %v877
        %v902 = vunpack.c.h.bf16 %v877
        %v903 = vunpack.c.l.bf16 %v878
        %v904 = vunpack.c.h.bf16 %v878
        %v905 = vunpack.c.l.bf16 %v879
        %v906 = vunpack.c.h.bf16 %v879
        %v907 = vunpack.c.l.bf16 %v880
        %v908 = vunpack.c.h.bf16 %v880
        %v909 = vunpack.c.l.bf16 %v881
        %v910 = vunpack.c.h.bf16 %v881
        %v911 = vunpack.c.l.bf16 %v882
        %v912 = vunpack.c.h.bf16 %v882
        %v913 = vunpack.c.l.bf16 %v883
        %v914 = vunpack.c.h.bf16 %v883
        %v915 = vunpack.c.l.bf16 %v884
        %v916 = vunpack.c.h.bf16 %v884
        %v917 = vadd.f32 %v885, %v886
        %v918 = vadd.f32 %v917, %v887
        %v919 = vadd.f32 %v918, %v888
        %v920 = vadd.f32 %v919, %v889
        %v921 = vadd.f32 %v920, %v890
        %v922 = vadd.f32 %v921, %v891
        %v923 = vadd.f32 %v922, %v892
        %v924 = vadd.f32 %v923, %v893
        %v925 = vadd.f32 %v924, %v894
        %v926 = vadd.f32 %v925, %v895
        %v927 = vadd.f32 %v926, %v896
        %v928 = vadd.f32 %v927, %v897
        %v929 = vadd.f32 %v928, %v898
        %v930 = vadd.f32 %v929, %v899
        %v931 = vadd.f32 %v930, %v900
        %v932 = vadd.f32 %v931, %v901
        %v933 = vadd.f32 %v932, %v902
        %v934 = vadd.f32 %v933, %v903
        %v935 = vadd.f32 %v934, %v904
        %v936 = vadd.f32 %v935, %v905
        %v937 = vadd.f32 %v936, %v906
        %v938 = vadd.f32 %v937, %v907
        %v939 = vadd.f32 %v938, %v908
        %v940 = vadd.f32 %v939, %v909
        %v941 = vadd.f32 %v940, %v910
        %v942 = vadd.f32 %v941, %v911
        %v943 = vadd.f32 %v942, %v912
        %v944 = vadd.f32 %v943, %v913
        %v945 = vadd.f32 %v944, %v914
        %v946 = vadd.f32 %v945, %v915
        %v947 = vadd.f32 %v946, %v916
        %v948 = vrot.slane %v947, 4
        %v949 = vadd.f32 %v947, %v948
        %v950 = vrot.slane %v949, 2
        %v951 = vadd.f32 %v949, %v950
        %v952 = vrot.slane %v951, 1
        %v953 = vadd.f32 %v951, %v952
        %954 = vmatpush.bf16.msra.mxu0 %v876
        %955 = vmatpush.bf16.msra.mxu0 %v875
        %956 = vmatpush.bf16.msra.mxu0 %v874
        %957 = vmatpush.bf16.msra.mxu0 %v873
        %958 = vmatpush.bf16.msra.mxu0 %v872
        %959 = vmatpush.bf16.msra.mxu0 %v871
        %960 = vmatpush.bf16.msra.mxu0 %v870
        %961 = vmatpush.bf16.msra.mxu0 %v869
        %962 = vmatmul.bf16.gmra.mxu0 %v566
        %v963 = vpop.f32.mrf.mxu0
        %v964 = vadd.f32 0.0, %v963
        %v965 = vpop.f32.mrf.mxu0
        %966 = vdwg.mxu0
        %967 = vmatpush.bf16.msra.mxu0 %v884
        %968 = vmatpush.bf16.msra.mxu0 %v883
        %969 = vmatpush.bf16.msra.mxu0 %v882
        %970 = vmatpush.bf16.msra.mxu0 %v881
        %971 = vmatpush.bf16.msra.mxu0 %v880
        %972 = vmatpush.bf16.msra.mxu0 %v879
        %973 = vmatpush.bf16.msra.mxu0 %v878
        %974 = vmatpush.bf16.msra.mxu0 %v877
        %975 = vmatmul.bf16.gmra.mxu0 %v567
        %v976 = vpop.f32.mrf.mxu0
        %v977 = vadd.f32 %v964, %v976
        %v978 = vpop.f32.mrf.mxu0
        %979 = vdwg.mxu0
        %v980 = vrcp.pop %v953
        %v981 = vmul.f32 %v977, %v980
        %982 = vst [vmem:[#allocation3] sm:$0xff] %v981
        %v983 = vld [vmem:[#allocation2 + $0x8] sm:$0xff]
        %v984 = vpack.c.bf16 %v983, %v983
        %v986 = vsel %vm643, %v984, 0
        %988 = vmatpush.bf16.msra.mxu0 0
        %989 = vmatpush.bf16.msra.mxu0 0
        %990 = vmatpush.bf16.msra.mxu0 0
        %991 = vmatpush.bf16.msra.mxu0 0
        %992 = vmatpush.bf16.msra.mxu0 0
        %993 = vmatpush.bf16.msra.mxu0 0
        %994 = vmatpush.bf16.msra.mxu0 0
        %995 = vmatpush.bf16.msra.mxu0 %v986
        %996 = vmatmul.bf16.gmra.mxu0 %v596
        %v997 = vpop.f32.mrf.mxu0
        %v998 = vadd.f32 0.0, %v997
        %v999 = vpop.f32.mrf.mxu0
        %v1000 = vadd.f32 0.0, %v999
        %1001 = vmatmul.bf16.gmra.mxu0 %v599
        %v1002 = vpop.f32.mrf.mxu0
        %v1003 = vadd.f32 0.0, %v1002
        %v1004 = vpop.f32.mrf.mxu0
        %v1005 = vadd.f32 0.0, %v1004
        %1006 = vmatmul.bf16.gmra.mxu0 %v602
        %v1007 = vpop.f32.mrf.mxu0
        %v1008 = vadd.f32 0.0, %v1007
        %v1009 = vpop.f32.mrf.mxu0
        %v1010 = vadd.f32 0.0, %v1009
        %1011 = vmatmul.bf16.gmra.mxu0 %v605
        %v1012 = vpop.f32.mrf.mxu0
        %v1013 = vadd.f32 0.0, %v1012
        %v1014 = vpop.f32.mrf.mxu0
        %v1015 = vadd.f32 0.0, %v1014
        %1016 = vmatmul.bf16.gmra.mxu0 %v608
        %v1017 = vpop.f32.mrf.mxu0
        %v1018 = vadd.f32 0.0, %v1017
        %v1019 = vpop.f32.mrf.mxu0
        %v1020 = vadd.f32 0.0, %v1019
        %1021 = vmatmul.bf16.gmra.mxu0 %v611
        %v1022 = vpop.f32.mrf.mxu0
        %v1023 = vadd.f32 0.0, %v1022
        %v1024 = vpop.f32.mrf.mxu0
        %v1025 = vadd.f32 0.0, %v1024
        %1026 = vmatmul.bf16.gmra.mxu0 %v614
        %v1027 = vpop.f32.mrf.mxu0
        %v1028 = vadd.f32 0.0, %v1027
        %v1029 = vpop.f32.mrf.mxu0
        %v1030 = vadd.f32 0.0, %v1029
        %1031 = vmatmul.bf16.gmra.mxu0 %v617
        %v1032 = vpop.f32.mrf.mxu0
        %v1033 = vadd.f32 0.0, %v1032
        %v1034 = vpop.f32.mrf.mxu0
        %v1035 = vadd.f32 0.0, %v1034
        %1036 = vmatmul.bf16.gmra.mxu0 %v620
        %v1037 = vpop.f32.mrf.mxu0
        %v1038 = vadd.f32 0.0, %v1037
        %v1039 = vpop.f32.mrf.mxu0
        %v1040 = vadd.f32 0.0, %v1039
        %1041 = vmatmul.bf16.gmra.mxu0 %v623
        %v1042 = vpop.f32.mrf.mxu0
        %v1043 = vadd.f32 0.0, %v1042
        %v1044 = vpop.f32.mrf.mxu0
        %v1045 = vadd.f32 0.0, %v1044
        %1046 = vmatmul.bf16.gmra.mxu0 %v626
        %v1047 = vpop.f32.mrf.mxu0
        %v1048 = vadd.f32 0.0, %v1047
        %v1049 = vpop.f32.mrf.mxu0
        %v1050 = vadd.f32 0.0, %v1049
        %1051 = vmatmul.bf16.gmra.mxu0 %v629
        %v1052 = vpop.f32.mrf.mxu0
        %v1053 = vadd.f32 0.0, %v1052
        %v1054 = vpop.f32.mrf.mxu0
        %v1055 = vadd.f32 0.0, %v1054
        %1056 = vmatmul.bf16.gmra.mxu0 %v632
        %v1057 = vpop.f32.mrf.mxu0
        %v1058 = vadd.f32 0.0, %v1057
        %v1059 = vpop.f32.mrf.mxu0
        %v1060 = vadd.f32 0.0, %v1059
        %1061 = vmatmul.bf16.gmra.mxu0 %v635
        %v1062 = vpop.f32.mrf.mxu0
        %v1063 = vadd.f32 0.0, %v1062
        %v1064 = vpop.f32.mrf.mxu0
        %v1065 = vadd.f32 0.0, %v1064
        %1066 = vmatmul.bf16.gmra.mxu0 %v638
        %v1067 = vpop.f32.mrf.mxu0
        %v1068 = vadd.f32 0.0, %v1067
        %v1069 = vpop.f32.mrf.mxu0
        %v1070 = vadd.f32 0.0, %v1069
        %1071 = vmatmul.bf16.gmra.mxu0 %v641
        %v1072 = vpop.f32.mrf.mxu0
        %v1073 = vadd.f32 0.0, %v1072
        %v1074 = vpop.f32.mrf.mxu0
        %v1075 = vadd.f32 0.0, %v1074
        %1076 = vdwg.mxu0
        %v1077 = vmax.f32 %v998, %v1008
        %v1078 = vmax.f32 %v1000, %v1010
        %v1079 = vmax.f32 %v1003, %v1013
        %v1080 = vmax.f32 %v1005, %v1015
        %v1081 = vmax.f32 %v1077, %v1018
        %v1082 = vmax.f32 %v1078, %v1020
        %v1083 = vmax.f32 %v1079, %v1023
        %v1084 = vmax.f32 %v1080, %v1025
        %v1085 = vmax.f32 %v1081, %v1028
        %v1086 = vmax.f32 %v1082, %v1030
        %v1087 = vmax.f32 %v1083, %v1033
        %v1088 = vmax.f32 %v1084, %v1035
        %v1089 = vmax.f32 %v1085, %v1038
        %v1090 = vmax.f32 %v1086, %v1040
        %v1091 = vmax.f32 %v1087, %v1043
        %v1092 = vmax.f32 %v1088, %v1045
        %v1093 = vmax.f32 %v1089, %v1048
        %v1094 = vmax.f32 %v1090, %v1050
        %v1095 = vmax.f32 %v1091, %v1053
        %v1096 = vmax.f32 %v1092, %v1055
        %v1097 = vmax.f32 %v1093, %v1058
        %v1098 = vmax.f32 %v1094, %v1060
        %v1099 = vmax.f32 %v1095, %v1063
        %v1100 = vmax.f32 %v1096, %v1065
        %v1101 = vmax.f32 %v1097, %v1068
        %v1102 = vmax.f32 %v1098, %v1070
        %v1103 = vmax.f32 %v1099, %v1073
        %v1104 = vmax.f32 %v1100, %v1075
        %v1105 = vmax.f32 %v1101, %v1102
        %v1106 = vmax.f32 %v1103, %v1104
        %v1107 = vmax.f32 %v1105, %v1106
        %v1108 = vrot.slane %v1107, 4
        %v1109 = vmax.f32 %v1107, %v1108
        %v1110 = vrot.slane %v1109, 2
        %v1111 = vmax.f32 %v1109, %v1110
        %v1112 = vrot.slane %v1111, 1
        %v1113 = vmax.f32 %v1111, %v1112
        %v1114 = vsub.f32 %v998, %v1113
        %v1115 = vsub.f32 %v1000, %v1113
        %v1116 = vsub.f32 %v1003, %v1113
        %v1117 = vsub.f32 %v1005, %v1113
        %v1118 = vsub.f32 %v1008, %v1113
        %v1119 = vsub.f32 %v1010, %v1113
        %v1120 = vsub.f32 %v1013, %v1113
        %v1121 = vsub.f32 %v1015, %v1113
        %v1122 = vsub.f32 %v1018, %v1113
        %v1123 = vsub.f32 %v1020, %v1113
        %v1124 = vsub.f32 %v1023, %v1113
        %v1125 = vsub.f32 %v1025, %v1113
        %v1126 = vsub.f32 %v1028, %v1113
        %v1127 = vsub.f32 %v1030, %v1113
        %v1128 = vsub.f32 %v1033, %v1113
        %v1129 = vsub.f32 %v1035, %v1113
        %v1130 = vsub.f32 %v1038, %v1113
        %v1131 = vsub.f32 %v1040, %v1113
        %v1132 = vsub.f32 %v1043, %v1113
        %v1133 = vsub.f32 %v1045, %v1113
        %v1134 = vsub.f32 %v1048, %v1113
        %v1135 = vsub.f32 %v1050, %v1113
        %v1136 = vsub.f32 %v1053, %v1113
        %v1137 = vsub.f32 %v1055, %v1113
        %v1138 = vsub.f32 %v1058, %v1113
        %v1139 = vsub.f32 %v1060, %v1113
        %v1140 = vsub.f32 %v1063, %v1113
        %v1141 = vsub.f32 %v1065, %v1113
        %v1142 = vsub.f32 %v1068, %v1113
        %v1143 = vsub.f32 %v1070, %v1113
        %v1144 = vsub.f32 %v1073, %v1113
        %v1145 = vsub.f32 %v1075, %v1113
        %v1146 = vmul.f32 %v1114, 1.442695
        %v1147 = vpow.pop %v1146
        %v1148 = vmul.f32 %v1115, 1.442695
        %v1149 = vpow.pop %v1148
        %v1150 = vmul.f32 %v1116, 1.442695
        %v1151 = vpow.pop %v1150
        %v1152 = vmul.f32 %v1117, 1.442695
        %v1153 = vpow.pop %v1152
        %v1154 = vmul.f32 %v1118, 1.442695
        %v1155 = vpow.pop %v1154
        %v1156 = vmul.f32 %v1119, 1.442695
        %v1157 = vpow.pop %v1156
        %v1158 = vmul.f32 %v1120, 1.442695
        %v1159 = vpow.pop %v1158
        %v1160 = vmul.f32 %v1121, 1.442695
        %v1161 = vpow.pop %v1160
        %v1162 = vmul.f32 %v1122, 1.442695
        %v1163 = vpow.pop %v1162
        %v1164 = vmul.f32 %v1123, 1.442695
        %v1165 = vpow.pop %v1164
        %v1166 = vmul.f32 %v1124, 1.442695
        %v1167 = vpow.pop %v1166
        %v1168 = vmul.f32 %v1125, 1.442695
        %v1169 = vpow.pop %v1168
        %v1170 = vmul.f32 %v1126, 1.442695
        %v1171 = vpow.pop %v1170
        %v1172 = vmul.f32 %v1127, 1.442695
        %v1173 = vpow.pop %v1172
        %v1174 = vmul.f32 %v1128, 1.442695
        %v1175 = vpow.pop %v1174
        %v1176 = vmul.f32 %v1129, 1.442695
        %v1177 = vpow.pop %v1176
        %v1178 = vmul.f32 %v1130, 1.442695
        %v1179 = vpow.pop %v1178
        %v1180 = vmul.f32 %v1131, 1.442695
        %v1181 = vpow.pop %v1180
        %v1182 = vmul.f32 %v1132, 1.442695
        %v1183 = vpow.pop %v1182
        %v1184 = vmul.f32 %v1133, 1.442695
        %v1185 = vpow.pop %v1184
        %v1186 = vmul.f32 %v1134, 1.442695
        %v1187 = vpow.pop %v1186
        %v1188 = vmul.f32 %v1135, 1.442695
        %v1189 = vpow.pop %v1188
        %v1190 = vmul.f32 %v1136, 1.442695
        %v1191 = vpow.pop %v1190
        %v1192 = vmul.f32 %v1137, 1.442695
        %v1193 = vpow.pop %v1192
        %v1194 = vmul.f32 %v1138, 1.442695
        %v1195 = vpow.pop %v1194
        %v1196 = vmul.f32 %v1139, 1.442695
        %v1197 = vpow.pop %v1196
        %v1198 = vmul.f32 %v1140, 1.442695
        %v1199 = vpow.pop %v1198
        %v1200 = vmul.f32 %v1141, 1.442695
        %v1201 = vpow.pop %v1200
        %v1202 = vmul.f32 %v1142, 1.442695
        %v1203 = vpow.pop %v1202
        %v1204 = vmul.f32 %v1143, 1.442695
        %v1205 = vpow.pop %v1204
        %v1206 = vmul.f32 %v1144, 1.442695
        %v1207 = vpow.pop %v1206
        %v1208 = vmul.f32 %v1145, 1.442695
        %v1209 = vpow.pop %v1208
        %v1210 = vpack.c.bf16 %v1149, %v1147
        %v1211 = vpack.c.bf16 %v1153, %v1151
        %v1212 = vpack.c.bf16 %v1157, %v1155
        %v1213 = vpack.c.bf16 %v1161, %v1159
        %v1214 = vpack.c.bf16 %v1165, %v1163
        %v1215 = vpack.c.bf16 %v1169, %v1167
        %v1216 = vpack.c.bf16 %v1173, %v1171
        %v1217 = vpack.c.bf16 %v1177, %v1175
        %v1218 = vpack.c.bf16 %v1181, %v1179
        %v1219 = vpack.c.bf16 %v1185, %v1183
        %v1220 = vpack.c.bf16 %v1189, %v1187
        %v1221 = vpack.c.bf16 %v1193, %v1191
        %v1222 = vpack.c.bf16 %v1197, %v1195
        %v1223 = vpack.c.bf16 %v1201, %v1199
        %v1224 = vpack.c.bf16 %v1205, %v1203
        %v1225 = vpack.c.bf16 %v1209, %v1207
        %v1226 = vunpack.c.l.bf16 %v1210
        %v1227 = vunpack.c.h.bf16 %v1210
        %v1228 = vunpack.c.l.bf16 %v1211
        %v1229 = vunpack.c.h.bf16 %v1211
        %v1230 = vunpack.c.l.bf16 %v1212
        %v1231 = vunpack.c.h.bf16 %v1212
        %v1232 = vunpack.c.l.bf16 %v1213
        %v1233 = vunpack.c.h.bf16 %v1213
        %v1234 = vunpack.c.l.bf16 %v1214
        %v1235 = vunpack.c.h.bf16 %v1214
        %v1236 = vunpack.c.l.bf16 %v1215
        %v1237 = vunpack.c.h.bf16 %v1215
        %v1238 = vunpack.c.l.bf16 %v1216
        %v1239 = vunpack.c.h.bf16 %v1216
        %v1240 = vunpack.c.l.bf16 %v1217
        %v1241 = vunpack.c.h.bf16 %v1217
        %v1242 = vunpack.c.l.bf16 %v1218
        %v1243 = vunpack.c.h.bf16 %v1218
        %v1244 = vunpack.c.l.bf16 %v1219
        %v1245 = vunpack.c.h.bf16 %v1219
        %v1246 = vunpack.c.l.bf16 %v1220
        %v1247 = vunpack.c.h.bf16 %v1220
        %v1248 = vunpack.c.l.bf16 %v1221
        %v1249 = vunpack.c.h.bf16 %v1221
        %v1250 = vunpack.c.l.bf16 %v1222
        %v1251 = vunpack.c.h.bf16 %v1222
        %v1252 = vunpack.c.l.bf16 %v1223
        %v1253 = vunpack.c.h.bf16 %v1223
        %v1254 = vunpack.c.l.bf16 %v1224
        %v1255 = vunpack.c.h.bf16 %v1224
        %v1256 = vunpack.c.l.bf16 %v1225
        %v1257 = vunpack.c.h.bf16 %v1225
        %v1258 = vadd.f32 %v1226, %v1227
        %v1259 = vadd.f32 %v1258, %v1228
        %v1260 = vadd.f32 %v1259, %v1229
        %v1261 = vadd.f32 %v1260, %v1230
        %v1262 = vadd.f32 %v1261, %v1231
        %v1263 = vadd.f32 %v1262, %v1232
        %v1264 = vadd.f32 %v1263, %v1233
        %v1265 = vadd.f32 %v1264, %v1234
        %v1266 = vadd.f32 %v1265, %v1235
        %v1267 = vadd.f32 %v1266, %v1236
        %v1268 = vadd.f32 %v1267, %v1237
        %v1269 = vadd.f32 %v1268, %v1238
        %v1270 = vadd.f32 %v1269, %v1239
        %v1271 = vadd.f32 %v1270, %v1240
        %v1272 = vadd.f32 %v1271, %v1241
        %v1273 = vadd.f32 %v1272, %v1242
        %v1274 = vadd.f32 %v1273, %v1243
        %v1275 = vadd.f32 %v1274, %v1244
        %v1276 = vadd.f32 %v1275, %v1245
        %v1277 = vadd.f32 %v1276, %v1246
        %v1278 = vadd.f32 %v1277, %v1247
        %v1279 = vadd.f32 %v1278, %v1248
        %v1280 = vadd.f32 %v1279, %v1249
        %v1281 = vadd.f32 %v1280, %v1250
        %v1282 = vadd.f32 %v1281, %v1251
        %v1283 = vadd.f32 %v1282, %v1252
        %v1284 = vadd.f32 %v1283, %v1253
        %v1285 = vadd.f32 %v1284, %v1254
        %v1286 = vadd.f32 %v1285, %v1255
        %v1287 = vadd.f32 %v1286, %v1256
        %v1288 = vadd.f32 %v1287, %v1257
        %v1289 = vrot.slane %v1288, 4
        %v1290 = vadd.f32 %v1288, %v1289
        %v1291 = vrot.slane %v1290, 2
        %v1292 = vadd.f32 %v1290, %v1291
        %v1293 = vrot.slane %v1292, 1
        %v1294 = vadd.f32 %v1292, %v1293
        %1295 = vmatpush.bf16.msra.mxu0 %v1217
        %1296 = vmatpush.bf16.msra.mxu0 %v1216
        %1297 = vmatpush.bf16.msra.mxu0 %v1215
        %1298 = vmatpush.bf16.msra.mxu0 %v1214
        %1299 = vmatpush.bf16.msra.mxu0 %v1213
        %1300 = vmatpush.bf16.msra.mxu0 %v1212
        %1301 = vmatpush.bf16.msra.mxu0 %v1211
        %1302 = vmatpush.bf16.msra.mxu0 %v1210
        %1303 = vmatmul.bf16.gmra.mxu0 %v566
        %v1304 = vpop.f32.mrf.mxu0
        %v1305 = vadd.f32 0.0, %v1304
        %v1306 = vpop.f32.mrf.mxu0
        %1307 = vdwg.mxu0
        %1308 = vmatpush.bf16.msra.mxu0 %v1225
        %1309 = vmatpush.bf16.msra.mxu0 %v1224
        %1310 = vmatpush.bf16.msra.mxu0 %v1223
        %1311 = vmatpush.bf16.msra.mxu0 %v1222
        %1312 = vmatpush.bf16.msra.mxu0 %v1221
        %1313 = vmatpush.bf16.msra.mxu0 %v1220
        %1314 = vmatpush.bf16.msra.mxu0 %v1219
        %1315 = vmatpush.bf16.msra.mxu0 %v1218
        %1316 = vmatmul.bf16.gmra.mxu0 %v567
        %v1317 = vpop.f32.mrf.mxu0
        %v1318 = vadd.f32 %v1305, %v1317
        %v1319 = vpop.f32.mrf.mxu0
        %1320 = vdwg.mxu0
        %v1321 = vrcp.pop %v1294
        %v1322 = vmul.f32 %v1318, %v1321
        %1323 = vst [vmem:[#allocation3 + $0x8] sm:$0xff] %v1322
        %v1324 = vld [vmem:[#allocation2 + $0x50] sm:$0xff]
        %v1325 = vld [vmem:[#allocation2 + $0x58] sm:$0xff]
        %v1326 = vpack.c.bf16 %v1324, %v1324
        %v1327 = vpack.c.bf16 %v1325, %v1325
        %v1328 = vld [vmem:[#allocation2 + $0x90] sm:$0xff]
        %v1329 = vld [vmem:[#allocation2 + $0x98] sm:$0xff]
        %v1330 = vpack.c.bf16 %v1328, %v1328
        %v1331 = vpack.c.bf16 %v1329, %v1329
        %v1332 = vld [vmem:[#allocation2 + $0x10] sm:$0xff]
        %v1333 = vpack.c.bf16 %v1332, %v1332
        %1334 = vxpose.binary.xlu0.c.b16.start [1/16] %v1327, %v1326, 128
        %1335 = vxpose.binary.xlu0.c.b16.cont [2/16] 0, 0, 128
        %1336 = vxpose.binary.xlu0.c.b16.cont [3/16] 0, 0, 128
        %1337 = vxpose.binary.xlu0.c.b16.cont [4/16] 0, 0, 128
        %1338 = vxpose.binary.xlu0.c.b16.cont [5/16] 0, 0, 128
        %1339 = vxpose.binary.xlu0.c.b16.cont [6/16] 0, 0, 128
        %1340 = vxpose.binary.xlu0.c.b16.cont [7/16] 0, 0, 128
        %1341 = vxpose.binary.xlu0.c.b16.end [8/16] 0, 0, 128
        %v1342 = vpop.trf.xlu0
        %v1343 = vpop.trf.xlu0
        %v1344 = vpop.trf.xlu0
        %v1345 = vpop.trf.xlu0
        %v1346 = vpop.trf.xlu0
        %v1347 = vpop.trf.xlu0
        %v1348 = vpop.trf.xlu0
        %v1349 = vpop.trf.xlu0
        %v1350 = vpop.trf.xlu0
        %v1351 = vpop.trf.xlu0
        %v1352 = vpop.trf.xlu0
        %v1353 = vpop.trf.xlu0
        %v1354 = vpop.trf.xlu0
        %v1355 = vpop.trf.xlu0
        %v1356 = vpop.trf.xlu0
        %v1357 = vpop.trf.xlu0
        %v1359 = vsel %vm594, %v1342, 0
        %v1362 = vsel %vm594, %v1344, 0
        %v1365 = vsel %vm594, %v1346, 0
        %v1368 = vsel %vm594, %v1348, 0
        %v1371 = vsel %vm594, %v1350, 0
        %v1374 = vsel %vm594, %v1352, 0
        %v1377 = vsel %vm594, %v1354, 0
        %v1380 = vsel %vm594, %v1356, 0
        %v1383 = vsel %vm594, %v1343, 0
        %v1386 = vsel %vm594, %v1345, 0
        %v1389 = vsel %vm594, %v1347, 0
        %v1392 = vsel %vm594, %v1349, 0
        %v1395 = vsel %vm594, %v1351, 0
        %v1398 = vsel %vm594, %v1353, 0
        %v1401 = vsel %vm594, %v1355, 0
        %v1404 = vsel %vm594, %v1357, 0
        %v1407 = vsel %vm643, %v1333, 0
        %1409 = vmatpush.bf16.msra.mxu0 0
        %1410 = vmatpush.bf16.msra.mxu0 0
        %1411 = vmatpush.bf16.msra.mxu0 0
        %1412 = vmatpush.bf16.msra.mxu0 0
        %1413 = vmatpush.bf16.msra.mxu0 0
        %1414 = vmatpush.bf16.msra.mxu0 0
        %1415 = vmatpush.bf16.msra.mxu0 0
        %1416 = vmatpush.bf16.msra.mxu0 %v1407
        %1417 = vmatmul.bf16.gmra.mxu0 %v1359
        %v1418 = vpop.f32.mrf.mxu0
        %v1419 = vadd.f32 0.0, %v1418
        %v1420 = vpop.f32.mrf.mxu0
        %v1421 = vadd.f32 0.0, %v1420
        %1422 = vmatmul.bf16.gmra.mxu0 %v1362
        %v1423 = vpop.f32.mrf.mxu0
        %v1424 = vadd.f32 0.0, %v1423
        %v1425 = vpop.f32.mrf.mxu0
        %v1426 = vadd.f32 0.0, %v1425
        %1427 = vmatmul.bf16.gmra.mxu0 %v1365
        %v1428 = vpop.f32.mrf.mxu0
        %v1429 = vadd.f32 0.0, %v1428
        %v1430 = vpop.f32.mrf.mxu0
        %v1431 = vadd.f32 0.0, %v1430
        %1432 = vmatmul.bf16.gmra.mxu0 %v1368
        %v1433 = vpop.f32.mrf.mxu0
        %v1434 = vadd.f32 0.0, %v1433
        %v1435 = vpop.f32.mrf.mxu0
        %v1436 = vadd.f32 0.0, %v1435
        %1437 = vmatmul.bf16.gmra.mxu0 %v1371
        %v1438 = vpop.f32.mrf.mxu0
        %v1439 = vadd.f32 0.0, %v1438
        %v1440 = vpop.f32.mrf.mxu0
        %v1441 = vadd.f32 0.0, %v1440
        %1442 = vmatmul.bf16.gmra.mxu0 %v1374
        %v1443 = vpop.f32.mrf.mxu0
        %v1444 = vadd.f32 0.0, %v1443
        %v1445 = vpop.f32.mrf.mxu0
        %v1446 = vadd.f32 0.0, %v1445
        %1447 = vmatmul.bf16.gmra.mxu0 %v1377
        %v1448 = vpop.f32.mrf.mxu0
        %v1449 = vadd.f32 0.0, %v1448
        %v1450 = vpop.f32.mrf.mxu0
        %v1451 = vadd.f32 0.0, %v1450
        %1452 = vmatmul.bf16.gmra.mxu0 %v1380
        %v1453 = vpop.f32.mrf.mxu0
        %v1454 = vadd.f32 0.0, %v1453
        %v1455 = vpop.f32.mrf.mxu0
        %v1456 = vadd.f32 0.0, %v1455
        %1457 = vmatmul.bf16.gmra.mxu0 %v1383
        %v1458 = vpop.f32.mrf.mxu0
        %v1459 = vadd.f32 0.0, %v1458
        %v1460 = vpop.f32.mrf.mxu0
        %v1461 = vadd.f32 0.0, %v1460
        %1462 = vmatmul.bf16.gmra.mxu0 %v1386
        %v1463 = vpop.f32.mrf.mxu0
        %v1464 = vadd.f32 0.0, %v1463
        %v1465 = vpop.f32.mrf.mxu0
        %v1466 = vadd.f32 0.0, %v1465
        %1467 = vmatmul.bf16.gmra.mxu0 %v1389
        %v1468 = vpop.f32.mrf.mxu0
        %v1469 = vadd.f32 0.0, %v1468
        %v1470 = vpop.f32.mrf.mxu0
        %v1471 = vadd.f32 0.0, %v1470
        %1472 = vmatmul.bf16.gmra.mxu0 %v1392
        %v1473 = vpop.f32.mrf.mxu0
        %v1474 = vadd.f32 0.0, %v1473
        %v1475 = vpop.f32.mrf.mxu0
        %v1476 = vadd.f32 0.0, %v1475
        %1477 = vmatmul.bf16.gmra.mxu0 %v1395
        %v1478 = vpop.f32.mrf.mxu0
        %v1479 = vadd.f32 0.0, %v1478
        %v1480 = vpop.f32.mrf.mxu0
        %v1481 = vadd.f32 0.0, %v1480
        %1482 = vmatmul.bf16.gmra.mxu0 %v1398
        %v1483 = vpop.f32.mrf.mxu0
        %v1484 = vadd.f32 0.0, %v1483
        %v1485 = vpop.f32.mrf.mxu0
        %v1486 = vadd.f32 0.0, %v1485
        %1487 = vmatmul.bf16.gmra.mxu0 %v1401
        %v1488 = vpop.f32.mrf.mxu0
        %v1489 = vadd.f32 0.0, %v1488
        %v1490 = vpop.f32.mrf.mxu0
        %v1491 = vadd.f32 0.0, %v1490
        %1492 = vmatmul.bf16.gmra.mxu0 %v1404
        %v1493 = vpop.f32.mrf.mxu0
        %v1494 = vadd.f32 0.0, %v1493
        %v1495 = vpop.f32.mrf.mxu0
        %v1496 = vadd.f32 0.0, %v1495
        %1497 = vdwg.mxu0
        %v1498 = vmax.f32 %v1419, %v1429
        %v1499 = vmax.f32 %v1421, %v1431
        %v1500 = vmax.f32 %v1424, %v1434
        %v1501 = vmax.f32 %v1426, %v1436
        %v1502 = vmax.f32 %v1498, %v1439
        %v1503 = vmax.f32 %v1499, %v1441
        %v1504 = vmax.f32 %v1500, %v1444
        %v1505 = vmax.f32 %v1501, %v1446
        %v1506 = vmax.f32 %v1502, %v1449
        %v1507 = vmax.f32 %v1503, %v1451
        %v1508 = vmax.f32 %v1504, %v1454
        %v1509 = vmax.f32 %v1505, %v1456
        %v1510 = vmax.f32 %v1506, %v1459
        %v1511 = vmax.f32 %v1507, %v1461
        %v1512 = vmax.f32 %v1508, %v1464
        %v1513 = vmax.f32 %v1509, %v1466
        %v1514 = vmax.f32 %v1510, %v1469
        %v1515 = vmax.f32 %v1511, %v1471
        %v1516 = vmax.f32 %v1512, %v1474
        %v1517 = vmax.f32 %v1513, %v1476
        %v1518 = vmax.f32 %v1514, %v1479
        %v1519 = vmax.f32 %v1515, %v1481
        %v1520 = vmax.f32 %v1516, %v1484
        %v1521 = vmax.f32 %v1517, %v1486
        %v1522 = vmax.f32 %v1518, %v1489
        %v1523 = vmax.f32 %v1519, %v1491
        %v1524 = vmax.f32 %v1520, %v1494
        %v1525 = vmax.f32 %v1521, %v1496
        %v1526 = vmax.f32 %v1522, %v1523
        %v1527 = vmax.f32 %v1524, %v1525
        %v1528 = vmax.f32 %v1526, %v1527
        %v1529 = vrot.slane %v1528, 4
        %v1530 = vmax.f32 %v1528, %v1529
        %v1531 = vrot.slane %v1530, 2
        %v1532 = vmax.f32 %v1530, %v1531
        %v1533 = vrot.slane %v1532, 1
        %v1534 = vmax.f32 %v1532, %v1533
        %v1535 = vsub.f32 %v1419, %v1534
        %v1536 = vsub.f32 %v1421, %v1534
        %v1537 = vsub.f32 %v1424, %v1534
        %v1538 = vsub.f32 %v1426, %v1534
        %v1539 = vsub.f32 %v1429, %v1534
        %v1540 = vsub.f32 %v1431, %v1534
        %v1541 = vsub.f32 %v1434, %v1534
        %v1542 = vsub.f32 %v1436, %v1534
        %v1543 = vsub.f32 %v1439, %v1534
        %v1544 = vsub.f32 %v1441, %v1534
        %v1545 = vsub.f32 %v1444, %v1534
        %v1546 = vsub.f32 %v1446, %v1534
        %v1547 = vsub.f32 %v1449, %v1534
        %v1548 = vsub.f32 %v1451, %v1534
        %v1549 = vsub.f32 %v1454, %v1534
        %v1550 = vsub.f32 %v1456, %v1534
        %v1551 = vsub.f32 %v1459, %v1534
        %v1552 = vsub.f32 %v1461, %v1534
        %v1553 = vsub.f32 %v1464, %v1534
        %v1554 = vsub.f32 %v1466, %v1534
        %v1555 = vsub.f32 %v1469, %v1534
        %v1556 = vsub.f32 %v1471, %v1534
        %v1557 = vsub.f32 %v1474, %v1534
        %v1558 = vsub.f32 %v1476, %v1534
        %v1559 = vsub.f32 %v1479, %v1534
        %v1560 = vsub.f32 %v1481, %v1534
        %v1561 = vsub.f32 %v1484, %v1534
        %v1562 = vsub.f32 %v1486, %v1534
        %v1563 = vsub.f32 %v1489, %v1534
        %v1564 = vsub.f32 %v1491, %v1534
        %v1565 = vsub.f32 %v1494, %v1534
        %v1566 = vsub.f32 %v1496, %v1534
        %v1567 = vmul.f32 %v1535, 1.442695
        %v1568 = vpow.pop %v1567
        %v1569 = vmul.f32 %v1536, 1.442695
        %v1570 = vpow.pop %v1569
        %v1571 = vmul.f32 %v1537, 1.442695
        %v1572 = vpow.pop %v1571
        %v1573 = vmul.f32 %v1538, 1.442695
        %v1574 = vpow.pop %v1573
        %v1575 = vmul.f32 %v1539, 1.442695
        %v1576 = vpow.pop %v1575
        %v1577 = vmul.f32 %v1540, 1.442695
        %v1578 = vpow.pop %v1577
        %v1579 = vmul.f32 %v1541, 1.442695
        %v1580 = vpow.pop %v1579
        %v1581 = vmul.f32 %v1542, 1.442695
        %v1582 = vpow.pop %v1581
        %v1583 = vmul.f32 %v1543, 1.442695
        %v1584 = vpow.pop %v1583
        %v1585 = vmul.f32 %v1544, 1.442695
        %v1586 = vpow.pop %v1585
        %v1587 = vmul.f32 %v1545, 1.442695
        %v1588 = vpow.pop %v1587
        %v1589 = vmul.f32 %v1546, 1.442695
        %v1590 = vpow.pop %v1589
        %v1591 = vmul.f32 %v1547, 1.442695
        %v1592 = vpow.pop %v1591
        %v1593 = vmul.f32 %v1548, 1.442695
        %v1594 = vpow.pop %v1593
        %v1595 = vmul.f32 %v1549, 1.442695
        %v1596 = vpow.pop %v1595
        %v1597 = vmul.f32 %v1550, 1.442695
        %v1598 = vpow.pop %v1597
        %v1599 = vmul.f32 %v1551, 1.442695
        %v1600 = vpow.pop %v1599
        %v1601 = vmul.f32 %v1552, 1.442695
        %v1602 = vpow.pop %v1601
        %v1603 = vmul.f32 %v1553, 1.442695
        %v1604 = vpow.pop %v1603
        %v1605 = vmul.f32 %v1554, 1.442695
        %v1606 = vpow.pop %v1605
        %v1607 = vmul.f32 %v1555, 1.442695
        %v1608 = vpow.pop %v1607
        %v1609 = vmul.f32 %v1556, 1.442695
        %v1610 = vpow.pop %v1609
        %v1611 = vmul.f32 %v1557, 1.442695
        %v1612 = vpow.pop %v1611
        %v1613 = vmul.f32 %v1558, 1.442695
        %v1614 = vpow.pop %v1613
        %v1615 = vmul.f32 %v1559, 1.442695
        %v1616 = vpow.pop %v1615
        %v1617 = vmul.f32 %v1560, 1.442695
        %v1618 = vpow.pop %v1617
        %v1619 = vmul.f32 %v1561, 1.442695
        %v1620 = vpow.pop %v1619
        %v1621 = vmul.f32 %v1562, 1.442695
        %v1622 = vpow.pop %v1621
        %v1623 = vmul.f32 %v1563, 1.442695
        %v1624 = vpow.pop %v1623
        %v1625 = vmul.f32 %v1564, 1.442695
        %v1626 = vpow.pop %v1625
        %v1627 = vmul.f32 %v1565, 1.442695
        %v1628 = vpow.pop %v1627
        %v1629 = vmul.f32 %v1566, 1.442695
        %v1630 = vpow.pop %v1629
        %v1631 = vpack.c.bf16 %v1570, %v1568
        %v1632 = vpack.c.bf16 %v1574, %v1572
        %v1633 = vpack.c.bf16 %v1578, %v1576
        %v1634 = vpack.c.bf16 %v1582, %v1580
        %v1635 = vpack.c.bf16 %v1586, %v1584
        %v1636 = vpack.c.bf16 %v1590, %v1588
        %v1637 = vpack.c.bf16 %v1594, %v1592
        %v1638 = vpack.c.bf16 %v1598, %v1596
        %v1639 = vpack.c.bf16 %v1602, %v1600
        %v1640 = vpack.c.bf16 %v1606, %v1604
        %v1641 = vpack.c.bf16 %v1610, %v1608
        %v1642 = vpack.c.bf16 %v1614, %v1612
        %v1643 = vpack.c.bf16 %v1618, %v1616
        %v1644 = vpack.c.bf16 %v1622, %v1620
        %v1645 = vpack.c.bf16 %v1626, %v1624
        %v1646 = vpack.c.bf16 %v1630, %v1628
        %v1647 = vunpack.c.l.bf16 %v1631
        %v1648 = vunpack.c.h.bf16 %v1631
        %v1649 = vunpack.c.l.bf16 %v1632
        %v1650 = vunpack.c.h.bf16 %v1632
        %v1651 = vunpack.c.l.bf16 %v1633
        %v1652 = vunpack.c.h.bf16 %v1633
        %v1653 = vunpack.c.l.bf16 %v1634
        %v1654 = vunpack.c.h.bf16 %v1634
        %v1655 = vunpack.c.l.bf16 %v1635
        %v1656 = vunpack.c.h.bf16 %v1635
        %v1657 = vunpack.c.l.bf16 %v1636
        %v1658 = vunpack.c.h.bf16 %v1636
        %v1659 = vunpack.c.l.bf16 %v1637
        %v1660 = vunpack.c.h.bf16 %v1637
        %v1661 = vunpack.c.l.bf16 %v1638
        %v1662 = vunpack.c.h.bf16 %v1638
        %v1663 = vunpack.c.l.bf16 %v1639
        %v1664 = vunpack.c.h.bf16 %v1639
        %v1665 = vunpack.c.l.bf16 %v1640
        %v1666 = vunpack.c.h.bf16 %v1640
        %v1667 = vunpack.c.l.bf16 %v1641
        %v1668 = vunpack.c.h.bf16 %v1641
        %v1669 = vunpack.c.l.bf16 %v1642
        %v1670 = vunpack.c.h.bf16 %v1642
        %v1671 = vunpack.c.l.bf16 %v1643
        %v1672 = vunpack.c.h.bf16 %v1643
        %v1673 = vunpack.c.l.bf16 %v1644
        %v1674 = vunpack.c.h.bf16 %v1644
        %v1675 = vunpack.c.l.bf16 %v1645
        %v1676 = vunpack.c.h.bf16 %v1645
        %v1677 = vunpack.c.l.bf16 %v1646
        %v1678 = vunpack.c.h.bf16 %v1646
        %v1679 = vadd.f32 %v1647, %v1648
        %v1680 = vadd.f32 %v1679, %v1649
        %v1681 = vadd.f32 %v1680, %v1650
        %v1682 = vadd.f32 %v1681, %v1651
        %v1683 = vadd.f32 %v1682, %v1652
        %v1684 = vadd.f32 %v1683, %v1653
        %v1685 = vadd.f32 %v1684, %v1654
        %v1686 = vadd.f32 %v1685, %v1655
        %v1687 = vadd.f32 %v1686, %v1656
        %v1688 = vadd.f32 %v1687, %v1657
        %v1689 = vadd.f32 %v1688, %v1658
        %v1690 = vadd.f32 %v1689, %v1659
        %v1691 = vadd.f32 %v1690, %v1660
        %v1692 = vadd.f32 %v1691, %v1661
        %v1693 = vadd.f32 %v1692, %v1662
        %v1694 = vadd.f32 %v1693, %v1663
        %v1695 = vadd.f32 %v1694, %v1664
        %v1696 = vadd.f32 %v1695, %v1665
        %v1697 = vadd.f32 %v1696, %v1666
        %v1698 = vadd.f32 %v1697, %v1667
        %v1699 = vadd.f32 %v1698, %v1668
        %v1700 = vadd.f32 %v1699, %v1669
        %v1701 = vadd.f32 %v1700, %v1670
        %v1702 = vadd.f32 %v1701, %v1671
        %v1703 = vadd.f32 %v1702, %v1672
        %v1704 = vadd.f32 %v1703, %v1673
        %v1705 = vadd.f32 %v1704, %v1674
        %v1706 = vadd.f32 %v1705, %v1675
        %v1707 = vadd.f32 %v1706, %v1676
        %v1708 = vadd.f32 %v1707, %v1677
        %v1709 = vadd.f32 %v1708, %v1678
        %v1710 = vrot.slane %v1709, 4
        %v1711 = vadd.f32 %v1709, %v1710
        %v1712 = vrot.slane %v1711, 2
        %v1713 = vadd.f32 %v1711, %v1712
        %v1714 = vrot.slane %v1713, 1
        %v1715 = vadd.f32 %v1713, %v1714
        %1716 = vmatpush.bf16.msra.mxu0 %v1638
        %1717 = vmatpush.bf16.msra.mxu0 %v1637
        %1718 = vmatpush.bf16.msra.mxu0 %v1636
        %1719 = vmatpush.bf16.msra.mxu0 %v1635
        %1720 = vmatpush.bf16.msra.mxu0 %v1634
        %1721 = vmatpush.bf16.msra.mxu0 %v1633
        %1722 = vmatpush.bf16.msra.mxu0 %v1632
        %1723 = vmatpush.bf16.msra.mxu0 %v1631
        %1724 = vmatmul.bf16.gmra.mxu0 %v1330
        %v1725 = vpop.f32.mrf.mxu0
        %v1726 = vadd.f32 0.0, %v1725
        %v1727 = vpop.f32.mrf.mxu0
        %1728 = vdwg.mxu0
        %1729 = vmatpush.bf16.msra.mxu0 %v1646
        %1730 = vmatpush.bf16.msra.mxu0 %v1645
        %1731 = vmatpush.bf16.msra.mxu0 %v1644
        %1732 = vmatpush.bf16.msra.mxu0 %v1643
        %1733 = vmatpush.bf16.msra.mxu0 %v1642
        %1734 = vmatpush.bf16.msra.mxu0 %v1641
        %1735 = vmatpush.bf16.msra.mxu0 %v1640
        %1736 = vmatpush.bf16.msra.mxu0 %v1639
        %1737 = vmatmul.bf16.gmra.mxu0 %v1331
        %v1738 = vpop.f32.mrf.mxu0
        %v1739 = vadd.f32 %v1726, %v1738
        %v1740 = vpop.f32.mrf.mxu0
        %1741 = vdwg.mxu0
        %v1742 = vrcp.pop %v1715
        %v1743 = vmul.f32 %v1739, %v1742
        %1744 = vst [vmem:[#allocation3 + $0x10] sm:$0xff] %v1743
        %v1745 = vld [vmem:[#allocation2 + $0x18] sm:$0xff]
        %v1746 = vpack.c.bf16 %v1745, %v1745
        %v1748 = vsel %vm643, %v1746, 0
        %1750 = vmatpush.bf16.msra.mxu0 0
        %1751 = vmatpush.bf16.msra.mxu0 0
        %1752 = vmatpush.bf16.msra.mxu0 0
        %1753 = vmatpush.bf16.msra.mxu0 0
        %1754 = vmatpush.bf16.msra.mxu0 0
        %1755 = vmatpush.bf16.msra.mxu0 0
        %1756 = vmatpush.bf16.msra.mxu0 0
        %1757 = vmatpush.bf16.msra.mxu0 %v1748
        %1758 = vmatmul.bf16.gmra.mxu0 %v1359
        %v1759 = vpop.f32.mrf.mxu0
        %v1760 = vadd.f32 0.0, %v1759
        %v1761 = vpop.f32.mrf.mxu0
        %v1762 = vadd.f32 0.0, %v1761
        %1763 = vmatmul.bf16.gmra.mxu0 %v1362
        %v1764 = vpop.f32.mrf.mxu0
        %v1765 = vadd.f32 0.0, %v1764
        %v1766 = vpop.f32.mrf.mxu0
        %v1767 = vadd.f32 0.0, %v1766
        %1768 = vmatmul.bf16.gmra.mxu0 %v1365
        %v1769 = vpop.f32.mrf.mxu0
        %v1770 = vadd.f32 0.0, %v1769
        %v1771 = vpop.f32.mrf.mxu0
        %v1772 = vadd.f32 0.0, %v1771
        %1773 = vmatmul.bf16.gmra.mxu0 %v1368
        %v1774 = vpop.f32.mrf.mxu0
        %v1775 = vadd.f32 0.0, %v1774
        %v1776 = vpop.f32.mrf.mxu0
        %v1777 = vadd.f32 0.0, %v1776
        %1778 = vmatmul.bf16.gmra.mxu0 %v1371
        %v1779 = vpop.f32.mrf.mxu0
        %v1780 = vadd.f32 0.0, %v1779
        %v1781 = vpop.f32.mrf.mxu0
        %v1782 = vadd.f32 0.0, %v1781
        %1783 = vmatmul.bf16.gmra.mxu0 %v1374
        %v1784 = vpop.f32.mrf.mxu0
        %v1785 = vadd.f32 0.0, %v1784
        %v1786 = vpop.f32.mrf.mxu0
        %v1787 = vadd.f32 0.0, %v1786
        %1788 = vmatmul.bf16.gmra.mxu0 %v1377
        %v1789 = vpop.f32.mrf.mxu0
        %v1790 = vadd.f32 0.0, %v1789
        %v1791 = vpop.f32.mrf.mxu0
        %v1792 = vadd.f32 0.0, %v1791
        %1793 = vmatmul.bf16.gmra.mxu0 %v1380
        %v1794 = vpop.f32.mrf.mxu0
        %v1795 = vadd.f32 0.0, %v1794
        %v1796 = vpop.f32.mrf.mxu0
        %v1797 = vadd.f32 0.0, %v1796
        %1798 = vmatmul.bf16.gmra.mxu0 %v1383
        %v1799 = vpop.f32.mrf.mxu0
        %v1800 = vadd.f32 0.0, %v1799
        %v1801 = vpop.f32.mrf.mxu0
        %v1802 = vadd.f32 0.0, %v1801
        %1803 = vmatmul.bf16.gmra.mxu0 %v1386
        %v1804 = vpop.f32.mrf.mxu0
        %v1805 = vadd.f32 0.0, %v1804
        %v1806 = vpop.f32.mrf.mxu0
        %v1807 = vadd.f32 0.0, %v1806
        %1808 = vmatmul.bf16.gmra.mxu0 %v1389
        %v1809 = vpop.f32.mrf.mxu0
        %v1810 = vadd.f32 0.0, %v1809
        %v1811 = vpop.f32.mrf.mxu0
        %v1812 = vadd.f32 0.0, %v1811
        %1813 = vmatmul.bf16.gmra.mxu0 %v1392
        %v1814 = vpop.f32.mrf.mxu0
        %v1815 = vadd.f32 0.0, %v1814
        %v1816 = vpop.f32.mrf.mxu0
        %v1817 = vadd.f32 0.0, %v1816
        %1818 = vmatmul.bf16.gmra.mxu0 %v1395
        %v1819 = vpop.f32.mrf.mxu0
        %v1820 = vadd.f32 0.0, %v1819
        %v1821 = vpop.f32.mrf.mxu0
        %v1822 = vadd.f32 0.0, %v1821
        %1823 = vmatmul.bf16.gmra.mxu0 %v1398
        %v1824 = vpop.f32.mrf.mxu0
        %v1825 = vadd.f32 0.0, %v1824
        %v1826 = vpop.f32.mrf.mxu0
        %v1827 = vadd.f32 0.0, %v1826
        %1828 = vmatmul.bf16.gmra.mxu0 %v1401
        %v1829 = vpop.f32.mrf.mxu0
        %v1830 = vadd.f32 0.0, %v1829
        %v1831 = vpop.f32.mrf.mxu0
        %v1832 = vadd.f32 0.0, %v1831
        %1833 = vmatmul.bf16.gmra.mxu0 %v1404
        %v1834 = vpop.f32.mrf.mxu0
        %v1835 = vadd.f32 0.0, %v1834
        %v1836 = vpop.f32.mrf.mxu0
        %v1837 = vadd.f32 0.0, %v1836
        %1838 = vdwg.mxu0
        %v1839 = vmax.f32 %v1760, %v1770
        %v1840 = vmax.f32 %v1762, %v1772
        %v1841 = vmax.f32 %v1765, %v1775
        %v1842 = vmax.f32 %v1767, %v1777
        %v1843 = vmax.f32 %v1839, %v1780
        %v1844 = vmax.f32 %v1840, %v1782
        %v1845 = vmax.f32 %v1841, %v1785
        %v1846 = vmax.f32 %v1842, %v1787
        %v1847 = vmax.f32 %v1843, %v1790
        %v1848 = vmax.f32 %v1844, %v1792
        %v1849 = vmax.f32 %v1845, %v1795
        %v1850 = vmax.f32 %v1846, %v1797
        %v1851 = vmax.f32 %v1847, %v1800
        %v1852 = vmax.f32 %v1848, %v1802
        %v1853 = vmax.f32 %v1849, %v1805
        %v1854 = vmax.f32 %v1850, %v1807
        %v1855 = vmax.f32 %v1851, %v1810
        %v1856 = vmax.f32 %v1852, %v1812
        %v1857 = vmax.f32 %v1853, %v1815
        %v1858 = vmax.f32 %v1854, %v1817
        %v1859 = vmax.f32 %v1855, %v1820
        %v1860 = vmax.f32 %v1856, %v1822
        %v1861 = vmax.f32 %v1857, %v1825
        %v1862 = vmax.f32 %v1858, %v1827
        %v1863 = vmax.f32 %v1859, %v1830
        %v1864 = vmax.f32 %v1860, %v1832
        %v1865 = vmax.f32 %v1861, %v1835
        %v1866 = vmax.f32 %v1862, %v1837
        %v1867 = vmax.f32 %v1863, %v1864
        %v1868 = vmax.f32 %v1865, %v1866
        %v1869 = vmax.f32 %v1867, %v1868
        %v1870 = vrot.slane %v1869, 4
        %v1871 = vmax.f32 %v1869, %v1870
        %v1872 = vrot.slane %v1871, 2
        %v1873 = vmax.f32 %v1871, %v1872
        %v1874 = vrot.slane %v1873, 1
        %v1875 = vmax.f32 %v1873, %v1874
        %v1876 = vsub.f32 %v1760, %v1875
        %v1877 = vsub.f32 %v1762, %v1875
        %v1878 = vsub.f32 %v1765, %v1875
        %v1879 = vsub.f32 %v1767, %v1875
        %v1880 = vsub.f32 %v1770, %v1875
        %v1881 = vsub.f32 %v1772, %v1875
        %v1882 = vsub.f32 %v1775, %v1875
        %v1883 = vsub.f32 %v1777, %v1875
        %v1884 = vsub.f32 %v1780, %v1875
        %v1885 = vsub.f32 %v1782, %v1875
        %v1886 = vsub.f32 %v1785, %v1875
        %v1887 = vsub.f32 %v1787, %v1875
        %v1888 = vsub.f32 %v1790, %v1875
        %v1889 = vsub.f32 %v1792, %v1875
        %v1890 = vsub.f32 %v1795, %v1875
        %v1891 = vsub.f32 %v1797, %v1875
        %v1892 = vsub.f32 %v1800, %v1875
        %v1893 = vsub.f32 %v1802, %v1875
        %v1894 = vsub.f32 %v1805, %v1875
        %v1895 = vsub.f32 %v1807, %v1875
        %v1896 = vsub.f32 %v1810, %v1875
        %v1897 = vsub.f32 %v1812, %v1875
        %v1898 = vsub.f32 %v1815, %v1875
        %v1899 = vsub.f32 %v1817, %v1875
        %v1900 = vsub.f32 %v1820, %v1875
        %v1901 = vsub.f32 %v1822, %v1875
        %v1902 = vsub.f32 %v1825, %v1875
        %v1903 = vsub.f32 %v1827, %v1875
        %v1904 = vsub.f32 %v1830, %v1875
        %v1905 = vsub.f32 %v1832, %v1875
        %v1906 = vsub.f32 %v1835, %v1875
        %v1907 = vsub.f32 %v1837, %v1875
        %v1908 = vmul.f32 %v1876, 1.442695
        %v1909 = vpow.pop %v1908
        %v1910 = vmul.f32 %v1877, 1.442695
        %v1911 = vpow.pop %v1910
        %v1912 = vmul.f32 %v1878, 1.442695
        %v1913 = vpow.pop %v1912
        %v1914 = vmul.f32 %v1879, 1.442695
        %v1915 = vpow.pop %v1914
        %v1916 = vmul.f32 %v1880, 1.442695
        %v1917 = vpow.pop %v1916
        %v1918 = vmul.f32 %v1881, 1.442695
        %v1919 = vpow.pop %v1918
        %v1920 = vmul.f32 %v1882, 1.442695
        %v1921 = vpow.pop %v1920
        %v1922 = vmul.f32 %v1883, 1.442695
        %v1923 = vpow.pop %v1922
        %v1924 = vmul.f32 %v1884, 1.442695
        %v1925 = vpow.pop %v1924
        %v1926 = vmul.f32 %v1885, 1.442695
        %v1927 = vpow.pop %v1926
        %v1928 = vmul.f32 %v1886, 1.442695
        %v1929 = vpow.pop %v1928
        %v1930 = vmul.f32 %v1887, 1.442695
        %v1931 = vpow.pop %v1930
        %v1932 = vmul.f32 %v1888, 1.442695
        %v1933 = vpow.pop %v1932
        %v1934 = vmul.f32 %v1889, 1.442695
        %v1935 = vpow.pop %v1934
        %v1936 = vmul.f32 %v1890, 1.442695
        %v1937 = vpow.pop %v1936
        %v1938 = vmul.f32 %v1891, 1.442695
        %v1939 = vpow.pop %v1938
        %v1940 = vmul.f32 %v1892, 1.442695
        %v1941 = vpow.pop %v1940
        %v1942 = vmul.f32 %v1893, 1.442695
        %v1943 = vpow.pop %v1942
        %v1944 = vmul.f32 %v1894, 1.442695
        %v1945 = vpow.pop %v1944
        %v1946 = vmul.f32 %v1895, 1.442695
        %v1947 = vpow.pop %v1946
        %v1948 = vmul.f32 %v1896, 1.442695
        %v1949 = vpow.pop %v1948
        %v1950 = vmul.f32 %v1897, 1.442695
        %v1951 = vpow.pop %v1950
        %v1952 = vmul.f32 %v1898, 1.442695
        %v1953 = vpow.pop %v1952
        %v1954 = vmul.f32 %v1899, 1.442695
        %v1955 = vpow.pop %v1954
        %v1956 = vmul.f32 %v1900, 1.442695
        %v1957 = vpow.pop %v1956
        %v1958 = vmul.f32 %v1901, 1.442695
        %v1959 = vpow.pop %v1958
        %v1960 = vmul.f32 %v1902, 1.442695
        %v1961 = vpow.pop %v1960
        %v1962 = vmul.f32 %v1903, 1.442695
        %v1963 = vpow.pop %v1962
        %v1964 = vmul.f32 %v1904, 1.442695
        %v1965 = vpow.pop %v1964
        %v1966 = vmul.f32 %v1905, 1.442695
        %v1967 = vpow.pop %v1966
        %v1968 = vmul.f32 %v1906, 1.442695
        %v1969 = vpow.pop %v1968
        %v1970 = vmul.f32 %v1907, 1.442695
        %v1971 = vpow.pop %v1970
        %v1972 = vpack.c.bf16 %v1911, %v1909
        %v1973 = vpack.c.bf16 %v1915, %v1913
        %v1974 = vpack.c.bf16 %v1919, %v1917
        %v1975 = vpack.c.bf16 %v1923, %v1921
        %v1976 = vpack.c.bf16 %v1927, %v1925
        %v1977 = vpack.c.bf16 %v1931, %v1929
        %v1978 = vpack.c.bf16 %v1935, %v1933
        %v1979 = vpack.c.bf16 %v1939, %v1937
        %v1980 = vpack.c.bf16 %v1943, %v1941
        %v1981 = vpack.c.bf16 %v1947, %v1945
        %v1982 = vpack.c.bf16 %v1951, %v1949
        %v1983 = vpack.c.bf16 %v1955, %v1953
        %v1984 = vpack.c.bf16 %v1959, %v1957
        %v1985 = vpack.c.bf16 %v1963, %v1961
        %v1986 = vpack.c.bf16 %v1967, %v1965
        %v1987 = vpack.c.bf16 %v1971, %v1969
        %v1988 = vunpack.c.l.bf16 %v1972
        %v1989 = vunpack.c.h.bf16 %v1972
        %v1990 = vunpack.c.l.bf16 %v1973
        %v1991 = vunpack.c.h.bf16 %v1973
        %v1992 = vunpack.c.l.bf16 %v1974
        %v1993 = vunpack.c.h.bf16 %v1974
        %v1994 = vunpack.c.l.bf16 %v1975
        %v1995 = vunpack.c.h.bf16 %v1975
        %v1996 = vunpack.c.l.bf16 %v1976
        %v1997 = vunpack.c.h.bf16 %v1976
        %v1998 = vunpack.c.l.bf16 %v1977
        %v1999 = vunpack.c.h.bf16 %v1977
        %v2000 = vunpack.c.l.bf16 %v1978
        %v2001 = vunpack.c.h.bf16 %v1978
        %v2002 = vunpack.c.l.bf16 %v1979
        %v2003 = vunpack.c.h.bf16 %v1979
        %v2004 = vunpack.c.l.bf16 %v1980
        %v2005 = vunpack.c.h.bf16 %v1980
        %v2006 = vunpack.c.l.bf16 %v1981
        %v2007 = vunpack.c.h.bf16 %v1981
        %v2008 = vunpack.c.l.bf16 %v1982
        %v2009 = vunpack.c.h.bf16 %v1982
        %v2010 = vunpack.c.l.bf16 %v1983
        %v2011 = vunpack.c.h.bf16 %v1983
        %v2012 = vunpack.c.l.bf16 %v1984
        %v2013 = vunpack.c.h.bf16 %v1984
        %v2014 = vunpack.c.l.bf16 %v1985
        %v2015 = vunpack.c.h.bf16 %v1985
        %v2016 = vunpack.c.l.bf16 %v1986
        %v2017 = vunpack.c.h.bf16 %v1986
        %v2018 = vunpack.c.l.bf16 %v1987
        %v2019 = vunpack.c.h.bf16 %v1987
        %v2020 = vadd.f32 %v1988, %v1989
        %v2021 = vadd.f32 %v2020, %v1990
        %v2022 = vadd.f32 %v2021, %v1991
        %v2023 = vadd.f32 %v2022, %v1992
        %v2024 = vadd.f32 %v2023, %v1993
        %v2025 = vadd.f32 %v2024, %v1994
        %v2026 = vadd.f32 %v2025, %v1995
        %v2027 = vadd.f32 %v2026, %v1996
        %v2028 = vadd.f32 %v2027, %v1997
        %v2029 = vadd.f32 %v2028, %v1998
        %v2030 = vadd.f32 %v2029, %v1999
        %v2031 = vadd.f32 %v2030, %v2000
        %v2032 = vadd.f32 %v2031, %v2001
        %v2033 = vadd.f32 %v2032, %v2002
        %v2034 = vadd.f32 %v2033, %v2003
        %v2035 = vadd.f32 %v2034, %v2004
        %v2036 = vadd.f32 %v2035, %v2005
        %v2037 = vadd.f32 %v2036, %v2006
        %v2038 = vadd.f32 %v2037, %v2007
        %v2039 = vadd.f32 %v2038, %v2008
        %v2040 = vadd.f32 %v2039, %v2009
        %v2041 = vadd.f32 %v2040, %v2010
        %v2042 = vadd.f32 %v2041, %v2011
        %v2043 = vadd.f32 %v2042, %v2012
        %v2044 = vadd.f32 %v2043, %v2013
        %v2045 = vadd.f32 %v2044, %v2014
        %v2046 = vadd.f32 %v2045, %v2015
        %v2047 = vadd.f32 %v2046, %v2016
        %v2048 = vadd.f32 %v2047, %v2017
        %v2049 = vadd.f32 %v2048, %v2018
        %v2050 = vadd.f32 %v2049, %v2019
        %v2051 = vrot.slane %v2050, 4
        %v2052 = vadd.f32 %v2050, %v2051
        %v2053 = vrot.slane %v2052, 2
        %v2054 = vadd.f32 %v2052, %v2053
        %v2055 = vrot.slane %v2054, 1
        %v2056 = vadd.f32 %v2054, %v2055
        %2057 = vmatpush.bf16.msra.mxu0 %v1979
        %2058 = vmatpush.bf16.msra.mxu0 %v1978
        %2059 = vmatpush.bf16.msra.mxu0 %v1977
        %2060 = vmatpush.bf16.msra.mxu0 %v1976
        %2061 = vmatpush.bf16.msra.mxu0 %v1975
        %2062 = vmatpush.bf16.msra.mxu0 %v1974
        %2063 = vmatpush.bf16.msra.mxu0 %v1973
        %2064 = vmatpush.bf16.msra.mxu0 %v1972
        %2065 = vmatmul.bf16.gmra.mxu0 %v1330
        %v2066 = vpop.f32.mrf.mxu0
        %v2067 = vadd.f32 0.0, %v2066
        %v2068 = vpop.f32.mrf.mxu0
        %2069 = vdwg.mxu0
        %2070 = vmatpush.bf16.msra.mxu0 %v1987
        %2071 = vmatpush.bf16.msra.mxu0 %v1986
        %2072 = vmatpush.bf16.msra.mxu0 %v1985
        %2073 = vmatpush.bf16.msra.mxu0 %v1984
        %2074 = vmatpush.bf16.msra.mxu0 %v1983
        %2075 = vmatpush.bf16.msra.mxu0 %v1982
        %2076 = vmatpush.bf16.msra.mxu0 %v1981
        %2077 = vmatpush.bf16.msra.mxu0 %v1980
        %2078 = vmatmul.bf16.gmra.mxu0 %v1331
        %v2079 = vpop.f32.mrf.mxu0
        %v2080 = vadd.f32 %v2067, %v2079
        %v2081 = vpop.f32.mrf.mxu0
        %2082 = vdwg.mxu0
        %v2083 = vrcp.pop %v2056
        %v2084 = vmul.f32 %v2080, %v2083
        %2085 = vst [vmem:[#allocation3 + $0x18] sm:$0xff] %v2084
        %v2086 = vld [vmem:[#allocation2 + $0x60] sm:$0xff]
        %v2087 = vld [vmem:[#allocation2 + $0x68] sm:$0xff]
        %v2088 = vpack.c.bf16 %v2086, %v2086
        %v2089 = vpack.c.bf16 %v2087, %v2087
        %v2090 = vld [vmem:[#allocation2 + $0xa0] sm:$0xff]
        %v2091 = vld [vmem:[#allocation2 + $0xa8] sm:$0xff]
        %v2092 = vpack.c.bf16 %v2090, %v2090
        %v2093 = vpack.c.bf16 %v2091, %v2091
        %v2094 = vld [vmem:[#allocation2 + $0x20] sm:$0xff]
        %v2095 = vpack.c.bf16 %v2094, %v2094
        %2096 = vxpose.binary.xlu0.c.b16.start [1/16] %v2089, %v2088, 128
        %2097 = vxpose.binary.xlu0.c.b16.cont [2/16] 0, 0, 128
        %2098 = vxpose.binary.xlu0.c.b16.cont [3/16] 0, 0, 128
        %2099 = vxpose.binary.xlu0.c.b16.cont [4/16] 0, 0, 128
        %2100 = vxpose.binary.xlu0.c.b16.cont [5/16] 0, 0, 128
        %2101 = vxpose.binary.xlu0.c.b16.cont [6/16] 0, 0, 128
        %2102 = vxpose.binary.xlu0.c.b16.cont [7/16] 0, 0, 128
        %2103 = vxpose.binary.xlu0.c.b16.end [8/16] 0, 0, 128
        %v2104 = vpop.trf.xlu0
        %v2105 = vpop.trf.xlu0
        %v2106 = vpop.trf.xlu0
        %v2107 = vpop.trf.xlu0
        %v2108 = vpop.trf.xlu0
        %v2109 = vpop.trf.xlu0
        %v2110 = vpop.trf.xlu0
        %v2111 = vpop.trf.xlu0
        %v2112 = vpop.trf.xlu0
        %v2113 = vpop.trf.xlu0
        %v2114 = vpop.trf.xlu0
        %v2115 = vpop.trf.xlu0
        %v2116 = vpop.trf.xlu0
        %v2117 = vpop.trf.xlu0
        %v2118 = vpop.trf.xlu0
        %v2119 = vpop.trf.xlu0
        %v2121 = vsel %vm594, %v2104, 0
        %v2124 = vsel %vm594, %v2106, 0
        %v2127 = vsel %vm594, %v2108, 0
        %v2130 = vsel %vm594, %v2110, 0
        %v2133 = vsel %vm594, %v2112, 0
        %v2136 = vsel %vm594, %v2114, 0
        %v2139 = vsel %vm594, %v2116, 0
        %v2142 = vsel %vm594, %v2118, 0
        %v2145 = vsel %vm594, %v2105, 0
        %v2148 = vsel %vm594, %v2107, 0
        %v2151 = vsel %vm594, %v2109, 0
        %v2154 = vsel %vm594, %v2111, 0
        %v2157 = vsel %vm594, %v2113, 0
        %v2160 = vsel %vm594, %v2115, 0
        %v2163 = vsel %vm594, %v2117, 0
        %v2166 = vsel %vm594, %v2119, 0
        %v2169 = vsel %vm643, %v2095, 0
        %2171 = vmatpush.bf16.msra.mxu0 0
        %2172 = vmatpush.bf16.msra.mxu0 0
        %2173 = vmatpush.bf16.msra.mxu0 0
        %2174 = vmatpush.bf16.msra.mxu0 0
        %2175 = vmatpush.bf16.msra.mxu0 0
        %2176 = vmatpush.bf16.msra.mxu0 0
        %2177 = vmatpush.bf16.msra.mxu0 0
        %2178 = vmatpush.bf16.msra.mxu0 %v2169
        %2179 = vmatmul.bf16.gmra.mxu0 %v2121
        %v2180 = vpop.f32.mrf.mxu0
        %v2181 = vadd.f32 0.0, %v2180
        %v2182 = vpop.f32.mrf.mxu0
        %v2183 = vadd.f32 0.0, %v2182
        %2184 = vmatmul.bf16.gmra.mxu0 %v2124
        %v2185 = vpop.f32.mrf.mxu0
        %v2186 = vadd.f32 0.0, %v2185
        %v2187 = vpop.f32.mrf.mxu0
        %v2188 = vadd.f32 0.0, %v2187
        %2189 = vmatmul.bf16.gmra.mxu0 %v2127
        %v2190 = vpop.f32.mrf.mxu0
        %v2191 = vadd.f32 0.0, %v2190
        %v2192 = vpop.f32.mrf.mxu0
        %v2193 = vadd.f32 0.0, %v2192
        %2194 = vmatmul.bf16.gmra.mxu0 %v2130
        %v2195 = vpop.f32.mrf.mxu0
        %v2196 = vadd.f32 0.0, %v2195
        %v2197 = vpop.f32.mrf.mxu0
        %v2198 = vadd.f32 0.0, %v2197
        %2199 = vmatmul.bf16.gmra.mxu0 %v2133
        %v2200 = vpop.f32.mrf.mxu0
        %v2201 = vadd.f32 0.0, %v2200
        %v2202 = vpop.f32.mrf.mxu0
        %v2203 = vadd.f32 0.0, %v2202
        %2204 = vmatmul.bf16.gmra.mxu0 %v2136
        %v2205 = vpop.f32.mrf.mxu0
        %v2206 = vadd.f32 0.0, %v2205
        %v2207 = vpop.f32.mrf.mxu0
        %v2208 = vadd.f32 0.0, %v2207
        %2209 = vmatmul.bf16.gmra.mxu0 %v2139
        %v2210 = vpop.f32.mrf.mxu0
        %v2211 = vadd.f32 0.0, %v2210
        %v2212 = vpop.f32.mrf.mxu0
        %v2213 = vadd.f32 0.0, %v2212
        %2214 = vmatmul.bf16.gmra.mxu0 %v2142
        %v2215 = vpop.f32.mrf.mxu0
        %v2216 = vadd.f32 0.0, %v2215
        %v2217 = vpop.f32.mrf.mxu0
        %v2218 = vadd.f32 0.0, %v2217
        %2219 = vmatmul.bf16.gmra.mxu0 %v2145
        %v2220 = vpop.f32.mrf.mxu0
        %v2221 = vadd.f32 0.0, %v2220
        %v2222 = vpop.f32.mrf.mxu0
        %v2223 = vadd.f32 0.0, %v2222
        %2224 = vmatmul.bf16.gmra.mxu0 %v2148
        %v2225 = vpop.f32.mrf.mxu0
        %v2226 = vadd.f32 0.0, %v2225
        %v2227 = vpop.f32.mrf.mxu0
        %v2228 = vadd.f32 0.0, %v2227
        %2229 = vmatmul.bf16.gmra.mxu0 %v2151
        %v2230 = vpop.f32.mrf.mxu0
        %v2231 = vadd.f32 0.0, %v2230
        %v2232 = vpop.f32.mrf.mxu0
        %v2233 = vadd.f32 0.0, %v2232
        %2234 = vmatmul.bf16.gmra.mxu0 %v2154
        %v2235 = vpop.f32.mrf.mxu0
        %v2236 = vadd.f32 0.0, %v2235
        %v2237 = vpop.f32.mrf.mxu0
        %v2238 = vadd.f32 0.0, %v2237
        %2239 = vmatmul.bf16.gmra.mxu0 %v2157
        %v2240 = vpop.f32.mrf.mxu0
        %v2241 = vadd.f32 0.0, %v2240
        %v2242 = vpop.f32.mrf.mxu0
        %v2243 = vadd.f32 0.0, %v2242
        %2244 = vmatmul.bf16.gmra.mxu0 %v2160
        %v2245 = vpop.f32.mrf.mxu0
        %v2246 = vadd.f32 0.0, %v2245
        %v2247 = vpop.f32.mrf.mxu0
        %v2248 = vadd.f32 0.0, %v2247
        %2249 = vmatmul.bf16.gmra.mxu0 %v2163
        %v2250 = vpop.f32.mrf.mxu0
        %v2251 = vadd.f32 0.0, %v2250
        %v2252 = vpop.f32.mrf.mxu0
        %v2253 = vadd.f32 0.0, %v2252
        %2254 = vmatmul.bf16.gmra.mxu0 %v2166
        %v2255 = vpop.f32.mrf.mxu0
        %v2256 = vadd.f32 0.0, %v2255
        %v2257 = vpop.f32.mrf.mxu0
        %v2258 = vadd.f32 0.0, %v2257
        %2259 = vdwg.mxu0
        %v2260 = vmax.f32 %v2181, %v2191
        %v2261 = vmax.f32 %v2183, %v2193
        %v2262 = vmax.f32 %v2186, %v2196
        %v2263 = vmax.f32 %v2188, %v2198
        %v2264 = vmax.f32 %v2260, %v2201
        %v2265 = vmax.f32 %v2261, %v2203
        %v2266 = vmax.f32 %v2262, %v2206
        %v2267 = vmax.f32 %v2263, %v2208
        %v2268 = vmax.f32 %v2264, %v2211
        %v2269 = vmax.f32 %v2265, %v2213
        %v2270 = vmax.f32 %v2266, %v2216
        %v2271 = vmax.f32 %v2267, %v2218
        %v2272 = vmax.f32 %v2268, %v2221
        %v2273 = vmax.f32 %v2269, %v2223
        %v2274 = vmax.f32 %v2270, %v2226
        %v2275 = vmax.f32 %v2271, %v2228
        %v2276 = vmax.f32 %v2272, %v2231
        %v2277 = vmax.f32 %v2273, %v2233
        %v2278 = vmax.f32 %v2274, %v2236
        %v2279 = vmax.f32 %v2275, %v2238
        %v2280 = vmax.f32 %v2276, %v2241
        %v2281 = vmax.f32 %v2277, %v2243
        %v2282 = vmax.f32 %v2278, %v2246
        %v2283 = vmax.f32 %v2279, %v2248
        %v2284 = vmax.f32 %v2280, %v2251
        %v2285 = vmax.f32 %v2281, %v2253
        %v2286 = vmax.f32 %v2282, %v2256
        %v2287 = vmax.f32 %v2283, %v2258
        %v2288 = vmax.f32 %v2284, %v2285
        %v2289 = vmax.f32 %v2286, %v2287
        %v2290 = vmax.f32 %v2288, %v2289
        %v2291 = vrot.slane %v2290, 4
        %v2292 = vmax.f32 %v2290, %v2291
        %v2293 = vrot.slane %v2292, 2
        %v2294 = vmax.f32 %v2292, %v2293
        %v2295 = vrot.slane %v2294, 1
        %v2296 = vmax.f32 %v2294, %v2295
        %v2297 = vsub.f32 %v2181, %v2296
        %v2298 = vsub.f32 %v2183, %v2296
        %v2299 = vsub.f32 %v2186, %v2296
        %v2300 = vsub.f32 %v2188, %v2296
        %v2301 = vsub.f32 %v2191, %v2296
        %v2302 = vsub.f32 %v2193, %v2296
        %v2303 = vsub.f32 %v2196, %v2296
        %v2304 = vsub.f32 %v2198, %v2296
        %v2305 = vsub.f32 %v2201, %v2296
        %v2306 = vsub.f32 %v2203, %v2296
        %v2307 = vsub.f32 %v2206, %v2296
        %v2308 = vsub.f32 %v2208, %v2296
        %v2309 = vsub.f32 %v2211, %v2296
        %v2310 = vsub.f32 %v2213, %v2296
        %v2311 = vsub.f32 %v2216, %v2296
        %v2312 = vsub.f32 %v2218, %v2296
        %v2313 = vsub.f32 %v2221, %v2296
        %v2314 = vsub.f32 %v2223, %v2296
        %v2315 = vsub.f32 %v2226, %v2296
        %v2316 = vsub.f32 %v2228, %v2296
        %v2317 = vsub.f32 %v2231, %v2296
        %v2318 = vsub.f32 %v2233, %v2296
        %v2319 = vsub.f32 %v2236, %v2296
        %v2320 = vsub.f32 %v2238, %v2296
        %v2321 = vsub.f32 %v2241, %v2296
        %v2322 = vsub.f32 %v2243, %v2296
        %v2323 = vsub.f32 %v2246, %v2296
        %v2324 = vsub.f32 %v2248, %v2296
        %v2325 = vsub.f32 %v2251, %v2296
        %v2326 = vsub.f32 %v2253, %v2296
        %v2327 = vsub.f32 %v2256, %v2296
        %v2328 = vsub.f32 %v2258, %v2296
        %v2329 = vmul.f32 %v2297, 1.442695
        %v2330 = vpow.pop %v2329
        %v2331 = vmul.f32 %v2298, 1.442695
        %v2332 = vpow.pop %v2331
        %v2333 = vmul.f32 %v2299, 1.442695
        %v2334 = vpow.pop %v2333
        %v2335 = vmul.f32 %v2300, 1.442695
        %v2336 = vpow.pop %v2335
        %v2337 = vmul.f32 %v2301, 1.442695
        %v2338 = vpow.pop %v2337
        %v2339 = vmul.f32 %v2302, 1.442695
        %v2340 = vpow.pop %v2339
        %v2341 = vmul.f32 %v2303, 1.442695
        %v2342 = vpow.pop %v2341
        %v2343 = vmul.f32 %v2304, 1.442695
        %v2344 = vpow.pop %v2343
        %v2345 = vmul.f32 %v2305, 1.442695
        %v2346 = vpow.pop %v2345
        %v2347 = vmul.f32 %v2306, 1.442695
        %v2348 = vpow.pop %v2347
        %v2349 = vmul.f32 %v2307, 1.442695
        %v2350 = vpow.pop %v2349
        %v2351 = vmul.f32 %v2308, 1.442695
        %v2352 = vpow.pop %v2351
        %v2353 = vmul.f32 %v2309, 1.442695
        %v2354 = vpow.pop %v2353
        %v2355 = vmul.f32 %v2310, 1.442695
        %v2356 = vpow.pop %v2355
        %v2357 = vmul.f32 %v2311, 1.442695
        %v2358 = vpow.pop %v2357
        %v2359 = vmul.f32 %v2312, 1.442695
        %v2360 = vpow.pop %v2359
        %v2361 = vmul.f32 %v2313, 1.442695
        %v2362 = vpow.pop %v2361
        %v2363 = vmul.f32 %v2314, 1.442695
        %v2364 = vpow.pop %v2363
        %v2365 = vmul.f32 %v2315, 1.442695
        %v2366 = vpow.pop %v2365
        %v2367 = vmul.f32 %v2316, 1.442695
        %v2368 = vpow.pop %v2367
        %v2369 = vmul.f32 %v2317, 1.442695
        %v2370 = vpow.pop %v2369
        %v2371 = vmul.f32 %v2318, 1.442695
        %v2372 = vpow.pop %v2371
        %v2373 = vmul.f32 %v2319, 1.442695
        %v2374 = vpow.pop %v2373
        %v2375 = vmul.f32 %v2320, 1.442695
        %v2376 = vpow.pop %v2375
        %v2377 = vmul.f32 %v2321, 1.442695
        %v2378 = vpow.pop %v2377
        %v2379 = vmul.f32 %v2322, 1.442695
        %v2380 = vpow.pop %v2379
        %v2381 = vmul.f32 %v2323, 1.442695
        %v2382 = vpow.pop %v2381
        %v2383 = vmul.f32 %v2324, 1.442695
        %v2384 = vpow.pop %v2383
        %v2385 = vmul.f32 %v2325, 1.442695
        %v2386 = vpow.pop %v2385
        %v2387 = vmul.f32 %v2326, 1.442695
        %v2388 = vpow.pop %v2387
        %v2389 = vmul.f32 %v2327, 1.442695
        %v2390 = vpow.pop %v2389
        %v2391 = vmul.f32 %v2328, 1.442695
        %v2392 = vpow.pop %v2391
        %v2393 = vpack.c.bf16 %v2332, %v2330
        %v2394 = vpack.c.bf16 %v2336, %v2334
        %v2395 = vpack.c.bf16 %v2340, %v2338
        %v2396 = vpack.c.bf16 %v2344, %v2342
        %v2397 = vpack.c.bf16 %v2348, %v2346
        %v2398 = vpack.c.bf16 %v2352, %v2350
        %v2399 = vpack.c.bf16 %v2356, %v2354
        %v2400 = vpack.c.bf16 %v2360, %v2358
        %v2401 = vpack.c.bf16 %v2364, %v2362
        %v2402 = vpack.c.bf16 %v2368, %v2366
        %v2403 = vpack.c.bf16 %v2372, %v2370
        %v2404 = vpack.c.bf16 %v2376, %v2374
        %v2405 = vpack.c.bf16 %v2380, %v2378
        %v2406 = vpack.c.bf16 %v2384, %v2382
        %v2407 = vpack.c.bf16 %v2388, %v2386
        %v2408 = vpack.c.bf16 %v2392, %v2390
        %v2409 = vunpack.c.l.bf16 %v2393
        %v2410 = vunpack.c.h.bf16 %v2393
        %v2411 = vunpack.c.l.bf16 %v2394
        %v2412 = vunpack.c.h.bf16 %v2394
        %v2413 = vunpack.c.l.bf16 %v2395
        %v2414 = vunpack.c.h.bf16 %v2395
        %v2415 = vunpack.c.l.bf16 %v2396
        %v2416 = vunpack.c.h.bf16 %v2396
        %v2417 = vunpack.c.l.bf16 %v2397
        %v2418 = vunpack.c.h.bf16 %v2397
        %v2419 = vunpack.c.l.bf16 %v2398
        %v2420 = vunpack.c.h.bf16 %v2398
        %v2421 = vunpack.c.l.bf16 %v2399
        %v2422 = vunpack.c.h.bf16 %v2399
        %v2423 = vunpack.c.l.bf16 %v2400
        %v2424 = vunpack.c.h.bf16 %v2400
        %v2425 = vunpack.c.l.bf16 %v2401
        %v2426 = vunpack.c.h.bf16 %v2401
        %v2427 = vunpack.c.l.bf16 %v2402
        %v2428 = vunpack.c.h.bf16 %v2402
        %v2429 = vunpack.c.l.bf16 %v2403
        %v2430 = vunpack.c.h.bf16 %v2403
        %v2431 = vunpack.c.l.bf16 %v2404
        %v2432 = vunpack.c.h.bf16 %v2404
        %v2433 = vunpack.c.l.bf16 %v2405
        %v2434 = vunpack.c.h.bf16 %v2405
        %v2435 = vunpack.c.l.bf16 %v2406
        %v2436 = vunpack.c.h.bf16 %v2406
        %v2437 = vunpack.c.l.bf16 %v2407
        %v2438 = vunpack.c.h.bf16 %v2407
        %v2439 = vunpack.c.l.bf16 %v2408
        %v2440 = vunpack.c.h.bf16 %v2408
        %v2441 = vadd.f32 %v2409, %v2410
        %v2442 = vadd.f32 %v2441, %v2411
        %v2443 = vadd.f32 %v2442, %v2412
        %v2444 = vadd.f32 %v2443, %v2413
        %v2445 = vadd.f32 %v2444, %v2414
        %v2446 = vadd.f32 %v2445, %v2415
        %v2447 = vadd.f32 %v2446, %v2416
        %v2448 = vadd.f32 %v2447, %v2417
        %v2449 = vadd.f32 %v2448, %v2418
        %v2450 = vadd.f32 %v2449, %v2419
        %v2451 = vadd.f32 %v2450, %v2420
        %v2452 = vadd.f32 %v2451, %v2421
        %v2453 = vadd.f32 %v2452, %v2422
        %v2454 = vadd.f32 %v2453, %v2423
        %v2455 = vadd.f32 %v2454, %v2424
        %v2456 = vadd.f32 %v2455, %v2425
        %v2457 = vadd.f32 %v2456, %v2426
        %v2458 = vadd.f32 %v2457, %v2427
        %v2459 = vadd.f32 %v2458, %v2428
        %v2460 = vadd.f32 %v2459, %v2429
        %v2461 = vadd.f32 %v2460, %v2430
        %v2462 = vadd.f32 %v2461, %v2431
        %v2463 = vadd.f32 %v2462, %v2432
        %v2464 = vadd.f32 %v2463, %v2433
        %v2465 = vadd.f32 %v2464, %v2434
        %v2466 = vadd.f32 %v2465, %v2435
        %v2467 = vadd.f32 %v2466, %v2436
        %v2468 = vadd.f32 %v2467, %v2437
        %v2469 = vadd.f32 %v2468, %v2438
        %v2470 = vadd.f32 %v2469, %v2439
        %v2471 = vadd.f32 %v2470, %v2440
        %v2472 = vrot.slane %v2471, 4
        %v2473 = vadd.f32 %v2471, %v2472
        %v2474 = vrot.slane %v2473, 2
        %v2475 = vadd.f32 %v2473, %v2474
        %v2476 = vrot.slane %v2475, 1
        %v2477 = vadd.f32 %v2475, %v2476
        %2478 = vmatpush.bf16.msra.mxu0 %v2400
        %2479 = vmatpush.bf16.msra.mxu0 %v2399
        %2480 = vmatpush.bf16.msra.mxu0 %v2398
        %2481 = vmatpush.bf16.msra.mxu0 %v2397
        %2482 = vmatpush.bf16.msra.mxu0 %v2396
        %2483 = vmatpush.bf16.msra.mxu0 %v2395
        %2484 = vmatpush.bf16.msra.mxu0 %v2394
        %2485 = vmatpush.bf16.msra.mxu0 %v2393
        %2486 = vmatmul.bf16.gmra.mxu0 %v2092
        %v2487 = vpop.f32.mrf.mxu0
        %v2488 = vadd.f32 0.0, %v2487
        %v2489 = vpop.f32.mrf.mxu0
        %2490 = vdwg.mxu0
        %2491 = vmatpush.bf16.msra.mxu0 %v2408
        %2492 = vmatpush.bf16.msra.mxu0 %v2407
        %2493 = vmatpush.bf16.msra.mxu0 %v2406
        %2494 = vmatpush.bf16.msra.mxu0 %v2405
        %2495 = vmatpush.bf16.msra.mxu0 %v2404
        %2496 = vmatpush.bf16.msra.mxu0 %v2403
        %2497 = vmatpush.bf16.msra.mxu0 %v2402
        %2498 = vmatpush.bf16.msra.mxu0 %v2401
        %2499 = vmatmul.bf16.gmra.mxu0 %v2093
        %v2500 = vpop.f32.mrf.mxu0
        %v2501 = vadd.f32 %v2488, %v2500
        %v2502 = vpop.f32.mrf.mxu0
        %2503 = vdwg.mxu0
        %v2504 = vrcp.pop %v2477
        %v2505 = vmul.f32 %v2501, %v2504
        %2506 = vst [vmem:[#allocation3 + $0x20] sm:$0xff] %v2505
        %v2507 = vld [vmem:[#allocation2 + $0x28] sm:$0xff]
        %v2508 = vpack.c.bf16 %v2507, %v2507
        %v2510 = vsel %vm643, %v2508, 0
        %2512 = vmatpush.bf16.msra.mxu0 0
        %2513 = vmatpush.bf16.msra.mxu0 0
        %2514 = vmatpush.bf16.msra.mxu0 0
        %2515 = vmatpush.bf16.msra.mxu0 0
        %2516 = vmatpush.bf16.msra.mxu0 0
        %2517 = vmatpush.bf16.msra.mxu0 0
        %2518 = vmatpush.bf16.msra.mxu0 0
        %2519 = vmatpush.bf16.msra.mxu0 %v2510
        %2520 = vmatmul.bf16.gmra.mxu0 %v2121
        %v2521 = vpop.f32.mrf.mxu0
        %v2522 = vadd.f32 0.0, %v2521
        %v2523 = vpop.f32.mrf.mxu0
        %v2524 = vadd.f32 0.0, %v2523
        %2525 = vmatmul.bf16.gmra.mxu0 %v2124
        %v2526 = vpop.f32.mrf.mxu0
        %v2527 = vadd.f32 0.0, %v2526
        %v2528 = vpop.f32.mrf.mxu0
        %v2529 = vadd.f32 0.0, %v2528
        %2530 = vmatmul.bf16.gmra.mxu0 %v2127
        %v2531 = vpop.f32.mrf.mxu0
        %v2532 = vadd.f32 0.0, %v2531
        %v2533 = vpop.f32.mrf.mxu0
        %v2534 = vadd.f32 0.0, %v2533
        %2535 = vmatmul.bf16.gmra.mxu0 %v2130
        %v2536 = vpop.f32.mrf.mxu0
        %v2537 = vadd.f32 0.0, %v2536
        %v2538 = vpop.f32.mrf.mxu0
        %v2539 = vadd.f32 0.0, %v2538
        %2540 = vmatmul.bf16.gmra.mxu0 %v2133
        %v2541 = vpop.f32.mrf.mxu0
        %v2542 = vadd.f32 0.0, %v2541
        %v2543 = vpop.f32.mrf.mxu0
        %v2544 = vadd.f32 0.0, %v2543
        %2545 = vmatmul.bf16.gmra.mxu0 %v2136
        %v2546 = vpop.f32.mrf.mxu0
        %v2547 = vadd.f32 0.0, %v2546
        %v2548 = vpop.f32.mrf.mxu0
        %v2549 = vadd.f32 0.0, %v2548
        %2550 = vmatmul.bf16.gmra.mxu0 %v2139
        %v2551 = vpop.f32.mrf.mxu0
        %v2552 = vadd.f32 0.0, %v2551
        %v2553 = vpop.f32.mrf.mxu0
        %v2554 = vadd.f32 0.0, %v2553
        %2555 = vmatmul.bf16.gmra.mxu0 %v2142
        %v2556 = vpop.f32.mrf.mxu0
        %v2557 = vadd.f32 0.0, %v2556
        %v2558 = vpop.f32.mrf.mxu0
        %v2559 = vadd.f32 0.0, %v2558
        %2560 = vmatmul.bf16.gmra.mxu0 %v2145
        %v2561 = vpop.f32.mrf.mxu0
        %v2562 = vadd.f32 0.0, %v2561
        %v2563 = vpop.f32.mrf.mxu0
        %v2564 = vadd.f32 0.0, %v2563
        %2565 = vmatmul.bf16.gmra.mxu0 %v2148
        %v2566 = vpop.f32.mrf.mxu0
        %v2567 = vadd.f32 0.0, %v2566
        %v2568 = vpop.f32.mrf.mxu0
        %v2569 = vadd.f32 0.0, %v2568
        %2570 = vmatmul.bf16.gmra.mxu0 %v2151
        %v2571 = vpop.f32.mrf.mxu0
        %v2572 = vadd.f32 0.0, %v2571
        %v2573 = vpop.f32.mrf.mxu0
        %v2574 = vadd.f32 0.0, %v2573
        %2575 = vmatmul.bf16.gmra.mxu0 %v2154
        %v2576 = vpop.f32.mrf.mxu0
        %v2577 = vadd.f32 0.0, %v2576
        %v2578 = vpop.f32.mrf.mxu0
        %v2579 = vadd.f32 0.0, %v2578
        %2580 = vmatmul.bf16.gmra.mxu0 %v2157
        %v2581 = vpop.f32.mrf.mxu0
        %v2582 = vadd.f32 0.0, %v2581
        %v2583 = vpop.f32.mrf.mxu0
        %v2584 = vadd.f32 0.0, %v2583
        %2585 = vmatmul.bf16.gmra.mxu0 %v2160
        %v2586 = vpop.f32.mrf.mxu0
        %v2587 = vadd.f32 0.0, %v2586
        %v2588 = vpop.f32.mrf.mxu0
        %v2589 = vadd.f32 0.0, %v2588
        %2590 = vmatmul.bf16.gmra.mxu0 %v2163
        %v2591 = vpop.f32.mrf.mxu0
        %v2592 = vadd.f32 0.0, %v2591
        %v2593 = vpop.f32.mrf.mxu0
        %v2594 = vadd.f32 0.0, %v2593
        %2595 = vmatmul.bf16.gmra.mxu0 %v2166
        %v2596 = vpop.f32.mrf.mxu0
        %v2597 = vadd.f32 0.0, %v2596
        %v2598 = vpop.f32.mrf.mxu0
        %v2599 = vadd.f32 0.0, %v2598
        %2600 = vdwg.mxu0
        %v2601 = vmax.f32 %v2522, %v2532
        %v2602 = vmax.f32 %v2524, %v2534
        %v2603 = vmax.f32 %v2527, %v2537
        %v2604 = vmax.f32 %v2529, %v2539
        %v2605 = vmax.f32 %v2601, %v2542
        %v2606 = vmax.f32 %v2602, %v2544
        %v2607 = vmax.f32 %v2603, %v2547
        %v2608 = vmax.f32 %v2604, %v2549
        %v2609 = vmax.f32 %v2605, %v2552
        %v2610 = vmax.f32 %v2606, %v2554
        %v2611 = vmax.f32 %v2607, %v2557
        %v2612 = vmax.f32 %v2608, %v2559
        %v2613 = vmax.f32 %v2609, %v2562
        %v2614 = vmax.f32 %v2610, %v2564
        %v2615 = vmax.f32 %v2611, %v2567
        %v2616 = vmax.f32 %v2612, %v2569
        %v2617 = vmax.f32 %v2613, %v2572
        %v2618 = vmax.f32 %v2614, %v2574
        %v2619 = vmax.f32 %v2615, %v2577
        %v2620 = vmax.f32 %v2616, %v2579
        %v2621 = vmax.f32 %v2617, %v2582
        %v2622 = vmax.f32 %v2618, %v2584
        %v2623 = vmax.f32 %v2619, %v2587
        %v2624 = vmax.f32 %v2620, %v2589
        %v2625 = vmax.f32 %v2621, %v2592
        %v2626 = vmax.f32 %v2622, %v2594
        %v2627 = vmax.f32 %v2623, %v2597
        %v2628 = vmax.f32 %v2624, %v2599
        %v2629 = vmax.f32 %v2625, %v2626
        %v2630 = vmax.f32 %v2627, %v2628
        %v2631 = vmax.f32 %v2629, %v2630
        %v2632 = vrot.slane %v2631, 4
        %v2633 = vmax.f32 %v2631, %v2632
        %v2634 = vrot.slane %v2633, 2
        %v2635 = vmax.f32 %v2633, %v2634
        %v2636 = vrot.slane %v2635, 1
        %v2637 = vmax.f32 %v2635, %v2636
        %v2638 = vsub.f32 %v2522, %v2637
        %v2639 = vsub.f32 %v2524, %v2637
        %v2640 = vsub.f32 %v2527, %v2637
        %v2641 = vsub.f32 %v2529, %v2637
        %v2642 = vsub.f32 %v2532, %v2637
        %v2643 = vsub.f32 %v2534, %v2637
        %v2644 = vsub.f32 %v2537, %v2637
        %v2645 = vsub.f32 %v2539, %v2637
        %v2646 = vsub.f32 %v2542, %v2637
        %v2647 = vsub.f32 %v2544, %v2637
        %v2648 = vsub.f32 %v2547, %v2637
        %v2649 = vsub.f32 %v2549, %v2637
        %v2650 = vsub.f32 %v2552, %v2637
        %v2651 = vsub.f32 %v2554, %v2637
        %v2652 = vsub.f32 %v2557, %v2637
        %v2653 = vsub.f32 %v2559, %v2637
        %v2654 = vsub.f32 %v2562, %v2637
        %v2655 = vsub.f32 %v2564, %v2637
        %v2656 = vsub.f32 %v2567, %v2637
        %v2657 = vsub.f32 %v2569, %v2637
        %v2658 = vsub.f32 %v2572, %v2637
        %v2659 = vsub.f32 %v2574, %v2637
        %v2660 = vsub.f32 %v2577, %v2637
        %v2661 = vsub.f32 %v2579, %v2637
        %v2662 = vsub.f32 %v2582, %v2637
        %v2663 = vsub.f32 %v2584, %v2637
        %v2664 = vsub.f32 %v2587, %v2637
        %v2665 = vsub.f32 %v2589, %v2637
        %v2666 = vsub.f32 %v2592, %v2637
        %v2667 = vsub.f32 %v2594, %v2637
        %v2668 = vsub.f32 %v2597, %v2637
        %v2669 = vsub.f32 %v2599, %v2637
        %v2670 = vmul.f32 %v2638, 1.442695
        %v2671 = vpow.pop %v2670
        %v2672 = vmul.f32 %v2639, 1.442695
        %v2673 = vpow.pop %v2672
        %v2674 = vmul.f32 %v2640, 1.442695
        %v2675 = vpow.pop %v2674
        %v2676 = vmul.f32 %v2641, 1.442695
        %v2677 = vpow.pop %v2676
        %v2678 = vmul.f32 %v2642, 1.442695
        %v2679 = vpow.pop %v2678
        %v2680 = vmul.f32 %v2643, 1.442695
        %v2681 = vpow.pop %v2680
        %v2682 = vmul.f32 %v2644, 1.442695
        %v2683 = vpow.pop %v2682
        %v2684 = vmul.f32 %v2645, 1.442695
        %v2685 = vpow.pop %v2684
        %v2686 = vmul.f32 %v2646, 1.442695
        %v2687 = vpow.pop %v2686
        %v2688 = vmul.f32 %v2647, 1.442695
        %v2689 = vpow.pop %v2688
        %v2690 = vmul.f32 %v2648, 1.442695
        %v2691 = vpow.pop %v2690
        %v2692 = vmul.f32 %v2649, 1.442695
        %v2693 = vpow.pop %v2692
        %v2694 = vmul.f32 %v2650, 1.442695
        %v2695 = vpow.pop %v2694
        %v2696 = vmul.f32 %v2651, 1.442695
        %v2697 = vpow.pop %v2696
        %v2698 = vmul.f32 %v2652, 1.442695
        %v2699 = vpow.pop %v2698
        %v2700 = vmul.f32 %v2653, 1.442695
        %v2701 = vpow.pop %v2700
        %v2702 = vmul.f32 %v2654, 1.442695
        %v2703 = vpow.pop %v2702
        %v2704 = vmul.f32 %v2655, 1.442695
        %v2705 = vpow.pop %v2704
        %v2706 = vmul.f32 %v2656, 1.442695
        %v2707 = vpow.pop %v2706
        %v2708 = vmul.f32 %v2657, 1.442695
        %v2709 = vpow.pop %v2708
        %v2710 = vmul.f32 %v2658, 1.442695
        %v2711 = vpow.pop %v2710
        %v2712 = vmul.f32 %v2659, 1.442695
        %v2713 = vpow.pop %v2712
        %v2714 = vmul.f32 %v2660, 1.442695
        %v2715 = vpow.pop %v2714
        %v2716 = vmul.f32 %v2661, 1.442695
        %v2717 = vpow.pop %v2716
        %v2718 = vmul.f32 %v2662, 1.442695
        %v2719 = vpow.pop %v2718
        %v2720 = vmul.f32 %v2663, 1.442695
        %v2721 = vpow.pop %v2720
        %v2722 = vmul.f32 %v2664, 1.442695
        %v2723 = vpow.pop %v2722
        %v2724 = vmul.f32 %v2665, 1.442695
        %v2725 = vpow.pop %v2724
        %v2726 = vmul.f32 %v2666, 1.442695
        %v2727 = vpow.pop %v2726
        %v2728 = vmul.f32 %v2667, 1.442695
        %v2729 = vpow.pop %v2728
        %v2730 = vmul.f32 %v2668, 1.442695
        %v2731 = vpow.pop %v2730
        %v2732 = vmul.f32 %v2669, 1.442695
        %v2733 = vpow.pop %v2732
        %v2734 = vpack.c.bf16 %v2673, %v2671
        %v2735 = vpack.c.bf16 %v2677, %v2675
        %v2736 = vpack.c.bf16 %v2681, %v2679
        %v2737 = vpack.c.bf16 %v2685, %v2683
        %v2738 = vpack.c.bf16 %v2689, %v2687
        %v2739 = vpack.c.bf16 %v2693, %v2691
        %v2740 = vpack.c.bf16 %v2697, %v2695
        %v2741 = vpack.c.bf16 %v2701, %v2699
        %v2742 = vpack.c.bf16 %v2705, %v2703
        %v2743 = vpack.c.bf16 %v2709, %v2707
        %v2744 = vpack.c.bf16 %v2713, %v2711
        %v2745 = vpack.c.bf16 %v2717, %v2715
        %v2746 = vpack.c.bf16 %v2721, %v2719
        %v2747 = vpack.c.bf16 %v2725, %v2723
        %v2748 = vpack.c.bf16 %v2729, %v2727
        %v2749 = vpack.c.bf16 %v2733, %v2731
        %v2750 = vunpack.c.l.bf16 %v2734
        %v2751 = vunpack.c.h.bf16 %v2734
        %v2752 = vunpack.c.l.bf16 %v2735
        %v2753 = vunpack.c.h.bf16 %v2735
        %v2754 = vunpack.c.l.bf16 %v2736
        %v2755 = vunpack.c.h.bf16 %v2736
        %v2756 = vunpack.c.l.bf16 %v2737
        %v2757 = vunpack.c.h.bf16 %v2737
        %v2758 = vunpack.c.l.bf16 %v2738
        %v2759 = vunpack.c.h.bf16 %v2738
        %v2760 = vunpack.c.l.bf16 %v2739
        %v2761 = vunpack.c.h.bf16 %v2739
        %v2762 = vunpack.c.l.bf16 %v2740
        %v2763 = vunpack.c.h.bf16 %v2740
        %v2764 = vunpack.c.l.bf16 %v2741
        %v2765 = vunpack.c.h.bf16 %v2741
        %v2766 = vunpack.c.l.bf16 %v2742
        %v2767 = vunpack.c.h.bf16 %v2742
        %v2768 = vunpack.c.l.bf16 %v2743
        %v2769 = vunpack.c.h.bf16 %v2743
        %v2770 = vunpack.c.l.bf16 %v2744
        %v2771 = vunpack.c.h.bf16 %v2744
        %v2772 = vunpack.c.l.bf16 %v2745
        %v2773 = vunpack.c.h.bf16 %v2745
        %v2774 = vunpack.c.l.bf16 %v2746
        %v2775 = vunpack.c.h.bf16 %v2746
        %v2776 = vunpack.c.l.bf16 %v2747
        %v2777 = vunpack.c.h.bf16 %v2747
        %v2778 = vunpack.c.l.bf16 %v2748
        %v2779 = vunpack.c.h.bf16 %v2748
        %v2780 = vunpack.c.l.bf16 %v2749
        %v2781 = vunpack.c.h.bf16 %v2749
        %v2782 = vadd.f32 %v2750, %v2751
        %v2783 = vadd.f32 %v2782, %v2752
        %v2784 = vadd.f32 %v2783, %v2753
        %v2785 = vadd.f32 %v2784, %v2754
        %v2786 = vadd.f32 %v2785, %v2755
        %v2787 = vadd.f32 %v2786, %v2756
        %v2788 = vadd.f32 %v2787, %v2757
        %v2789 = vadd.f32 %v2788, %v2758
        %v2790 = vadd.f32 %v2789, %v2759
        %v2791 = vadd.f32 %v2790, %v2760
        %v2792 = vadd.f32 %v2791, %v2761
        %v2793 = vadd.f32 %v2792, %v2762
        %v2794 = vadd.f32 %v2793, %v2763
        %v2795 = vadd.f32 %v2794, %v2764
        %v2796 = vadd.f32 %v2795, %v2765
        %v2797 = vadd.f32 %v2796, %v2766
        %v2798 = vadd.f32 %v2797, %v2767
        %v2799 = vadd.f32 %v2798, %v2768
        %v2800 = vadd.f32 %v2799, %v2769
        %v2801 = vadd.f32 %v2800, %v2770
        %v2802 = vadd.f32 %v2801, %v2771
        %v2803 = vadd.f32 %v2802, %v2772
        %v2804 = vadd.f32 %v2803, %v2773
        %v2805 = vadd.f32 %v2804, %v2774
        %v2806 = vadd.f32 %v2805, %v2775
        %v2807 = vadd.f32 %v2806, %v2776
        %v2808 = vadd.f32 %v2807, %v2777
        %v2809 = vadd.f32 %v2808, %v2778
        %v2810 = vadd.f32 %v2809, %v2779
        %v2811 = vadd.f32 %v2810, %v2780
        %v2812 = vadd.f32 %v2811, %v2781
        %v2813 = vrot.slane %v2812, 4
        %v2814 = vadd.f32 %v2812, %v2813
        %v2815 = vrot.slane %v2814, 2
        %v2816 = vadd.f32 %v2814, %v2815
        %v2817 = vrot.slane %v2816, 1
        %v2818 = vadd.f32 %v2816, %v2817
        %2819 = vmatpush.bf16.msra.mxu0 %v2741
        %2820 = vmatpush.bf16.msra.mxu0 %v2740
        %2821 = vmatpush.bf16.msra.mxu0 %v2739
        %2822 = vmatpush.bf16.msra.mxu0 %v2738
        %2823 = vmatpush.bf16.msra.mxu0 %v2737
        %2824 = vmatpush.bf16.msra.mxu0 %v2736
        %2825 = vmatpush.bf16.msra.mxu0 %v2735
        %2826 = vmatpush.bf16.msra.mxu0 %v2734
        %2827 = vmatmul.bf16.gmra.mxu0 %v2092
        %v2828 = vpop.f32.mrf.mxu0
        %v2829 = vadd.f32 0.0, %v2828
        %v2830 = vpop.f32.mrf.mxu0
        %2831 = vdwg.mxu0
        %2832 = vmatpush.bf16.msra.mxu0 %v2749
        %2833 = vmatpush.bf16.msra.mxu0 %v2748
        %2834 = vmatpush.bf16.msra.mxu0 %v2747
        %2835 = vmatpush.bf16.msra.mxu0 %v2746
        %2836 = vmatpush.bf16.msra.mxu0 %v2745
        %2837 = vmatpush.bf16.msra.mxu0 %v2744
        %2838 = vmatpush.bf16.msra.mxu0 %v2743
        %2839 = vmatpush.bf16.msra.mxu0 %v2742
        %2840 = vmatmul.bf16.gmra.mxu0 %v2093
        %v2841 = vpop.f32.mrf.mxu0
        %v2842 = vadd.f32 %v2829, %v2841
        %v2843 = vpop.f32.mrf.mxu0
        %2844 = vdwg.mxu0
        %v2845 = vrcp.pop %v2818
        %v2846 = vmul.f32 %v2842, %v2845
        %2847 = vst [vmem:[#allocation3 + $0x28] sm:$0xff] %v2846
        %v2848 = vld [vmem:[#allocation2 + $0x70] sm:$0xff]
        %v2849 = vld [vmem:[#allocation2 + $0x78] sm:$0xff]
        %v2850 = vpack.c.bf16 %v2848, %v2848
        %v2851 = vpack.c.bf16 %v2849, %v2849
        %v2852 = vld [vmem:[#allocation2 + $0xb0] sm:$0xff]
        %v2853 = vld [vmem:[#allocation2 + $0xb8] sm:$0xff]
        %v2854 = vpack.c.bf16 %v2852, %v2852
        %v2855 = vpack.c.bf16 %v2853, %v2853
        %v2856 = vld [vmem:[#allocation2 + $0x30] sm:$0xff]
        %v2857 = vpack.c.bf16 %v2856, %v2856
        %2858 = vxpose.binary.xlu0.c.b16.start [1/16] %v2851, %v2850, 128
        %2859 = vxpose.binary.xlu0.c.b16.cont [2/16] 0, 0, 128
        %2860 = vxpose.binary.xlu0.c.b16.cont [3/16] 0, 0, 128
        %2861 = vxpose.binary.xlu0.c.b16.cont [4/16] 0, 0, 128
        %2862 = vxpose.binary.xlu0.c.b16.cont [5/16] 0, 0, 128
        %2863 = vxpose.binary.xlu0.c.b16.cont [6/16] 0, 0, 128
        %2864 = vxpose.binary.xlu0.c.b16.cont [7/16] 0, 0, 128
        %2865 = vxpose.binary.xlu0.c.b16.end [8/16] 0, 0, 128
        %v2866 = vpop.trf.xlu0
        %v2867 = vpop.trf.xlu0
        %v2868 = vpop.trf.xlu0
        %v2869 = vpop.trf.xlu0
        %v2870 = vpop.trf.xlu0
        %v2871 = vpop.trf.xlu0
        %v2872 = vpop.trf.xlu0
        %v2873 = vpop.trf.xlu0
        %v2874 = vpop.trf.xlu0
        %v2875 = vpop.trf.xlu0
        %v2876 = vpop.trf.xlu0
        %v2877 = vpop.trf.xlu0
        %v2878 = vpop.trf.xlu0
        %v2879 = vpop.trf.xlu0
        %v2880 = vpop.trf.xlu0
        %v2881 = vpop.trf.xlu0
        %v2883 = vsel %vm594, %v2866, 0
        %v2886 = vsel %vm594, %v2868, 0
        %v2889 = vsel %vm594, %v2870, 0
        %v2892 = vsel %vm594, %v2872, 0
        %v2895 = vsel %vm594, %v2874, 0
        %v2898 = vsel %vm594, %v2876, 0
        %v2901 = vsel %vm594, %v2878, 0
        %v2904 = vsel %vm594, %v2880, 0
        %v2907 = vsel %vm594, %v2867, 0
        %v2910 = vsel %vm594, %v2869, 0
        %v2913 = vsel %vm594, %v2871, 0
        %v2916 = vsel %vm594, %v2873, 0
        %v2919 = vsel %vm594, %v2875, 0
        %v2922 = vsel %vm594, %v2877, 0
        %v2925 = vsel %vm594, %v2879, 0
        %v2928 = vsel %vm594, %v2881, 0
        %v2931 = vsel %vm643, %v2857, 0
        %2933 = vmatpush.bf16.msra.mxu0 0
        %2934 = vmatpush.bf16.msra.mxu0 0
        %2935 = vmatpush.bf16.msra.mxu0 0
        %2936 = vmatpush.bf16.msra.mxu0 0
        %2937 = vmatpush.bf16.msra.mxu0 0
        %2938 = vmatpush.bf16.msra.mxu0 0
        %2939 = vmatpush.bf16.msra.mxu0 0
        %2940 = vmatpush.bf16.msra.mxu0 %v2931
        %2941 = vmatmul.bf16.gmra.mxu0 %v2883
        %v2942 = vpop.f32.mrf.mxu0
        %v2943 = vadd.f32 0.0, %v2942
        %v2944 = vpop.f32.mrf.mxu0
        %v2945 = vadd.f32 0.0, %v2944
        %2946 = vmatmul.bf16.gmra.mxu0 %v2886
        %v2947 = vpop.f32.mrf.mxu0
        %v2948 = vadd.f32 0.0, %v2947
        %v2949 = vpop.f32.mrf.mxu0
        %v2950 = vadd.f32 0.0, %v2949
        %2951 = vmatmul.bf16.gmra.mxu0 %v2889
        %v2952 = vpop.f32.mrf.mxu0
        %v2953 = vadd.f32 0.0, %v2952
        %v2954 = vpop.f32.mrf.mxu0
        %v2955 = vadd.f32 0.0, %v2954
        %2956 = vmatmul.bf16.gmra.mxu0 %v2892
        %v2957 = vpop.f32.mrf.mxu0
        %v2958 = vadd.f32 0.0, %v2957
        %v2959 = vpop.f32.mrf.mxu0
        %v2960 = vadd.f32 0.0, %v2959
        %2961 = vmatmul.bf16.gmra.mxu0 %v2895
        %v2962 = vpop.f32.mrf.mxu0
        %v2963 = vadd.f32 0.0, %v2962
        %v2964 = vpop.f32.mrf.mxu0
        %v2965 = vadd.f32 0.0, %v2964
        %2966 = vmatmul.bf16.gmra.mxu0 %v2898
        %v2967 = vpop.f32.mrf.mxu0
        %v2968 = vadd.f32 0.0, %v2967
        %v2969 = vpop.f32.mrf.mxu0
        %v2970 = vadd.f32 0.0, %v2969
        %2971 = vmatmul.bf16.gmra.mxu0 %v2901
        %v2972 = vpop.f32.mrf.mxu0
        %v2973 = vadd.f32 0.0, %v2972
        %v2974 = vpop.f32.mrf.mxu0
        %v2975 = vadd.f32 0.0, %v2974
        %2976 = vmatmul.bf16.gmra.mxu0 %v2904
        %v2977 = vpop.f32.mrf.mxu0
        %v2978 = vadd.f32 0.0, %v2977
        %v2979 = vpop.f32.mrf.mxu0
        %v2980 = vadd.f32 0.0, %v2979
        %2981 = vmatmul.bf16.gmra.mxu0 %v2907
        %v2982 = vpop.f32.mrf.mxu0
        %v2983 = vadd.f32 0.0, %v2982
        %v2984 = vpop.f32.mrf.mxu0
        %v2985 = vadd.f32 0.0, %v2984
        %2986 = vmatmul.bf16.gmra.mxu0 %v2910
        %v2987 = vpop.f32.mrf.mxu0
        %v2988 = vadd.f32 0.0, %v2987
        %v2989 = vpop.f32.mrf.mxu0
        %v2990 = vadd.f32 0.0, %v2989
        %2991 = vmatmul.bf16.gmra.mxu0 %v2913
        %v2992 = vpop.f32.mrf.mxu0
        %v2993 = vadd.f32 0.0, %v2992
        %v2994 = vpop.f32.mrf.mxu0
        %v2995 = vadd.f32 0.0, %v2994
        %2996 = vmatmul.bf16.gmra.mxu0 %v2916
        %v2997 = vpop.f32.mrf.mxu0
        %v2998 = vadd.f32 0.0, %v2997
        %v2999 = vpop.f32.mrf.mxu0
        %v3000 = vadd.f32 0.0, %v2999
        %3001 = vmatmul.bf16.gmra.mxu0 %v2919
        %v3002 = vpop.f32.mrf.mxu0
        %v3003 = vadd.f32 0.0, %v3002
        %v3004 = vpop.f32.mrf.mxu0
        %v3005 = vadd.f32 0.0, %v3004
        %3006 = vmatmul.bf16.gmra.mxu0 %v2922
        %v3007 = vpop.f32.mrf.mxu0
        %v3008 = vadd.f32 0.0, %v3007
        %v3009 = vpop.f32.mrf.mxu0
        %v3010 = vadd.f32 0.0, %v3009
        %3011 = vmatmul.bf16.gmra.mxu0 %v2925
        %v3012 = vpop.f32.mrf.mxu0
        %v3013 = vadd.f32 0.0, %v3012
        %v3014 = vpop.f32.mrf.mxu0
        %v3015 = vadd.f32 0.0, %v3014
        %3016 = vmatmul.bf16.gmra.mxu0 %v2928
        %v3017 = vpop.f32.mrf.mxu0
        %v3018 = vadd.f32 0.0, %v3017
        %v3019 = vpop.f32.mrf.mxu0
        %v3020 = vadd.f32 0.0, %v3019
        %3021 = vdwg.mxu0
        %v3022 = vmax.f32 %v2943, %v2953
        %v3023 = vmax.f32 %v2945, %v2955
        %v3024 = vmax.f32 %v2948, %v2958
        %v3025 = vmax.f32 %v2950, %v2960
        %v3026 = vmax.f32 %v3022, %v2963
        %v3027 = vmax.f32 %v3023, %v2965
        %v3028 = vmax.f32 %v3024, %v2968
        %v3029 = vmax.f32 %v3025, %v2970
        %v3030 = vmax.f32 %v3026, %v2973
        %v3031 = vmax.f32 %v3027, %v2975
        %v3032 = vmax.f32 %v3028, %v2978
        %v3033 = vmax.f32 %v3029, %v2980
        %v3034 = vmax.f32 %v3030, %v2983
        %v3035 = vmax.f32 %v3031, %v2985
        %v3036 = vmax.f32 %v3032, %v2988
        %v3037 = vmax.f32 %v3033, %v2990
        %v3038 = vmax.f32 %v3034, %v2993
        %v3039 = vmax.f32 %v3035, %v2995
        %v3040 = vmax.f32 %v3036, %v2998
        %v3041 = vmax.f32 %v3037, %v3000
        %v3042 = vmax.f32 %v3038, %v3003
        %v3043 = vmax.f32 %v3039, %v3005
        %v3044 = vmax.f32 %v3040, %v3008
        %v3045 = vmax.f32 %v3041, %v3010
        %v3046 = vmax.f32 %v3042, %v3013
        %v3047 = vmax.f32 %v3043, %v3015
        %v3048 = vmax.f32 %v3044, %v3018
        %v3049 = vmax.f32 %v3045, %v3020
        %v3050 = vmax.f32 %v3046, %v3047
        %v3051 = vmax.f32 %v3048, %v3049
        %v3052 = vmax.f32 %v3050, %v3051
        %v3053 = vrot.slane %v3052, 4
        %v3054 = vmax.f32 %v3052, %v3053
        %v3055 = vrot.slane %v3054, 2
        %v3056 = vmax.f32 %v3054, %v3055
        %v3057 = vrot.slane %v3056, 1
        %v3058 = vmax.f32 %v3056, %v3057
        %v3059 = vsub.f32 %v2943, %v3058
        %v3060 = vsub.f32 %v2945, %v3058
        %v3061 = vsub.f32 %v2948, %v3058
        %v3062 = vsub.f32 %v2950, %v3058
        %v3063 = vsub.f32 %v2953, %v3058
        %v3064 = vsub.f32 %v2955, %v3058
        %v3065 = vsub.f32 %v2958, %v3058
        %v3066 = vsub.f32 %v2960, %v3058
        %v3067 = vsub.f32 %v2963, %v3058
        %v3068 = vsub.f32 %v2965, %v3058
        %v3069 = vsub.f32 %v2968, %v3058
        %v3070 = vsub.f32 %v2970, %v3058
        %v3071 = vsub.f32 %v2973, %v3058
        %v3072 = vsub.f32 %v2975, %v3058
        %v3073 = vsub.f32 %v2978, %v3058
        %v3074 = vsub.f32 %v2980, %v3058
        %v3075 = vsub.f32 %v2983, %v3058
        %v3076 = vsub.f32 %v2985, %v3058
        %v3077 = vsub.f32 %v2988, %v3058
        %v3078 = vsub.f32 %v2990, %v3058
        %v3079 = vsub.f32 %v2993, %v3058
        %v3080 = vsub.f32 %v2995, %v3058
        %v3081 = vsub.f32 %v2998, %v3058
        %v3082 = vsub.f32 %v3000, %v3058
        %v3083 = vsub.f32 %v3003, %v3058
        %v3084 = vsub.f32 %v3005, %v3058
        %v3085 = vsub.f32 %v3008, %v3058
        %v3086 = vsub.f32 %v3010, %v3058
        %v3087 = vsub.f32 %v3013, %v3058
        %v3088 = vsub.f32 %v3015, %v3058
        %v3089 = vsub.f32 %v3018, %v3058
        %v3090 = vsub.f32 %v3020, %v3058
        %v3091 = vmul.f32 %v3059, 1.442695
        %v3092 = vpow.pop %v3091
        %v3093 = vmul.f32 %v3060, 1.442695
        %v3094 = vpow.pop %v3093
        %v3095 = vmul.f32 %v3061, 1.442695
        %v3096 = vpow.pop %v3095
        %v3097 = vmul.f32 %v3062, 1.442695
        %v3098 = vpow.pop %v3097
        %v3099 = vmul.f32 %v3063, 1.442695
        %v3100 = vpow.pop %v3099
        %v3101 = vmul.f32 %v3064, 1.442695
        %v3102 = vpow.pop %v3101
        %v3103 = vmul.f32 %v3065, 1.442695
        %v3104 = vpow.pop %v3103
        %v3105 = vmul.f32 %v3066, 1.442695
        %v3106 = vpow.pop %v3105
        %v3107 = vmul.f32 %v3067, 1.442695
        %v3108 = vpow.pop %v3107
        %v3109 = vmul.f32 %v3068, 1.442695
        %v3110 = vpow.pop %v3109
        %v3111 = vmul.f32 %v3069, 1.442695
        %v3112 = vpow.pop %v3111
        %v3113 = vmul.f32 %v3070, 1.442695
        %v3114 = vpow.pop %v3113
        %v3115 = vmul.f32 %v3071, 1.442695
        %v3116 = vpow.pop %v3115
        %v3117 = vmul.f32 %v3072, 1.442695
        %v3118 = vpow.pop %v3117
        %v3119 = vmul.f32 %v3073, 1.442695
        %v3120 = vpow.pop %v3119
        %v3121 = vmul.f32 %v3074, 1.442695
        %v3122 = vpow.pop %v3121
        %v3123 = vmul.f32 %v3075, 1.442695
        %v3124 = vpow.pop %v3123
        %v3125 = vmul.f32 %v3076, 1.442695
        %v3126 = vpow.pop %v3125
        %v3127 = vmul.f32 %v3077, 1.442695
        %v3128 = vpow.pop %v3127
        %v3129 = vmul.f32 %v3078, 1.442695
        %v3130 = vpow.pop %v3129
        %v3131 = vmul.f32 %v3079, 1.442695
        %v3132 = vpow.pop %v3131
        %v3133 = vmul.f32 %v3080, 1.442695
        %v3134 = vpow.pop %v3133
        %v3135 = vmul.f32 %v3081, 1.442695
        %v3136 = vpow.pop %v3135
        %v3137 = vmul.f32 %v3082, 1.442695
        %v3138 = vpow.pop %v3137
        %v3139 = vmul.f32 %v3083, 1.442695
        %v3140 = vpow.pop %v3139
        %v3141 = vmul.f32 %v3084, 1.442695
        %v3142 = vpow.pop %v3141
        %v3143 = vmul.f32 %v3085, 1.442695
        %v3144 = vpow.pop %v3143
        %v3145 = vmul.f32 %v3086, 1.442695
        %v3146 = vpow.pop %v3145
        %v3147 = vmul.f32 %v3087, 1.442695
        %v3148 = vpow.pop %v3147
        %v3149 = vmul.f32 %v3088, 1.442695
        %v3150 = vpow.pop %v3149
        %v3151 = vmul.f32 %v3089, 1.442695
        %v3152 = vpow.pop %v3151
        %v3153 = vmul.f32 %v3090, 1.442695
        %v3154 = vpow.pop %v3153
        %v3155 = vpack.c.bf16 %v3094, %v3092
        %v3156 = vpack.c.bf16 %v3098, %v3096
        %v3157 = vpack.c.bf16 %v3102, %v3100
        %v3158 = vpack.c.bf16 %v3106, %v3104
        %v3159 = vpack.c.bf16 %v3110, %v3108
        %v3160 = vpack.c.bf16 %v3114, %v3112
        %v3161 = vpack.c.bf16 %v3118, %v3116
        %v3162 = vpack.c.bf16 %v3122, %v3120
        %v3163 = vpack.c.bf16 %v3126, %v3124
        %v3164 = vpack.c.bf16 %v3130, %v3128
        %v3165 = vpack.c.bf16 %v3134, %v3132
        %v3166 = vpack.c.bf16 %v3138, %v3136
        %v3167 = vpack.c.bf16 %v3142, %v3140
        %v3168 = vpack.c.bf16 %v3146, %v3144
        %v3169 = vpack.c.bf16 %v3150, %v3148
        %v3170 = vpack.c.bf16 %v3154, %v3152
        %v3171 = vunpack.c.l.bf16 %v3155
        %v3172 = vunpack.c.h.bf16 %v3155
        %v3173 = vunpack.c.l.bf16 %v3156
        %v3174 = vunpack.c.h.bf16 %v3156
        %v3175 = vunpack.c.l.bf16 %v3157
        %v3176 = vunpack.c.h.bf16 %v3157
        %v3177 = vunpack.c.l.bf16 %v3158
        %v3178 = vunpack.c.h.bf16 %v3158
        %v3179 = vunpack.c.l.bf16 %v3159
        %v3180 = vunpack.c.h.bf16 %v3159
        %v3181 = vunpack.c.l.bf16 %v3160
        %v3182 = vunpack.c.h.bf16 %v3160
        %v3183 = vunpack.c.l.bf16 %v3161
        %v3184 = vunpack.c.h.bf16 %v3161
        %v3185 = vunpack.c.l.bf16 %v3162
        %v3186 = vunpack.c.h.bf16 %v3162
        %v3187 = vunpack.c.l.bf16 %v3163
        %v3188 = vunpack.c.h.bf16 %v3163
        %v3189 = vunpack.c.l.bf16 %v3164
        %v3190 = vunpack.c.h.bf16 %v3164
        %v3191 = vunpack.c.l.bf16 %v3165
        %v3192 = vunpack.c.h.bf16 %v3165
        %v3193 = vunpack.c.l.bf16 %v3166
        %v3194 = vunpack.c.h.bf16 %v3166
        %v3195 = vunpack.c.l.bf16 %v3167
        %v3196 = vunpack.c.h.bf16 %v3167
        %v3197 = vunpack.c.l.bf16 %v3168
        %v3198 = vunpack.c.h.bf16 %v3168
        %v3199 = vunpack.c.l.bf16 %v3169
        %v3200 = vunpack.c.h.bf16 %v3169
        %v3201 = vunpack.c.l.bf16 %v3170
        %v3202 = vunpack.c.h.bf16 %v3170
        %v3203 = vadd.f32 %v3171, %v3172
        %v3204 = vadd.f32 %v3203, %v3173
        %v3205 = vadd.f32 %v3204, %v3174
        %v3206 = vadd.f32 %v3205, %v3175
        %v3207 = vadd.f32 %v3206, %v3176
        %v3208 = vadd.f32 %v3207, %v3177
        %v3209 = vadd.f32 %v3208, %v3178
        %v3210 = vadd.f32 %v3209, %v3179
        %v3211 = vadd.f32 %v3210, %v3180
        %v3212 = vadd.f32 %v3211, %v3181
        %v3213 = vadd.f32 %v3212, %v3182
        %v3214 = vadd.f32 %v3213, %v3183
        %v3215 = vadd.f32 %v3214, %v3184
        %v3216 = vadd.f32 %v3215, %v3185
        %v3217 = vadd.f32 %v3216, %v3186
        %v3218 = vadd.f32 %v3217, %v3187
        %v3219 = vadd.f32 %v3218, %v3188
        %v3220 = vadd.f32 %v3219, %v3189
        %v3221 = vadd.f32 %v3220, %v3190
        %v3222 = vadd.f32 %v3221, %v3191
        %v3223 = vadd.f32 %v3222, %v3192
        %v3224 = vadd.f32 %v3223, %v3193
        %v3225 = vadd.f32 %v3224, %v3194
        %v3226 = vadd.f32 %v3225, %v3195
        %v3227 = vadd.f32 %v3226, %v3196
        %v3228 = vadd.f32 %v3227, %v3197
        %v3229 = vadd.f32 %v3228, %v3198
        %v3230 = vadd.f32 %v3229, %v3199
        %v3231 = vadd.f32 %v3230, %v3200
        %v3232 = vadd.f32 %v3231, %v3201
        %v3233 = vadd.f32 %v3232, %v3202
        %v3234 = vrot.slane %v3233, 4
        %v3235 = vadd.f32 %v3233, %v3234
        %v3236 = vrot.slane %v3235, 2
        %v3237 = vadd.f32 %v3235, %v3236
        %v3238 = vrot.slane %v3237, 1
        %v3239 = vadd.f32 %v3237, %v3238
        %3240 = vmatpush.bf16.msra.mxu0 %v3162
        %3241 = vmatpush.bf16.msra.mxu0 %v3161
        %3242 = vmatpush.bf16.msra.mxu0 %v3160
        %3243 = vmatpush.bf16.msra.mxu0 %v3159
        %3244 = vmatpush.bf16.msra.mxu0 %v3158
        %3245 = vmatpush.bf16.msra.mxu0 %v3157
        %3246 = vmatpush.bf16.msra.mxu0 %v3156
        %3247 = vmatpush.bf16.msra.mxu0 %v3155
        %3248 = vmatmul.bf16.gmra.mxu0 %v2854
        %v3249 = vpop.f32.mrf.mxu0
        %v3250 = vadd.f32 0.0, %v3249
        %v3251 = vpop.f32.mrf.mxu0
        %3252 = vdwg.mxu0
        %3253 = vmatpush.bf16.msra.mxu0 %v3170
        %3254 = vmatpush.bf16.msra.mxu0 %v3169
        %3255 = vmatpush.bf16.msra.mxu0 %v3168
        %3256 = vmatpush.bf16.msra.mxu0 %v3167
        %3257 = vmatpush.bf16.msra.mxu0 %v3166
        %3258 = vmatpush.bf16.msra.mxu0 %v3165
        %3259 = vmatpush.bf16.msra.mxu0 %v3164
        %3260 = vmatpush.bf16.msra.mxu0 %v3163
        %3261 = vmatmul.bf16.gmra.mxu0 %v2855
        %v3262 = vpop.f32.mrf.mxu0
        %v3263 = vadd.f32 %v3250, %v3262
        %v3264 = vpop.f32.mrf.mxu0
        %3265 = vdwg.mxu0
        %v3266 = vrcp.pop %v3239
        %v3267 = vmul.f32 %v3263, %v3266
        %3268 = vst [vmem:[#allocation3 + $0x30] sm:$0xff] %v3267
        %v3269 = vld [vmem:[#allocation2 + $0x38] sm:$0xff]
        %v3270 = vpack.c.bf16 %v3269, %v3269
        %v3272 = vsel %vm643, %v3270, 0
        %3274 = vmatpush.bf16.msra.mxu0 0
        %3275 = vmatpush.bf16.msra.mxu0 0
        %3276 = vmatpush.bf16.msra.mxu0 0
        %3277 = vmatpush.bf16.msra.mxu0 0
        %3278 = vmatpush.bf16.msra.mxu0 0
        %3279 = vmatpush.bf16.msra.mxu0 0
        %3280 = vmatpush.bf16.msra.mxu0 0
        %3281 = vmatpush.bf16.msra.mxu0 %v3272
        %3282 = vmatmul.bf16.gmra.mxu0 %v2883
        %v3283 = vpop.f32.mrf.mxu0
        %v3284 = vadd.f32 0.0, %v3283
        %v3285 = vpop.f32.mrf.mxu0
        %v3286 = vadd.f32 0.0, %v3285
        %3287 = vmatmul.bf16.gmra.mxu0 %v2886
        %v3288 = vpop.f32.mrf.mxu0
        %v3289 = vadd.f32 0.0, %v3288
        %v3290 = vpop.f32.mrf.mxu0
        %v3291 = vadd.f32 0.0, %v3290
        %3292 = vmatmul.bf16.gmra.mxu0 %v2889
        %v3293 = vpop.f32.mrf.mxu0
        %v3294 = vadd.f32 0.0, %v3293
        %v3295 = vpop.f32.mrf.mxu0
        %v3296 = vadd.f32 0.0, %v3295
        %3297 = vmatmul.bf16.gmra.mxu0 %v2892
        %v3298 = vpop.f32.mrf.mxu0
        %v3299 = vadd.f32 0.0, %v3298
        %v3300 = vpop.f32.mrf.mxu0
        %v3301 = vadd.f32 0.0, %v3300
        %3302 = vmatmul.bf16.gmra.mxu0 %v2895
        %v3303 = vpop.f32.mrf.mxu0
        %v3304 = vadd.f32 0.0, %v3303
        %v3305 = vpop.f32.mrf.mxu0
        %v3306 = vadd.f32 0.0, %v3305
        %3307 = vmatmul.bf16.gmra.mxu0 %v2898
        %v3308 = vpop.f32.mrf.mxu0
        %v3309 = vadd.f32 0.0, %v3308
        %v3310 = vpop.f32.mrf.mxu0
        %v3311 = vadd.f32 0.0, %v3310
        %3312 = vmatmul.bf16.gmra.mxu0 %v2901
        %v3313 = vpop.f32.mrf.mxu0
        %v3314 = vadd.f32 0.0, %v3313
        %v3315 = vpop.f32.mrf.mxu0
        %v3316 = vadd.f32 0.0, %v3315
        %3317 = vmatmul.bf16.gmra.mxu0 %v2904
        %v3318 = vpop.f32.mrf.mxu0
        %v3319 = vadd.f32 0.0, %v3318
        %v3320 = vpop.f32.mrf.mxu0
        %v3321 = vadd.f32 0.0, %v3320
        %3322 = vmatmul.bf16.gmra.mxu0 %v2907
        %v3323 = vpop.f32.mrf.mxu0
        %v3324 = vadd.f32 0.0, %v3323
        %v3325 = vpop.f32.mrf.mxu0
        %v3326 = vadd.f32 0.0, %v3325
        %3327 = vmatmul.bf16.gmra.mxu0 %v2910
        %v3328 = vpop.f32.mrf.mxu0
        %v3329 = vadd.f32 0.0, %v3328
        %v3330 = vpop.f32.mrf.mxu0
        %v3331 = vadd.f32 0.0, %v3330
        %3332 = vmatmul.bf16.gmra.mxu0 %v2913
        %v3333 = vpop.f32.mrf.mxu0
        %v3334 = vadd.f32 0.0, %v3333
        %v3335 = vpop.f32.mrf.mxu0
        %v3336 = vadd.f32 0.0, %v3335
        %3337 = vmatmul.bf16.gmra.mxu0 %v2916
        %v3338 = vpop.f32.mrf.mxu0
        %v3339 = vadd.f32 0.0, %v3338
        %v3340 = vpop.f32.mrf.mxu0
        %v3341 = vadd.f32 0.0, %v3340
        %3342 = vmatmul.bf16.gmra.mxu0 %v2919
        %v3343 = vpop.f32.mrf.mxu0
        %v3344 = vadd.f32 0.0, %v3343
        %v3345 = vpop.f32.mrf.mxu0
        %v3346 = vadd.f32 0.0, %v3345
        %3347 = vmatmul.bf16.gmra.mxu0 %v2922
        %v3348 = vpop.f32.mrf.mxu0
        %v3349 = vadd.f32 0.0, %v3348
        %v3350 = vpop.f32.mrf.mxu0
        %v3351 = vadd.f32 0.0, %v3350
        %3352 = vmatmul.bf16.gmra.mxu0 %v2925
        %v3353 = vpop.f32.mrf.mxu0
        %v3354 = vadd.f32 0.0, %v3353
        %v3355 = vpop.f32.mrf.mxu0
        %v3356 = vadd.f32 0.0, %v3355
        %3357 = vmatmul.bf16.gmra.mxu0 %v2928
        %v3358 = vpop.f32.mrf.mxu0
        %v3359 = vadd.f32 0.0, %v3358
        %v3360 = vpop.f32.mrf.mxu0
        %v3361 = vadd.f32 0.0, %v3360
        %3362 = vdwg.mxu0
        %v3363 = vmax.f32 %v3284, %v3294
        %v3364 = vmax.f32 %v3286, %v3296
        %v3365 = vmax.f32 %v3289, %v3299
        %v3366 = vmax.f32 %v3291, %v3301
        %v3367 = vmax.f32 %v3363, %v3304
        %v3368 = vmax.f32 %v3364, %v3306
        %v3369 = vmax.f32 %v3365, %v3309
        %v3370 = vmax.f32 %v3366, %v3311
        %v3371 = vmax.f32 %v3367, %v3314
        %v3372 = vmax.f32 %v3368, %v3316
        %v3373 = vmax.f32 %v3369, %v3319
        %v3374 = vmax.f32 %v3370, %v3321
        %v3375 = vmax.f32 %v3371, %v3324
        %v3376 = vmax.f32 %v3372, %v3326
        %v3377 = vmax.f32 %v3373, %v3329
        %v3378 = vmax.f32 %v3374, %v3331
        %v3379 = vmax.f32 %v3375, %v3334
        %v3380 = vmax.f32 %v3376, %v3336
        %v3381 = vmax.f32 %v3377, %v3339
        %v3382 = vmax.f32 %v3378, %v3341
        %v3383 = vmax.f32 %v3379, %v3344
        %v3384 = vmax.f32 %v3380, %v3346
        %v3385 = vmax.f32 %v3381, %v3349
        %v3386 = vmax.f32 %v3382, %v3351
        %v3387 = vmax.f32 %v3383, %v3354
        %v3388 = vmax.f32 %v3384, %v3356
        %v3389 = vmax.f32 %v3385, %v3359
        %v3390 = vmax.f32 %v3386, %v3361
        %v3391 = vmax.f32 %v3387, %v3388
        %v3392 = vmax.f32 %v3389, %v3390
        %v3393 = vmax.f32 %v3391, %v3392
        %v3394 = vrot.slane %v3393, 4
        %v3395 = vmax.f32 %v3393, %v3394
        %v3396 = vrot.slane %v3395, 2
        %v3397 = vmax.f32 %v3395, %v3396
        %v3398 = vrot.slane %v3397, 1
        %v3399 = vmax.f32 %v3397, %v3398
        %v3400 = vsub.f32 %v3284, %v3399
        %v3401 = vsub.f32 %v3286, %v3399
        %v3402 = vsub.f32 %v3289, %v3399
        %v3403 = vsub.f32 %v3291, %v3399
        %v3404 = vsub.f32 %v3294, %v3399
        %v3405 = vsub.f32 %v3296, %v3399
        %v3406 = vsub.f32 %v3299, %v3399
        %v3407 = vsub.f32 %v3301, %v3399
        %v3408 = vsub.f32 %v3304, %v3399
        %v3409 = vsub.f32 %v3306, %v3399
        %v3410 = vsub.f32 %v3309, %v3399
        %v3411 = vsub.f32 %v3311, %v3399
        %v3412 = vsub.f32 %v3314, %v3399
        %v3413 = vsub.f32 %v3316, %v3399
        %v3414 = vsub.f32 %v3319, %v3399
        %v3415 = vsub.f32 %v3321, %v3399
        %v3416 = vsub.f32 %v3324, %v3399
        %v3417 = vsub.f32 %v3326, %v3399
        %v3418 = vsub.f32 %v3329, %v3399
        %v3419 = vsub.f32 %v3331, %v3399
        %v3420 = vsub.f32 %v3334, %v3399
        %v3421 = vsub.f32 %v3336, %v3399
        %v3422 = vsub.f32 %v3339, %v3399
        %v3423 = vsub.f32 %v3341, %v3399
        %v3424 = vsub.f32 %v3344, %v3399
        %v3425 = vsub.f32 %v3346, %v3399
        %v3426 = vsub.f32 %v3349, %v3399
        %v3427 = vsub.f32 %v3351, %v3399
        %v3428 = vsub.f32 %v3354, %v3399
        %v3429 = vsub.f32 %v3356, %v3399
        %v3430 = vsub.f32 %v3359, %v3399
        %v3431 = vsub.f32 %v3361, %v3399
        %v3432 = vmul.f32 %v3400, 1.442695
        %v3433 = vpow.pop %v3432
        %v3434 = vmul.f32 %v3401, 1.442695
        %v3435 = vpow.pop %v3434
        %v3436 = vmul.f32 %v3402, 1.442695
        %v3437 = vpow.pop %v3436
        %v3438 = vmul.f32 %v3403, 1.442695
        %v3439 = vpow.pop %v3438
        %v3440 = vmul.f32 %v3404, 1.442695
        %v3441 = vpow.pop %v3440
        %v3442 = vmul.f32 %v3405, 1.442695
        %v3443 = vpow.pop %v3442
        %v3444 = vmul.f32 %v3406, 1.442695
        %v3445 = vpow.pop %v3444
        %v3446 = vmul.f32 %v3407, 1.442695
        %v3447 = vpow.pop %v3446
        %v3448 = vmul.f32 %v3408, 1.442695
        %v3449 = vpow.pop %v3448
        %v3450 = vmul.f32 %v3409, 1.442695
        %v3451 = vpow.pop %v3450
        %v3452 = vmul.f32 %v3410, 1.442695
        %v3453 = vpow.pop %v3452
        %v3454 = vmul.f32 %v3411, 1.442695
        %v3455 = vpow.pop %v3454
        %v3456 = vmul.f32 %v3412, 1.442695
        %v3457 = vpow.pop %v3456
        %v3458 = vmul.f32 %v3413, 1.442695
        %v3459 = vpow.pop %v3458
        %v3460 = vmul.f32 %v3414, 1.442695
        %v3461 = vpow.pop %v3460
        %v3462 = vmul.f32 %v3415, 1.442695
        %v3463 = vpow.pop %v3462
        %v3464 = vmul.f32 %v3416, 1.442695
        %v3465 = vpow.pop %v3464
        %v3466 = vmul.f32 %v3417, 1.442695
        %v3467 = vpow.pop %v3466
        %v3468 = vmul.f32 %v3418, 1.442695
        %v3469 = vpow.pop %v3468
        %v3470 = vmul.f32 %v3419, 1.442695
        %v3471 = vpow.pop %v3470
        %v3472 = vmul.f32 %v3420, 1.442695
        %v3473 = vpow.pop %v3472
        %v3474 = vmul.f32 %v3421, 1.442695
        %v3475 = vpow.pop %v3474
        %v3476 = vmul.f32 %v3422, 1.442695
        %v3477 = vpow.pop %v3476
        %v3478 = vmul.f32 %v3423, 1.442695
        %v3479 = vpow.pop %v3478
        %v3480 = vmul.f32 %v3424, 1.442695
        %v3481 = vpow.pop %v3480
        %v3482 = vmul.f32 %v3425, 1.442695
        %v3483 = vpow.pop %v3482
        %v3484 = vmul.f32 %v3426, 1.442695
        %v3485 = vpow.pop %v3484
        %v3486 = vmul.f32 %v3427, 1.442695
        %v3487 = vpow.pop %v3486
        %v3488 = vmul.f32 %v3428, 1.442695
        %v3489 = vpow.pop %v3488
        %v3490 = vmul.f32 %v3429, 1.442695
        %v3491 = vpow.pop %v3490
        %v3492 = vmul.f32 %v3430, 1.442695
        %v3493 = vpow.pop %v3492
        %v3494 = vmul.f32 %v3431, 1.442695
        %v3495 = vpow.pop %v3494
        %v3496 = vpack.c.bf16 %v3435, %v3433
        %v3497 = vpack.c.bf16 %v3439, %v3437
        %v3498 = vpack.c.bf16 %v3443, %v3441
        %v3499 = vpack.c.bf16 %v3447, %v3445
        %v3500 = vpack.c.bf16 %v3451, %v3449
        %v3501 = vpack.c.bf16 %v3455, %v3453
        %v3502 = vpack.c.bf16 %v3459, %v3457
        %v3503 = vpack.c.bf16 %v3463, %v3461
        %v3504 = vpack.c.bf16 %v3467, %v3465
        %v3505 = vpack.c.bf16 %v3471, %v3469
        %v3506 = vpack.c.bf16 %v3475, %v3473
        %v3507 = vpack.c.bf16 %v3479, %v3477
        %v3508 = vpack.c.bf16 %v3483, %v3481
        %v3509 = vpack.c.bf16 %v3487, %v3485
        %v3510 = vpack.c.bf16 %v3491, %v3489
        %v3511 = vpack.c.bf16 %v3495, %v3493
        %v3512 = vunpack.c.l.bf16 %v3496
        %v3513 = vunpack.c.h.bf16 %v3496
        %v3514 = vunpack.c.l.bf16 %v3497
        %v3515 = vunpack.c.h.bf16 %v3497
        %v3516 = vunpack.c.l.bf16 %v3498
        %v3517 = vunpack.c.h.bf16 %v3498
        %v3518 = vunpack.c.l.bf16 %v3499
        %v3519 = vunpack.c.h.bf16 %v3499
        %v3520 = vunpack.c.l.bf16 %v3500
        %v3521 = vunpack.c.h.bf16 %v3500
        %v3522 = vunpack.c.l.bf16 %v3501
        %v3523 = vunpack.c.h.bf16 %v3501
        %v3524 = vunpack.c.l.bf16 %v3502
        %v3525 = vunpack.c.h.bf16 %v3502
        %v3526 = vunpack.c.l.bf16 %v3503
        %v3527 = vunpack.c.h.bf16 %v3503
        %v3528 = vunpack.c.l.bf16 %v3504
        %v3529 = vunpack.c.h.bf16 %v3504
        %v3530 = vunpack.c.l.bf16 %v3505
        %v3531 = vunpack.c.h.bf16 %v3505
        %v3532 = vunpack.c.l.bf16 %v3506
        %v3533 = vunpack.c.h.bf16 %v3506
        %v3534 = vunpack.c.l.bf16 %v3507
        %v3535 = vunpack.c.h.bf16 %v3507
        %v3536 = vunpack.c.l.bf16 %v3508
        %v3537 = vunpack.c.h.bf16 %v3508
        %v3538 = vunpack.c.l.bf16 %v3509
        %v3539 = vunpack.c.h.bf16 %v3509
        %v3540 = vunpack.c.l.bf16 %v3510
        %v3541 = vunpack.c.h.bf16 %v3510
        %v3542 = vunpack.c.l.bf16 %v3511
        %v3543 = vunpack.c.h.bf16 %v3511
        %v3544 = vadd.f32 %v3512, %v3513
        %v3545 = vadd.f32 %v3544, %v3514
        %v3546 = vadd.f32 %v3545, %v3515
        %v3547 = vadd.f32 %v3546, %v3516
        %v3548 = vadd.f32 %v3547, %v3517
        %v3549 = vadd.f32 %v3548, %v3518
        %v3550 = vadd.f32 %v3549, %v3519
        %v3551 = vadd.f32 %v3550, %v3520
        %v3552 = vadd.f32 %v3551, %v3521
        %v3553 = vadd.f32 %v3552, %v3522
        %v3554 = vadd.f32 %v3553, %v3523
        %v3555 = vadd.f32 %v3554, %v3524
        %v3556 = vadd.f32 %v3555, %v3525
        %v3557 = vadd.f32 %v3556, %v3526
        %v3558 = vadd.f32 %v3557, %v3527
        %v3559 = vadd.f32 %v3558, %v3528
        %v3560 = vadd.f32 %v3559, %v3529
        %v3561 = vadd.f32 %v3560, %v3530
        %v3562 = vadd.f32 %v3561, %v3531
        %v3563 = vadd.f32 %v3562, %v3532
        %v3564 = vadd.f32 %v3563, %v3533
        %v3565 = vadd.f32 %v3564, %v3534
        %v3566 = vadd.f32 %v3565, %v3535
        %v3567 = vadd.f32 %v3566, %v3536
        %v3568 = vadd.f32 %v3567, %v3537
        %v3569 = vadd.f32 %v3568, %v3538
        %v3570 = vadd.f32 %v3569, %v3539
        %v3571 = vadd.f32 %v3570, %v3540
        %v3572 = vadd.f32 %v3571, %v3541
        %v3573 = vadd.f32 %v3572, %v3542
        %v3574 = vadd.f32 %v3573, %v3543
        %v3575 = vrot.slane %v3574, 4
        %v3576 = vadd.f32 %v3574, %v3575
        %v3577 = vrot.slane %v3576, 2
        %v3578 = vadd.f32 %v3576, %v3577
        %v3579 = vrot.slane %v3578, 1
        %v3580 = vadd.f32 %v3578, %v3579
        %3581 = vmatpush.bf16.msra.mxu0 %v3503
        %3582 = vmatpush.bf16.msra.mxu0 %v3502
        %3583 = vmatpush.bf16.msra.mxu0 %v3501
        %3584 = vmatpush.bf16.msra.mxu0 %v3500
        %3585 = vmatpush.bf16.msra.mxu0 %v3499
        %3586 = vmatpush.bf16.msra.mxu0 %v3498
        %3587 = vmatpush.bf16.msra.mxu0 %v3497
        %3588 = vmatpush.bf16.msra.mxu0 %v3496
        %3589 = vmatmul.bf16.gmra.mxu0 %v2854
        %v3590 = vpop.f32.mrf.mxu0
        %v3591 = vadd.f32 0.0, %v3590
        %v3592 = vpop.f32.mrf.mxu0
        %3593 = vdwg.mxu0
        %3594 = vmatpush.bf16.msra.mxu0 %v3511
        %3595 = vmatpush.bf16.msra.mxu0 %v3510
        %3596 = vmatpush.bf16.msra.mxu0 %v3509
        %3597 = vmatpush.bf16.msra.mxu0 %v3508
        %3598 = vmatpush.bf16.msra.mxu0 %v3507
        %3599 = vmatpush.bf16.msra.mxu0 %v3506
        %3600 = vmatpush.bf16.msra.mxu0 %v3505
        %3601 = vmatpush.bf16.msra.mxu0 %v3504
        %3602 = vmatmul.bf16.gmra.mxu0 %v2855
        %v3603 = vpop.f32.mrf.mxu0
        %v3604 = vadd.f32 %v3591, %v3603
        %v3605 = vpop.f32.mrf.mxu0
        %3606 = vdwg.mxu0
        %v3607 = vrcp.pop %v3580
        %v3608 = vmul.f32 %v3604, %v3607
        %3609 = vst [vmem:[#allocation3 + $0x38] sm:$0xff] %v3608
        %v3610 = vld [vmem:[%s3] sm:$0xf]
        %v3611 = vld [vmem:[%s3 + $0x4] sm:$0xf]
        %v3612 = vld [vmem:[%s3 + $0x8] sm:$0xf]
        %v3613 = vld [vmem:[%s3 + $0xc] sm:$0xf]
        %v3614 = vld [vmem:[#allocation3] sm:$0xff]
        %v3615 = vld [vmem:[#allocation3 + $0x8] sm:$0xff]
        %v3616 = vld [vmem:[#allocation3 + $0x10] sm:$0xff]
        %v3617 = vld [vmem:[#allocation3 + $0x18] sm:$0xff]
        %v3618 = vld [vmem:[#allocation3 + $0x20] sm:$0xff]
        %v3619 = vld [vmem:[#allocation3 + $0x28] sm:$0xff]
        %v3620 = vld [vmem:[#allocation3 + $0x30] sm:$0xff]
        %v3621 = vld [vmem:[#allocation3 + $0x38] sm:$0xff]
        %v3622 = vpack.c.bf16 %v3616, %v3614
        %v3623 = vpack.c.bf16 %v3617, %v3615
        %v3624 = vpack.c.bf16 %v3620, %v3618
        %v3625 = vpack.c.bf16 %v3621, %v3619
        %v3626 = vld [vmem:[%s4] sm:$0xff]
        %v3627 = vld [vmem:[%s4 + $0x8] sm:$0xff]
        %v3628 = vld [vmem:[%s4 + $0x10] sm:$0xff]
        %v3629 = vld [vmem:[%s4 + $0x18] sm:$0xff]
        %3631 = vset.pattern.permute.xlu0 0
        %3632 = vperm.xlu0 %3631, %v3626
        %v3633 = vpop.permute.xlu0 %3632
        %3636 = vset.pattern.permute.xlu0 0
        %3637 = vperm.xlu0 %3636, %v3627
        %v3638 = vpop.permute.xlu0 %3637
        %3641 = vset.pattern.permute.xlu0 0
        %3642 = vperm.xlu0 %3641, %v3628
        %v3643 = vpop.permute.xlu0 %3642
        %3646 = vset.pattern.permute.xlu0 0
        %3647 = vperm.xlu0 %3646, %v3629
        %v3648 = vpop.permute.xlu0 %3647
        %v3654 = vunpack.c.l.b16 %v3610
        %v3655 = vunpack.c.l.b16 %v3611
        %v3656 = vunpack.c.l.b16 %v3612
        %v3657 = vunpack.c.l.b16 %v3613
        %v3658 = vpack.c.b16 %v3655, %v3654
        %v3659 = vpack.c.b16 %v3657, %v3656
        %v3661 = vsel %vm439, %v3658, 0
        %v3664 = vsel %vm439, %v3659, 0
        %3666 = vmatpush.bf16.msra.mxu0 0
        %3667 = vmatpush.bf16.msra.mxu0 0
        %3668 = vmatpush.bf16.msra.mxu0 0
        %3669 = vmatpush.bf16.msra.mxu0 0
        %3670 = vmatpush.bf16.msra.mxu0 0
        %3671 = vmatpush.bf16.msra.mxu0 0
        %3672 = vmatpush.bf16.msra.mxu0 %v3624
        %3673 = vmatpush.bf16.msra.mxu0 %v3622
        %3674 = vmatmul.bf16.gmra.mxu0 %v3661
        %v3675 = vpop.f32.mrf.mxu0
        %v3676 = vadd.f32 %v3633, %v3675
        %v3677 = vpop.f32.mrf.mxu0
        %v3678 = vadd.f32 %v3638, %v3677
        %3679 = vmatmul.bf16.gmra.mxu0 %v3664
        %v3680 = vpop.f32.mrf.mxu0
        %v3681 = vadd.f32 %v3643, %v3680
        %v3682 = vpop.f32.mrf.mxu0
        %v3683 = vadd.f32 %v3648, %v3682
        %3684 = vdwg.mxu0
        %3685 = vmatpush.bf16.msra.mxu0 0
        %3686 = vmatpush.bf16.msra.mxu0 0
        %3687 = vmatpush.bf16.msra.mxu0 0
        %3688 = vmatpush.bf16.msra.mxu0 0
        %3689 = vmatpush.bf16.msra.mxu0 0
        %3690 = vmatpush.bf16.msra.mxu0 0
        %3691 = vmatpush.bf16.msra.mxu0 %v3625
        %3692 = vmatpush.bf16.msra.mxu0 %v3623
        %3693 = vmatmul.bf16.gmra.mxu0 %v3661
        %v3694 = vpop.f32.mrf.mxu0
        %v3695 = vadd.f32 %v3633, %v3694
        %v3696 = vpop.f32.mrf.mxu0
        %v3697 = vadd.f32 %v3638, %v3696
        %3698 = vmatmul.bf16.gmra.mxu0 %v3664
        %v3699 = vpop.f32.mrf.mxu0
        %v3700 = vadd.f32 %v3643, %v3699
        %v3701 = vpop.f32.mrf.mxu0
        %v3702 = vadd.f32 %v3648, %v3701
        %3703 = vdwg.mxu0
        %v3704 = vadd.f32 %v3676, %v224
        %v3705 = vadd.f32 %v3695, %v225
        %v3706 = vadd.f32 %v3678, %v226
        %v3707 = vadd.f32 %v3697, %v227
        %v3708 = vadd.f32 %v3681, %v228
        %v3709 = vadd.f32 %v3700, %v229
        %v3710 = vadd.f32 %v3683, %v230
        %v3711 = vadd.f32 %v3702, %v231
        %3712 = vst [vmem:[%s217] sm:$0xff] %v3704
        %3713 = vst [vmem:[%s217 + $0x8] sm:$0xff] %v3705
        %3714 = vst [vmem:[%s217 + $0x10] sm:$0xff] %v3706
        %3715 = vst [vmem:[%s217 + $0x18] sm:$0xff] %v3707
        %3716 = vst [vmem:[%s217 + $0x20] sm:$0xff] %v3708
        %3717 = vst [vmem:[%s217 + $0x28] sm:$0xff] %v3709
        %3718 = vst [vmem:[%s217 + $0x30] sm:$0xff] %v3710
        %3719 = vst [vmem:[%s217 + $0x38] sm:$0xff] %v3711
        %s3720 = sand.u32 %s137, 1
        %s3721 = scalar_lea.sflag [#allocation5], %s3720
        %s3722 = sand.u32 %s137, 1
        %s3723 = smul.addr %s3722, 64
        %s3724 = scalar_lea.vmem [#allocation4], %s3723
        // Predicated region
        $region41: #{tpu_custom_call.1} parent=39 // pred_check
          %p3725 = pneg %p147
        $region42: #{tpu_custom_call.1} parent=39 // pred_check_branch
          %3727 = sbr.rel (%p3725) target = $region44
        $region43: #{tpu_custom_call.1} parent=39 // pred_region
          %3729 = vsyncadd %s3721, 0
          %s3730 = smul.addr %s19, 8
          %s3731 = smul.addr %s3730, 8
          %s3732 = scalar_lea.hbm %s5, %s3731
          %s3733 = sshll.u32 %s3724, 4
          %s3734 = int_to_ptr.vmem [resolvable:$true] %s3733
          %s3735 = sshll.u32 %s3732, 4
          %s3736 = int_to_ptr.hbm [resolvable:$true] %s3735
          %3741 = dma.vmem_to_hbm [thread:$0]  %s3734, 1024, %s3736, %s3721, 256, 256, 16
        $region44: #{tpu_custom_call.1} parent=39 // pred_fallthru
          _
      $region40: #{tpu_custom_call.1} parent=5 // pred_fallthru
        _
      %p3742 = scmp.le.s32.totalorder 2, %s14
      // Predicated region
      $region45: #{tpu_custom_call.1} parent=5 // pred_check
        %p3743 = pneg %p3742
      $region46: #{tpu_custom_call.1} parent=5 // pred_check_branch
        %3745 = sbr.rel (%p3743) target = $region48
      $region47: #{tpu_custom_call.1} parent=5 // pred_region
        %s3746 = ssub.s32 %s14, 2
        // Predicated region
        $region49: #{tpu_custom_call.1} parent=47 // pred_check
          %p3747 = pneg %p153
        $region50: #{tpu_custom_call.1} parent=47 // pred_check_branch
          %3749 = sbr.rel (%p3747) target = $region52
        $region51: #{tpu_custom_call.1} parent=47 // pred_region
          %s3750 = sand.u32 %s138, 1
          %s3751 = scalar_lea.sflag [#allocation5], %s3750
          %s3752 = sand.u32 %s138, 1
          %s3753 = smul.addr %s3752, 64
          %s3754 = scalar_lea.vmem [#allocation4], %s3753
          %3756 = dma.done %s3751, 1024
        $region52: #{tpu_custom_call.1} parent=47 // pred_fallthru
          _
      $region48: #{tpu_custom_call.1} parent=5 // pred_fallthru
        _
    $region6: #{tpu_custom_call.1} parent=1 // loop_footer
      %s18 = sadd.s32 1, %s14
    $region7: #{tpu_custom_call.1} parent=1 // loop_footer_branch
      %13 = sbr.rel target = $region3
    $region8: #{tpu_custom_call.1} parent=1 // loop_exit
      _
    %3757 = vsyncpa [#allocation5], 1
    %s3758 = scalar_lea.sflag [#allocation5], 1
    %3759 = vsyncpa %s3758, 1

</llo_original>
